<compile_context>
chip_gen: v5e
topology: v5e:2x2
jax: 0.10.0
libtpu: 0.0.40
codegen_flags: <defaults>
</compile_context>

<pallas_src>
import jax
import jax.numpy as jnp
import numpy as np
from jax.experimental import pallas as pl
from jax.experimental.pallas import tpu as pltpu

EPS = 1e-5          # eps of InstanceNorm1d / BatchNorm1d
LEAK = 0.2          # LeakyReLU negative_slope
PREC = jax.lax.Precision.HIGHEST   # reference only

# Model hyper-params (consistent with the module's constructor)
KSIZE = 8           # conv1 kernel_size (stride 2)
K23 = 8             # conv2 / conv3 kernel_size (hardcoded in the module)
POOL = 4            # pool_size
C1, C2, C3 = 32, 32, 16
HID = 32            # hidden width of the Linear head
OUT_SIZE = 8        # out_size

# column layout of the packed f32 parameter slab (C1=32 rows x 22 cols)
_W1_COL, _G1_COL, _BE1_COL = 0, 8, 9
_G2_COL, _BE2_COL, _G3_COL, _BE3_COL = 10, 11, 12, 13
_LW2_COL = 14
_PSLAB_COLS = _LW2_COL + OUT_SIZE        # 22


def _vmem():
    return pl.BlockSpec(memory_space=pltpu.MemorySpace.VMEM)


# ------------------------------ fused forward --------------------------------

def convkregion_forward(x, p):
    b, k, d = x.shape
    n = b * k
    assert d % 2 == 0, "stride-2 de-interleave assumes an even time_series length"
    l1 = (d - KSIZE) // 2 + 1
    l2 = l1 - K23 + 1
    l3 = l2 - K23 + 1
    pooled = l3 // POOL

    # ---------------- wrapper-side layout plumbing only (no compute) ----------------
    # even/odd de-interleave of the time axis so the stride-2 conv1 taps become
    # contiguous lane slices inside the kernel.
    xe_raw = x[:, :, 0::2].reshape(n, d // 2)
    xo_raw = x[:, :, 1::2].reshape(n, d // 2)

    # channel x tap flattened conv weights; only conv2 (the big contraction) is bf16.
    # Column index = t*C_in + c, matching the in-kernel im2col concat order.
    w2m = jnp.transpose(p["w2"], (0, 2, 1)).reshape(C2, K23 * C1).astype(jnp.bfloat16)
    w3m = jnp.transpose(p["w3"], (0, 2, 1)).reshape(C3, K23 * C2)                 # f32

    # Linear1 weight split by pool window q so the kernel accumulates h += pool_q @ lw1[q]
    # without forming / permuting a flattened feature vector (PyTorch flatten: f = c*pooled + q).
    lw1r = p["lw1"].reshape(C3, pooled, HID).transpose(1, 0, 2)                   # (pooled, C3, HID)

    # pack the tiny per-channel params into two slabs (18 operands -> 7)
    pslab = jnp.zeros((C1, _PSLAB_COLS), jnp.float32)
    pslab = pslab.at[:, _W1_COL:_W1_COL + KSIZE].set(p["w1"][:, 0, :])            # conv1 taps
    pslab = pslab.at[:, _G1_COL].set(p["g1"])
    pslab = pslab.at[:, _BE1_COL].set(p["be1"])
    pslab = pslab.at[:, _G2_COL].set(p["g2"])
    pslab = pslab.at[:, _BE2_COL].set(p["be2"])
    pslab = pslab.at[:C3, _G3_COL].set(p["g3"])
    pslab = pslab.at[:C3, _BE3_COL].set(p["be3"])
    pslab = pslab.at[:, _LW2_COL:_LW2_COL + OUT_SIZE].set(p["lw2"])               # Linear2 weight

    bslab = jnp.zeros((2, HID), jnp.float32)
    bslab = bslab.at[0, :].set(p["lb1"])
    bslab = bslab.at[1, :OUT_SIZE].set(p["lb2"])

    def kernel(xe_ref, xo_ref, w2_ref, w3_ref, lw1_ref, ps_ref, bs_ref, o_ref):
        ps = ps_ref[...]                                    # (32, 22) f32, loaded once

        # ---- InstanceNorm1d(time_series): per (b, time-pos) stats over the k rows ----
        # masked group reductions (no per-b slices / concat), one-pass statistics
        rows = jax.lax.broadcasted_iota(jnp.int32, (n, 1), 0)

        def inorm(v):                                       # v: (n, d/2) f32, rows b-major
            vv = v * v
            m = jnp.zeros_like(v)
            ms = jnp.zeros_like(v)
            for bi in range(b):                             # b is tiny and static
                mk = jnp.logical_and(rows >= bi * k, rows < (bi + 1) * k)
                mk = mk.astype(jnp.float32)                 # (n, 1)
                m = m + mk * (jnp.sum(v * mk, axis=0, keepdims=True) * (1.0 / k))
                ms = ms + mk * (jnp.sum(vv * mk, axis=0, keepdims=True) * (1.0 / k))
            return (v - m) * jax.lax.rsqrt(ms - m * m + EPS)

        xe = inorm(xe_ref[...])
        xo = inorm(xo_ref[...])

        # ---- training-mode BatchNorm1d: one-pass stats over all rows and positions ----
        # (conv bias omitted everywhere: exactly cancelled by the mean subtraction)
        def bnorm(y, g, be):                                # y: (n, C, L); g, be: (C, 1)
            m = jnp.mean(jnp.mean(y, axis=2, keepdims=True), axis=0, keepdims=True)
            ms = jnp.mean(jnp.mean(y * y, axis=2, keepdims=True), axis=0, keepdims=True)
            return (y - m) * jax.lax.rsqrt(ms - m * m + EPS) * g[None] + be[None]

        # ---- conv1 (1 -> 32, kernel 8, stride 2): 8 VPU broadcast FMAs (depth 8 is
        #      too shallow to be worth an MXU pass), all f32 ----
        acc1 = jnp.zeros((n, C1, l1), jnp.float32)
        for t in range(KSIZE):
            src = xe if t % 2 == 0 else xo                  # input position 2j + t
            s = t // 2
            acc1 = acc1 + src[:, None, s:s + l1] * ps[:, t:t + 1][None]
        y1 = bnorm(acc1, ps[:, _G1_COL:_G1_COL + 1], ps[:, _BE1_COL:_BE1_COL + 1])

        # ---- conv2 (32 -> 32, kernel 8): channel x tap im2col, depth-256 bf16 MXU dots ----
        y1b = y1.astype(jnp.bfloat16)
        im2 = jnp.concatenate([y1b[:, :, t:t + l2] for t in range(K23)], axis=1)   # (n, 256, l2)
        w2 = w2_ref[...]                                    # (C2, 256) bf16, no broadcast copies
        acc2 = jnp.stack(
            [jnp.dot(w2, im2[i], preferred_element_type=jnp.float32) for i in range(n)],
            axis=0)                                         # (n, C2, l2) f32
        y2 = bnorm(acc2, ps[:, _G2_COL:_G2_COL + 1], ps[:, _BE2_COL:_BE2_COL + 1])

        # ---- conv3 (32 -> 16, kernel 8): same structure, kept in f32 (tiny, tighter) ----
        im3 = jnp.concatenate([y2[:, :, t:t + l3] for t in range(K23)], axis=1)    # (n, 256, l3)
        w3 = w3_ref[...]                                    # (C3, 256) f32
        acc3 = jnp.stack(
            [jnp.dot(w3, im3[i], preferred_element_type=jnp.float32) for i in range(n)],
            axis=0)                                         # (n, C3, l3) f32
        y3 = bnorm(acc3, ps[:C3, _G3_COL:_G3_COL + 1], ps[:C3, _BE3_COL:_BE3_COL + 1])

        # ---- MaxPool1d(POOL) fused with Linear(od4, 32): accumulate per pool window ----
        # (no feature concat, no flatten-order permutation; lw1 was pre-split per q)
        h = jnp.zeros((n, HID), jnp.float32)
        for q in range(pooled):
            pq = jnp.max(y3[:, :, POOL * q:POOL * (q + 1)], axis=-1)   # (n, C3)
            h = h + jnp.dot(pq, lw1_ref[q], preferred_element_type=jnp.float32)
        h = h + bs_ref[0:1, :]
        h = jnp.where(h >= 0.0, h, LEAK * h)                # LeakyReLU(0.2)

        # ---- Linear(32, out_size), f32 ----
        o_ref[...] = (jnp.dot(h, ps[:, _LW2_COL:_LW2_COL + OUT_SIZE],
                              preferred_element_type=jnp.float32)
                      + bs_ref[1:2, 0:OUT_SIZE])

    operands = (xe_raw, xo_raw, w2m, w3m, lw1r, pslab, bslab)

    out = pl.pallas_call(
        kernel,
        out_shape=jax.ShapeDtypeStruct((n, OUT_SIZE), jnp.float32),
        in_specs=[_vmem()] * len(operands),
        out_specs=_vmem(),
    )(*operands)
    return out.reshape(b, k, OUT_SIZE)


# ------------------------------ pure-JAX reference ---------------------------

def reference_forward(x, p):
    b, k, d = x.shape

    xt = jnp.transpose(x, (0, 2, 1))                          # (b, d, k)
    m = jnp.mean(xt, axis=2, keepdims=True)
    v = jnp.mean((xt - m) ** 2, axis=2, keepdims=True)
    xt = (xt - m) * jax.lax.rsqrt(v + EPS)
    xn = jnp.transpose(xt, (0, 2, 1)).reshape(b * k, 1, d)

    def conv(x_, w, bi, stride):
        y = jax.lax.conv_general_dilated(
            x_, w, window_strides=(stride,), padding="VALID",
            dimension_numbers=("NCH", "OIH", "NCH"), precision=PREC)
        return y + bi[None, :, None]

    def bn(y, g, be):
        m_ = jnp.mean(y, axis=(0, 2), keepdims=True)
        v_ = jnp.mean((y - m_) ** 2, axis=(0, 2), keepdims=True)
        return (y - m_) * jax.lax.rsqrt(v_ + EPS) * g[None, :, None] + be[None, :, None]

    y = bn(conv(xn, p["w1"], p["b1"], 2), p["g1"], p["be1"])
    y = bn(conv(y, p["w2"], p["b2"], 1), p["g2"], p["be2"])
    y = bn(conv(y, p["w3"], p["b3"], 1), p["g3"], p["be3"])

    n, c, l3 = y.shape
    pooled = l3 // POOL
    y = y[:, :, : pooled * POOL].reshape(n, c, pooled, POOL).max(axis=-1)
    y = y.reshape(b, k, c * pooled)

    h = jnp.dot(y, p["lw1"], precision=PREC) + p["lb1"]
    h = jnp.where(h >= 0, h, LEAK * h)
    return jnp.dot(h, p["lw2"], precision=PREC) + p["lb2"]


# ------------------------------ params / main --------------------------------

def init_params(key, d):
    l1 = (d - KSIZE) // 2 + 1
    l2 = l1 - K23 + 1
    l3 = l2 - K23 + 1
    od4 = C3 * (l3 // POOL)
    ks = jax.random.split(key, 16)

    def nrm(k_, shape, s=0.1):
        return s * jax.random.normal(k_, shape, dtype=jnp.float32)

    return dict(
        w1=nrm(ks[0], (C1, 1, KSIZE)),   b1=nrm(ks[1], (C1,), 0.05),
        g1=1.0 + nrm(ks[2], (C1,), 0.05), be1=nrm(ks[3], (C1,), 0.05),
        w2=nrm(ks[4], (C2, C1, K23)),    b2=nrm(ks[5], (C2,), 0.05),
        g2=1.0 + nrm(ks[6], (C2,), 0.05), be2=nrm(ks[7], (C2,), 0.05),
        w3=nrm(ks[8], (C3, C2, K23)),    b3=nrm(ks[9], (C3,), 0.05),
        g3=1.0 + nrm(ks[10], (C3,), 0.05), be3=nrm(ks[11], (C3,), 0.05),
        lw1=nrm(ks[12], (od4, HID)),     lb1=nrm(ks[13], (HID,), 0.05),
        lw2=nrm(ks[14], (HID, OUT_SIZE)), lb2=nrm(ks[15], (OUT_SIZE,), 0.05),
    )
    # TODO(synk): BatchNorm running-stat updates (a training side effect) are not
    # modeled; training-mode batch statistics are used, matching module defaults.


if __name__ == "__main__":
    B, K_REG, D = 2, 4, 64                # small shapes: batch=2, k=4 regions, time_series=64
    key = jax.random.PRNGKey(0)
    kx, kp = jax.random.split(key)
    x = jax.random.normal(kx, (B, K_REG, D), dtype=jnp.float32)
    params = init_params(kp, D)

    out = jax.jit(convkregion_forward)(x, params)
    out = jax.block_until_ready(out)

    ref = reference_forward(x, params)
    assert out.shape == (B, K_REG, OUT_SIZE), out.shape
    # Only the conv2 contraction uses bf16 operands (f32 accumulation); conv1/conv3/norms/MLP
    # are f32, so the true error is well inside this (unchanged, conservative) tolerance.
    np.testing.assert_allclose(np.asarray(out), np.asarray(ref), rtol=2e-2, atol=2e-2)
    print("KERNEL_OK")
</pallas_src>

<mosaic_0001>
module attributes {stable_mosaic.version = 11 : i64} {
  func.func @kernel(%arg0: memref<8x32xf32, #tpu.memory_space<vmem>>, %arg1: memref<8x32xf32, #tpu.memory_space<vmem>>, %arg2: memref<32x256xbf16, #tpu.memory_space<vmem>>, %arg3: memref<16x256xf32, #tpu.memory_space<vmem>>, %arg4: memref<3x16x32xf32, #tpu.memory_space<vmem>>, %arg5: memref<32x22xf32, #tpu.memory_space<vmem>>, %arg6: memref<2x32xf32, #tpu.memory_space<vmem>>, %arg7: memref<8x8xf32, #tpu.memory_space<vmem>>) attributes {dimension_semantics = [], scalar_prefetch = 0 : i64, scratch_operands = 0 : i64, tpu.core_type = #tpu.core_type<tc>} {
    %c0 = arith.constant 0 : index
    %c0_0 = arith.constant 0 : index
    %0 = vector.load %arg5[%c0, %c0_0] : memref<32x22xf32, #tpu.memory_space<vmem>>, vector<32x22xf32>
    %1 = tpu.iota {dimensions = array<i32: 0>} : vector<8x1xi32>
    %c0_1 = arith.constant 0 : index
    %c0_2 = arith.constant 0 : index
    %2 = vector.load %arg0[%c0_1, %c0_2] : memref<8x32xf32, #tpu.memory_space<vmem>>, vector<8x32xf32>
    %3 = arith.mulf %2, %2 : vector<8x32xf32>
    %cst = arith.constant 0.000000e+00 : f32
    %4 = vector.broadcast %cst : f32 to vector<8x32xf32>
    %cst_3 = arith.constant 0.000000e+00 : f32
    %5 = vector.broadcast %cst_3 : f32 to vector<8x32xf32>
    %c0_i32 = arith.constant 0 : i32
    %6 = vector.broadcast %c0_i32 : i32 to vector<8x1xi32>
    %7 = arith.cmpi sge, %1, %6 : vector<8x1xi32>
    %c4_i32 = arith.constant 4 : i32
    %8 = vector.broadcast %c4_i32 : i32 to vector<8x1xi32>
    %9 = arith.cmpi slt, %1, %8 : vector<8x1xi32>
    %10 = arith.andi %7, %9 : vector<8x1xi1>
    %11 = arith.extui %10 : vector<8x1xi1> to vector<8x1xi32>
    %12 = arith.sitofp %11 : vector<8x1xi32> to vector<8x1xf32>
    %13 = vector.broadcast %12 : vector<8x1xf32> to vector<8x32xf32>
    %14 = arith.mulf %2, %13 : vector<8x32xf32>
    %cst_4 = arith.constant dense<0.000000e+00> : vector<32xf32>
    %15 = vector.multi_reduction <add>, %14, %cst_4 [0] : vector<8x32xf32> to vector<32xf32>
    %16 = vector.shape_cast %15 : vector<32xf32> to vector<1x32xf32>
    %cst_5 = arith.constant 2.500000e-01 : f32
    %17 = vector.broadcast %cst_5 : f32 to vector<1x32xf32>
    %18 = arith.mulf %16, %17 : vector<1x32xf32>
    %19 = vector.broadcast %12 : vector<8x1xf32> to vector<8x32xf32>
    %20 = vector.broadcast %18 : vector<1x32xf32> to vector<8x32xf32>
    %21 = arith.mulf %19, %20 : vector<8x32xf32>
    %22 = arith.addf %4, %21 : vector<8x32xf32>
    %23 = vector.broadcast %12 : vector<8x1xf32> to vector<8x32xf32>
    %24 = arith.mulf %3, %23 : vector<8x32xf32>
    %cst_6 = arith.constant dense<0.000000e+00> : vector<32xf32>
    %25 = vector.multi_reduction <add>, %24, %cst_6 [0] : vector<8x32xf32> to vector<32xf32>
    %26 = vector.shape_cast %25 : vector<32xf32> to vector<1x32xf32>
    %cst_7 = arith.constant 2.500000e-01 : f32
    %27 = vector.broadcast %cst_7 : f32 to vector<1x32xf32>
    %28 = arith.mulf %26, %27 : vector<1x32xf32>
    %29 = vector.broadcast %12 : vector<8x1xf32> to vector<8x32xf32>
    %30 = vector.broadcast %28 : vector<1x32xf32> to vector<8x32xf32>
    %31 = arith.mulf %29, %30 : vector<8x32xf32>
    %32 = arith.addf %5, %31 : vector<8x32xf32>
    %c4_i32_8 = arith.constant 4 : i32
    %33 = vector.broadcast %c4_i32_8 : i32 to vector<8x1xi32>
    %34 = arith.cmpi sge, %1, %33 : vector<8x1xi32>
    %c8_i32 = arith.constant 8 : i32
    %35 = vector.broadcast %c8_i32 : i32 to vector<8x1xi32>
    %36 = arith.cmpi slt, %1, %35 : vector<8x1xi32>
    %37 = arith.andi %34, %36 : vector<8x1xi1>
    %38 = arith.extui %37 : vector<8x1xi1> to vector<8x1xi32>
    %39 = arith.sitofp %38 : vector<8x1xi32> to vector<8x1xf32>
    %40 = vector.broadcast %39 : vector<8x1xf32> to vector<8x32xf32>
    %41 = arith.mulf %2, %40 : vector<8x32xf32>
    %cst_9 = arith.constant dense<0.000000e+00> : vector<32xf32>
    %42 = vector.multi_reduction <add>, %41, %cst_9 [0] : vector<8x32xf32> to vector<32xf32>
    %43 = vector.shape_cast %42 : vector<32xf32> to vector<1x32xf32>
    %cst_10 = arith.constant 2.500000e-01 : f32
    %44 = vector.broadcast %cst_10 : f32 to vector<1x32xf32>
    %45 = arith.mulf %43, %44 : vector<1x32xf32>
    %46 = vector.broadcast %39 : vector<8x1xf32> to vector<8x32xf32>
    %47 = vector.broadcast %45 : vector<1x32xf32> to vector<8x32xf32>
    %48 = arith.mulf %46, %47 : vector<8x32xf32>
    %49 = arith.addf %22, %48 : vector<8x32xf32>
    %50 = vector.broadcast %39 : vector<8x1xf32> to vector<8x32xf32>
    %51 = arith.mulf %3, %50 : vector<8x32xf32>
    %cst_11 = arith.constant dense<0.000000e+00> : vector<32xf32>
    %52 = vector.multi_reduction <add>, %51, %cst_11 [0] : vector<8x32xf32> to vector<32xf32>
    %53 = vector.shape_cast %52 : vector<32xf32> to vector<1x32xf32>
    %cst_12 = arith.constant 2.500000e-01 : f32
    %54 = vector.broadcast %cst_12 : f32 to vector<1x32xf32>
    %55 = arith.mulf %53, %54 : vector<1x32xf32>
    %56 = vector.broadcast %39 : vector<8x1xf32> to vector<8x32xf32>
    %57 = vector.broadcast %55 : vector<1x32xf32> to vector<8x32xf32>
    %58 = arith.mulf %56, %57 : vector<8x32xf32>
    %59 = arith.addf %32, %58 : vector<8x32xf32>
    %60 = arith.subf %2, %49 : vector<8x32xf32>
    %61 = arith.mulf %49, %49 : vector<8x32xf32>
    %62 = arith.subf %59, %61 : vector<8x32xf32>
    %cst_13 = arith.constant 9.99999974E-6 : f32
    %63 = vector.broadcast %cst_13 : f32 to vector<8x32xf32>
    %64 = arith.addf %62, %63 : vector<8x32xf32>
    %65 = math.rsqrt %64 : vector<8x32xf32>
    %66 = arith.mulf %60, %65 : vector<8x32xf32>
    %c0_14 = arith.constant 0 : index
    %c0_15 = arith.constant 0 : index
    %67 = vector.load %arg1[%c0_14, %c0_15] : memref<8x32xf32, #tpu.memory_space<vmem>>, vector<8x32xf32>
    %68 = arith.mulf %67, %67 : vector<8x32xf32>
    %cst_16 = arith.constant 0.000000e+00 : f32
    %69 = vector.broadcast %cst_16 : f32 to vector<8x32xf32>
    %cst_17 = arith.constant 0.000000e+00 : f32
    %70 = vector.broadcast %cst_17 : f32 to vector<8x32xf32>
    %c0_i32_18 = arith.constant 0 : i32
    %71 = vector.broadcast %c0_i32_18 : i32 to vector<8x1xi32>
    %72 = arith.cmpi sge, %1, %71 : vector<8x1xi32>
    %c4_i32_19 = arith.constant 4 : i32
    %73 = vector.broadcast %c4_i32_19 : i32 to vector<8x1xi32>
    %74 = arith.cmpi slt, %1, %73 : vector<8x1xi32>
    %75 = arith.andi %72, %74 : vector<8x1xi1>
    %76 = arith.extui %75 : vector<8x1xi1> to vector<8x1xi32>
    %77 = arith.sitofp %76 : vector<8x1xi32> to vector<8x1xf32>
    %78 = vector.broadcast %77 : vector<8x1xf32> to vector<8x32xf32>
    %79 = arith.mulf %67, %78 : vector<8x32xf32>
    %cst_20 = arith.constant dense<0.000000e+00> : vector<32xf32>
    %80 = vector.multi_reduction <add>, %79, %cst_20 [0] : vector<8x32xf32> to vector<32xf32>
    %81 = vector.shape_cast %80 : vector<32xf32> to vector<1x32xf32>
    %cst_21 = arith.constant 2.500000e-01 : f32
    %82 = vector.broadcast %cst_21 : f32 to vector<1x32xf32>
    %83 = arith.mulf %81, %82 : vector<1x32xf32>
    %84 = vector.broadcast %77 : vector<8x1xf32> to vector<8x32xf32>
    %85 = vector.broadcast %83 : vector<1x32xf32> to vector<8x32xf32>
    %86 = arith.mulf %84, %85 : vector<8x32xf32>
    %87 = arith.addf %69, %86 : vector<8x32xf32>
    %88 = vector.broadcast %77 : vector<8x1xf32> to vector<8x32xf32>
    %89 = arith.mulf %68, %88 : vector<8x32xf32>
    %cst_22 = arith.constant dense<0.000000e+00> : vector<32xf32>
    %90 = vector.multi_reduction <add>, %89, %cst_22 [0] : vector<8x32xf32> to vector<32xf32>
    %91 = vector.shape_cast %90 : vector<32xf32> to vector<1x32xf32>
    %cst_23 = arith.constant 2.500000e-01 : f32
    %92 = vector.broadcast %cst_23 : f32 to vector<1x32xf32>
    %93 = arith.mulf %91, %92 : vector<1x32xf32>
    %94 = vector.broadcast %77 : vector<8x1xf32> to vector<8x32xf32>
    %95 = vector.broadcast %93 : vector<1x32xf32> to vector<8x32xf32>
    %96 = arith.mulf %94, %95 : vector<8x32xf32>
    %97 = arith.addf %70, %96 : vector<8x32xf32>
    %c4_i32_24 = arith.constant 4 : i32
    %98 = vector.broadcast %c4_i32_24 : i32 to vector<8x1xi32>
    %99 = arith.cmpi sge, %1, %98 : vector<8x1xi32>
    %c8_i32_25 = arith.constant 8 : i32
    %100 = vector.broadcast %c8_i32_25 : i32 to vector<8x1xi32>
    %101 = arith.cmpi slt, %1, %100 : vector<8x1xi32>
    %102 = arith.andi %99, %101 : vector<8x1xi1>
    %103 = arith.extui %102 : vector<8x1xi1> to vector<8x1xi32>
    %104 = arith.sitofp %103 : vector<8x1xi32> to vector<8x1xf32>
    %105 = vector.broadcast %104 : vector<8x1xf32> to vector<8x32xf32>
    %106 = arith.mulf %67, %105 : vector<8x32xf32>
    %cst_26 = arith.constant dense<0.000000e+00> : vector<32xf32>
    %107 = vector.multi_reduction <add>, %106, %cst_26 [0] : vector<8x32xf32> to vector<32xf32>
    %108 = vector.shape_cast %107 : vector<32xf32> to vector<1x32xf32>
    %cst_27 = arith.constant 2.500000e-01 : f32
    %109 = vector.broadcast %cst_27 : f32 to vector<1x32xf32>
    %110 = arith.mulf %108, %109 : vector<1x32xf32>
    %111 = vector.broadcast %104 : vector<8x1xf32> to vector<8x32xf32>
    %112 = vector.broadcast %110 : vector<1x32xf32> to vector<8x32xf32>
    %113 = arith.mulf %111, %112 : vector<8x32xf32>
    %114 = arith.addf %87, %113 : vector<8x32xf32>
    %115 = vector.broadcast %104 : vector<8x1xf32> to vector<8x32xf32>
    %116 = arith.mulf %68, %115 : vector<8x32xf32>
    %cst_28 = arith.constant dense<0.000000e+00> : vector<32xf32>
    %117 = vector.multi_reduction <add>, %116, %cst_28 [0] : vector<8x32xf32> to vector<32xf32>
    %118 = vector.shape_cast %117 : vector<32xf32> to vector<1x32xf32>
    %cst_29 = arith.constant 2.500000e-01 : f32
    %119 = vector.broadcast %cst_29 : f32 to vector<1x32xf32>
    %120 = arith.mulf %118, %119 : vector<1x32xf32>
    %121 = vector.broadcast %104 : vector<8x1xf32> to vector<8x32xf32>
    %122 = vector.broadcast %120 : vector<1x32xf32> to vector<8x32xf32>
    %123 = arith.mulf %121, %122 : vector<8x32xf32>
    %124 = arith.addf %97, %123 : vector<8x32xf32>
    %125 = arith.subf %67, %114 : vector<8x32xf32>
    %126 = arith.mulf %114, %114 : vector<8x32xf32>
    %127 = arith.subf %124, %126 : vector<8x32xf32>
    %cst_30 = arith.constant 9.99999974E-6 : f32
    %128 = vector.broadcast %cst_30 : f32 to vector<8x32xf32>
    %129 = arith.addf %127, %128 : vector<8x32xf32>
    %130 = math.rsqrt %129 : vector<8x32xf32>
    %131 = arith.mulf %125, %130 : vector<8x32xf32>
    %cst_31 = arith.constant 0.000000e+00 : f32
    %132 = vector.broadcast %cst_31 : f32 to vector<8x32x29xf32>
    %133 = vector.extract_strided_slice %66 {offsets = [0, 0], sizes = [8, 29], strides = [1, 1]} : vector<8x32xf32> to vector<8x29xf32>
    %134 = vector.shape_cast %133 : vector<8x29xf32> to vector<8x1x29xf32>
    %135 = vector.extract_strided_slice %0 {offsets = [0, 0], sizes = [32, 1], strides = [1, 1]} : vector<32x22xf32> to vector<32x1xf32>
    %136 = vector.shape_cast %135 : vector<32x1xf32> to vector<1x32x1xf32>
    %137 = vector.broadcast %134 : vector<8x1x29xf32> to vector<8x32x29xf32>
    %138 = vector.broadcast %136 : vector<1x32x1xf32> to vector<8x32x29xf32>
    %139 = arith.mulf %137, %138 : vector<8x32x29xf32>
    %140 = arith.addf %132, %139 : vector<8x32x29xf32>
    %141 = vector.extract_strided_slice %131 {offsets = [0, 0], sizes = [8, 29], strides = [1, 1]} : vector<8x32xf32> to vector<8x29xf32>
    %142 = vector.shape_cast %141 : vector<8x29xf32> to vector<8x1x29xf32>
    %143 = vector.extract_strided_slice %0 {offsets = [0, 1], sizes = [32, 1], strides = [1, 1]} : vector<32x22xf32> to vector<32x1xf32>
    %144 = vector.shape_cast %143 : vector<32x1xf32> to vector<1x32x1xf32>
    %145 = vector.broadcast %142 : vector<8x1x29xf32> to vector<8x32x29xf32>
    %146 = vector.broadcast %144 : vector<1x32x1xf32> to vector<8x32x29xf32>
    %147 = arith.mulf %145, %146 : vector<8x32x29xf32>
    %148 = arith.addf %140, %147 : vector<8x32x29xf32>
    %149 = vector.extract_strided_slice %66 {offsets = [0, 1], sizes = [8, 29], strides = [1, 1]} : vector<8x32xf32> to vector<8x29xf32>
    %150 = vector.shape_cast %149 : vector<8x29xf32> to vector<8x1x29xf32>
    %151 = vector.extract_strided_slice %0 {offsets = [0, 2], sizes = [32, 1], strides = [1, 1]} : vector<32x22xf32> to vector<32x1xf32>
    %152 = vector.shape_cast %151 : vector<32x1xf32> to vector<1x32x1xf32>
    %153 = vector.broadcast %150 : vector<8x1x29xf32> to vector<8x32x29xf32>
    %154 = vector.broadcast %152 : vector<1x32x1xf32> to vector<8x32x29xf32>
    %155 = arith.mulf %153, %154 : vector<8x32x29xf32>
    %156 = arith.addf %148, %155 : vector<8x32x29xf32>
    %157 = vector.extract_strided_slice %131 {offsets = [0, 1], sizes = [8, 29], strides = [1, 1]} : vector<8x32xf32> to vector<8x29xf32>
    %158 = vector.shape_cast %157 : vector<8x29xf32> to vector<8x1x29xf32>
    %159 = vector.extract_strided_slice %0 {offsets = [0, 3], sizes = [32, 1], strides = [1, 1]} : vector<32x22xf32> to vector<32x1xf32>
    %160 = vector.shape_cast %159 : vector<32x1xf32> to vector<1x32x1xf32>
    %161 = vector.broadcast %158 : vector<8x1x29xf32> to vector<8x32x29xf32>
    %162 = vector.broadcast %160 : vector<1x32x1xf32> to vector<8x32x29xf32>
    %163 = arith.mulf %161, %162 : vector<8x32x29xf32>
    %164 = arith.addf %156, %163 : vector<8x32x29xf32>
    %165 = vector.extract_strided_slice %66 {offsets = [0, 2], sizes = [8, 29], strides = [1, 1]} : vector<8x32xf32> to vector<8x29xf32>
    %166 = vector.shape_cast %165 : vector<8x29xf32> to vector<8x1x29xf32>
    %167 = vector.extract_strided_slice %0 {offsets = [0, 4], sizes = [32, 1], strides = [1, 1]} : vector<32x22xf32> to vector<32x1xf32>
    %168 = vector.shape_cast %167 : vector<32x1xf32> to vector<1x32x1xf32>
    %169 = vector.broadcast %166 : vector<8x1x29xf32> to vector<8x32x29xf32>
    %170 = vector.broadcast %168 : vector<1x32x1xf32> to vector<8x32x29xf32>
    %171 = arith.mulf %169, %170 : vector<8x32x29xf32>
    %172 = arith.addf %164, %171 : vector<8x32x29xf32>
    %173 = vector.extract_strided_slice %131 {offsets = [0, 2], sizes = [8, 29], strides = [1, 1]} : vector<8x32xf32> to vector<8x29xf32>
    %174 = vector.shape_cast %173 : vector<8x29xf32> to vector<8x1x29xf32>
    %175 = vector.extract_strided_slice %0 {offsets = [0, 5], sizes = [32, 1], strides = [1, 1]} : vector<32x22xf32> to vector<32x1xf32>
    %176 = vector.shape_cast %175 : vector<32x1xf32> to vector<1x32x1xf32>
    %177 = vector.broadcast %174 : vector<8x1x29xf32> to vector<8x32x29xf32>
    %178 = vector.broadcast %176 : vector<1x32x1xf32> to vector<8x32x29xf32>
    %179 = arith.mulf %177, %178 : vector<8x32x29xf32>
    %180 = arith.addf %172, %179 : vector<8x32x29xf32>
    %181 = vector.extract_strided_slice %66 {offsets = [0, 3], sizes = [8, 29], strides = [1, 1]} : vector<8x32xf32> to vector<8x29xf32>
    %182 = vector.shape_cast %181 : vector<8x29xf32> to vector<8x1x29xf32>
    %183 = vector.extract_strided_slice %0 {offsets = [0, 6], sizes = [32, 1], strides = [1, 1]} : vector<32x22xf32> to vector<32x1xf32>
    %184 = vector.shape_cast %183 : vector<32x1xf32> to vector<1x32x1xf32>
    %185 = vector.broadcast %182 : vector<8x1x29xf32> to vector<8x32x29xf32>
    %186 = vector.broadcast %184 : vector<1x32x1xf32> to vector<8x32x29xf32>
    %187 = arith.mulf %185, %186 : vector<8x32x29xf32>
    %188 = arith.addf %180, %187 : vector<8x32x29xf32>
    %189 = vector.extract_strided_slice %131 {offsets = [0, 3], sizes = [8, 29], strides = [1, 1]} : vector<8x32xf32> to vector<8x29xf32>
    %190 = vector.shape_cast %189 : vector<8x29xf32> to vector<8x1x29xf32>
    %191 = vector.extract_strided_slice %0 {offsets = [0, 7], sizes = [32, 1], strides = [1, 1]} : vector<32x22xf32> to vector<32x1xf32>
    %192 = vector.shape_cast %191 : vector<32x1xf32> to vector<1x32x1xf32>
    %193 = vector.broadcast %190 : vector<8x1x29xf32> to vector<8x32x29xf32>
    %194 = vector.broadcast %192 : vector<1x32x1xf32> to vector<8x32x29xf32>
    %195 = arith.mulf %193, %194 : vector<8x32x29xf32>
    %196 = arith.addf %188, %195 : vector<8x32x29xf32>
    %197 = vector.extract_strided_slice %0 {offsets = [0, 8], sizes = [32, 1], strides = [1, 1]} : vector<32x22xf32> to vector<32x1xf32>
    %198 = vector.extract_strided_slice %0 {offsets = [0, 9], sizes = [32, 1], strides = [1, 1]} : vector<32x22xf32> to vector<32x1xf32>
    %cst_32 = arith.constant dense<0.000000e+00> : vector<8x32xf32>
    %199 = vector.multi_reduction <add>, %196, %cst_32 [2] : vector<8x32x29xf32> to vector<8x32xf32>
    %200 = vector.shape_cast %199 : vector<8x32xf32> to vector<8x32x1xf32>
    %cst_33 = arith.constant 2.900000e+01 : f32
    %201 = vector.broadcast %cst_33 : f32 to vector<8x32x1xf32>
    %202 = arith.divf %200, %201 : vector<8x32x1xf32>
    %cst_34 = arith.constant dense<0.000000e+00> : vector<32x1xf32>
    %203 = vector.multi_reduction <add>, %202, %cst_34 [0] : vector<8x32x1xf32> to vector<32x1xf32>
    %204 = vector.shape_cast %203 : vector<32x1xf32> to vector<1x32x1xf32>
    %cst_35 = arith.constant 8.000000e+00 : f32
    %205 = vector.broadcast %cst_35 : f32 to vector<1x32x1xf32>
    %206 = arith.divf %204, %205 : vector<1x32x1xf32>
    %207 = arith.mulf %196, %196 : vector<8x32x29xf32>
    %cst_36 = arith.constant dense<0.000000e+00> : vector<8x32xf32>
    %208 = vector.multi_reduction <add>, %207, %cst_36 [2] : vector<8x32x29xf32> to vector<8x32xf32>
    %209 = vector.shape_cast %208 : vector<8x32xf32> to vector<8x32x1xf32>
    %cst_37 = arith.constant 2.900000e+01 : f32
    %210 = vector.broadcast %cst_37 : f32 to vector<8x32x1xf32>
    %211 = arith.divf %209, %210 : vector<8x32x1xf32>
    %cst_38 = arith.constant dense<0.000000e+00> : vector<32x1xf32>
    %212 = vector.multi_reduction <add>, %211, %cst_38 [0] : vector<8x32x1xf32> to vector<32x1xf32>
    %213 = vector.shape_cast %212 : vector<32x1xf32> to vector<1x32x1xf32>
    %cst_39 = arith.constant 8.000000e+00 : f32
    %214 = vector.broadcast %cst_39 : f32 to vector<1x32x1xf32>
    %215 = arith.divf %213, %214 : vector<1x32x1xf32>
    %216 = vector.broadcast %206 : vector<1x32x1xf32> to vector<8x32x29xf32>
    %217 = arith.subf %196, %216 : vector<8x32x29xf32>
    %218 = arith.mulf %206, %206 : vector<1x32x1xf32>
    %219 = arith.subf %215, %218 : vector<1x32x1xf32>
    %cst_40 = arith.constant 9.99999974E-6 : f32
    %220 = vector.broadcast %cst_40 : f32 to vector<1x32x1xf32>
    %221 = arith.addf %219, %220 : vector<1x32x1xf32>
    %222 = math.rsqrt %221 : vector<1x32x1xf32>
    %223 = vector.broadcast %222 : vector<1x32x1xf32> to vector<8x32x29xf32>
    %224 = arith.mulf %217, %223 : vector<8x32x29xf32>
    %225 = vector.shape_cast %197 : vector<32x1xf32> to vector<1x32x1xf32>
    %226 = vector.broadcast %225 : vector<1x32x1xf32> to vector<8x32x29xf32>
    %227 = arith.mulf %224, %226 : vector<8x32x29xf32>
    %228 = vector.shape_cast %198 : vector<32x1xf32> to vector<1x32x1xf32>
    %229 = vector.broadcast %228 : vector<1x32x1xf32> to vector<8x32x29xf32>
    %230 = arith.addf %227, %229 : vector<8x32x29xf32>
    %231 = arith.truncf %230 : vector<8x32x29xf32> to vector<8x32x29xbf16>
    %232 = vector.extract_strided_slice %231 {offsets = [0, 0, 0], sizes = [8, 32, 22], strides = [1, 1, 1]} : vector<8x32x29xbf16> to vector<8x32x22xbf16>
    %233 = vector.extract_strided_slice %231 {offsets = [0, 0, 1], sizes = [8, 32, 22], strides = [1, 1, 1]} : vector<8x32x29xbf16> to vector<8x32x22xbf16>
    %234 = vector.extract_strided_slice %231 {offsets = [0, 0, 2], sizes = [8, 32, 22], strides = [1, 1, 1]} : vector<8x32x29xbf16> to vector<8x32x22xbf16>
    %235 = vector.extract_strided_slice %231 {offsets = [0, 0, 3], sizes = [8, 32, 22], strides = [1, 1, 1]} : vector<8x32x29xbf16> to vector<8x32x22xbf16>
    %236 = vector.extract_strided_slice %231 {offsets = [0, 0, 4], sizes = [8, 32, 22], strides = [1, 1, 1]} : vector<8x32x29xbf16> to vector<8x32x22xbf16>
    %237 = vector.extract_strided_slice %231 {offsets = [0, 0, 5], sizes = [8, 32, 22], strides = [1, 1, 1]} : vector<8x32x29xbf16> to vector<8x32x22xbf16>
    %238 = vector.extract_strided_slice %231 {offsets = [0, 0, 6], sizes = [8, 32, 22], strides = [1, 1, 1]} : vector<8x32x29xbf16> to vector<8x32x22xbf16>
    %239 = vector.extract_strided_slice %231 {offsets = [0, 0, 7], sizes = [8, 32, 22], strides = [1, 1, 1]} : vector<8x32x29xbf16> to vector<8x32x22xbf16>
    %240 = tpu.concatenate %232, %233, %234, %235, %236, %237, %238, %239 in 1 : vector<8x32x22xbf16>, vector<8x32x22xbf16>, vector<8x32x22xbf16>, vector<8x32x22xbf16>, vector<8x32x22xbf16>, vector<8x32x22xbf16>, vector<8x32x22xbf16>, vector<8x32x22xbf16> -> vector<8x256x22xbf16>
    %c0_41 = arith.constant 0 : index
    %c0_42 = arith.constant 0 : index
    %241 = vector.load %arg2[%c0_41, %c0_42] : memref<32x256xbf16, #tpu.memory_space<vmem>>, vector<32x256xbf16>
    %242 = vector.extract_strided_slice %240 {offsets = [0, 0, 0], sizes = [1, 256, 22], strides = [1, 1, 1]} : vector<8x256x22xbf16> to vector<1x256x22xbf16>
    %243 = vector.shape_cast %242 : vector<1x256x22xbf16> to vector<256x22xbf16>
    %cst_43 = arith.constant dense<0.000000e+00> : vector<32x22xf32>
    %244 = tpu.matmul %241, %243, %cst_43 {dimension_numbers = #tpu.dot_dimension_numbers<[1], [0], [0], [1], [0, 0, 1, 1], [], []>} : vector<32x256xbf16>, vector<256x22xbf16>, vector<32x22xf32> -> vector<32x22xf32>
    %245 = vector.extract_strided_slice %240 {offsets = [1, 0, 0], sizes = [1, 256, 22], strides = [1, 1, 1]} : vector<8x256x22xbf16> to vector<1x256x22xbf16>
    %246 = vector.shape_cast %245 : vector<1x256x22xbf16> to vector<256x22xbf16>
    %cst_44 = arith.constant dense<0.000000e+00> : vector<32x22xf32>
    %247 = tpu.matmul %241, %246, %cst_44 {dimension_numbers = #tpu.dot_dimension_numbers<[1], [0], [0], [1], [0, 0, 1, 1], [], []>} : vector<32x256xbf16>, vector<256x22xbf16>, vector<32x22xf32> -> vector<32x22xf32>
    %248 = vector.extract_strided_slice %240 {offsets = [2, 0, 0], sizes = [1, 256, 22], strides = [1, 1, 1]} : vector<8x256x22xbf16> to vector<1x256x22xbf16>
    %249 = vector.shape_cast %248 : vector<1x256x22xbf16> to vector<256x22xbf16>
    %cst_45 = arith.constant dense<0.000000e+00> : vector<32x22xf32>
    %250 = tpu.matmul %241, %249, %cst_45 {dimension_numbers = #tpu.dot_dimension_numbers<[1], [0], [0], [1], [0, 0, 1, 1], [], []>} : vector<32x256xbf16>, vector<256x22xbf16>, vector<32x22xf32> -> vector<32x22xf32>
    %251 = vector.extract_strided_slice %240 {offsets = [3, 0, 0], sizes = [1, 256, 22], strides = [1, 1, 1]} : vector<8x256x22xbf16> to vector<1x256x22xbf16>
    %252 = vector.shape_cast %251 : vector<1x256x22xbf16> to vector<256x22xbf16>
    %cst_46 = arith.constant dense<0.000000e+00> : vector<32x22xf32>
    %253 = tpu.matmul %241, %252, %cst_46 {dimension_numbers = #tpu.dot_dimension_numbers<[1], [0], [0], [1], [0, 0, 1, 1], [], []>} : vector<32x256xbf16>, vector<256x22xbf16>, vector<32x22xf32> -> vector<32x22xf32>
    %254 = vector.extract_strided_slice %240 {offsets = [4, 0, 0], sizes = [1, 256, 22], strides = [1, 1, 1]} : vector<8x256x22xbf16> to vector<1x256x22xbf16>
    %255 = vector.shape_cast %254 : vector<1x256x22xbf16> to vector<256x22xbf16>
    %cst_47 = arith.constant dense<0.000000e+00> : vector<32x22xf32>
    %256 = tpu.matmul %241, %255, %cst_47 {dimension_numbers = #tpu.dot_dimension_numbers<[1], [0], [0], [1], [0, 0, 1, 1], [], []>} : vector<32x256xbf16>, vector<256x22xbf16>, vector<32x22xf32> -> vector<32x22xf32>
    %257 = vector.extract_strided_slice %240 {offsets = [5, 0, 0], sizes = [1, 256, 22], strides = [1, 1, 1]} : vector<8x256x22xbf16> to vector<1x256x22xbf16>
    %258 = vector.shape_cast %257 : vector<1x256x22xbf16> to vector<256x22xbf16>
    %cst_48 = arith.constant dense<0.000000e+00> : vector<32x22xf32>
    %259 = tpu.matmul %241, %258, %cst_48 {dimension_numbers = #tpu.dot_dimension_numbers<[1], [0], [0], [1], [0, 0, 1, 1], [], []>} : vector<32x256xbf16>, vector<256x22xbf16>, vector<32x22xf32> -> vector<32x22xf32>
    %260 = vector.extract_strided_slice %240 {offsets = [6, 0, 0], sizes = [1, 256, 22], strides = [1, 1, 1]} : vector<8x256x22xbf16> to vector<1x256x22xbf16>
    %261 = vector.shape_cast %260 : vector<1x256x22xbf16> to vector<256x22xbf16>
    %cst_49 = arith.constant dense<0.000000e+00> : vector<32x22xf32>
    %262 = tpu.matmul %241, %261, %cst_49 {dimension_numbers = #tpu.dot_dimension_numbers<[1], [0], [0], [1], [0, 0, 1, 1], [], []>} : vector<32x256xbf16>, vector<256x22xbf16>, vector<32x22xf32> -> vector<32x22xf32>
    %263 = vector.extract_strided_slice %240 {offsets = [7, 0, 0], sizes = [1, 256, 22], strides = [1, 1, 1]} : vector<8x256x22xbf16> to vector<1x256x22xbf16>
    %264 = vector.shape_cast %263 : vector<1x256x22xbf16> to vector<256x22xbf16>
    %cst_50 = arith.constant dense<0.000000e+00> : vector<32x22xf32>
    %265 = tpu.matmul %241, %264, %cst_50 {dimension_numbers = #tpu.dot_dimension_numbers<[1], [0], [0], [1], [0, 0, 1, 1], [], []>} : vector<32x256xbf16>, vector<256x22xbf16>, vector<32x22xf32> -> vector<32x22xf32>
    %266 = vector.shape_cast %244 : vector<32x22xf32> to vector<1x32x22xf32>
    %267 = vector.shape_cast %247 : vector<32x22xf32> to vector<1x32x22xf32>
    %268 = vector.shape_cast %250 : vector<32x22xf32> to vector<1x32x22xf32>
    %269 = vector.shape_cast %253 : vector<32x22xf32> to vector<1x32x22xf32>
    %270 = vector.shape_cast %256 : vector<32x22xf32> to vector<1x32x22xf32>
    %271 = vector.shape_cast %259 : vector<32x22xf32> to vector<1x32x22xf32>
    %272 = vector.shape_cast %262 : vector<32x22xf32> to vector<1x32x22xf32>
    %273 = vector.shape_cast %265 : vector<32x22xf32> to vector<1x32x22xf32>
    %274 = tpu.concatenate %266, %267, %268, %269, %270, %271, %272, %273 in 0 : vector<1x32x22xf32>, vector<1x32x22xf32>, vector<1x32x22xf32>, vector<1x32x22xf32>, vector<1x32x22xf32>, vector<1x32x22xf32>, vector<1x32x22xf32>, vector<1x32x22xf32> -> vector<8x32x22xf32>
    %275 = vector.extract_strided_slice %0 {offsets = [0, 10], sizes = [32, 1], strides = [1, 1]} : vector<32x22xf32> to vector<32x1xf32>
    %276 = vector.extract_strided_slice %0 {offsets = [0, 11], sizes = [32, 1], strides = [1, 1]} : vector<32x22xf32> to vector<32x1xf32>
    %cst_51 = arith.constant dense<0.000000e+00> : vector<8x32xf32>
    %277 = vector.multi_reduction <add>, %274, %cst_51 [2] : vector<8x32x22xf32> to vector<8x32xf32>
    %278 = vector.shape_cast %277 : vector<8x32xf32> to vector<8x32x1xf32>
    %cst_52 = arith.constant 2.200000e+01 : f32
    %279 = vector.broadcast %cst_52 : f32 to vector<8x32x1xf32>
    %280 = arith.divf %278, %279 : vector<8x32x1xf32>
    %cst_53 = arith.constant dense<0.000000e+00> : vector<32x1xf32>
    %281 = vector.multi_reduction <add>, %280, %cst_53 [0] : vector<8x32x1xf32> to vector<32x1xf32>
    %282 = vector.shape_cast %281 : vector<32x1xf32> to vector<1x32x1xf32>
    %cst_54 = arith.constant 8.000000e+00 : f32
    %283 = vector.broadcast %cst_54 : f32 to vector<1x32x1xf32>
    %284 = arith.divf %282, %283 : vector<1x32x1xf32>
    %285 = arith.mulf %274, %274 : vector<8x32x22xf32>
    %cst_55 = arith.constant dense<0.000000e+00> : vector<8x32xf32>
    %286 = vector.multi_reduction <add>, %285, %cst_55 [2] : vector<8x32x22xf32> to vector<8x32xf32>
    %287 = vector.shape_cast %286 : vector<8x32xf32> to vector<8x32x1xf32>
    %cst_56 = arith.constant 2.200000e+01 : f32
    %288 = vector.broadcast %cst_56 : f32 to vector<8x32x1xf32>
    %289 = arith.divf %287, %288 : vector<8x32x1xf32>
    %cst_57 = arith.constant dense<0.000000e+00> : vector<32x1xf32>
    %290 = vector.multi_reduction <add>, %289, %cst_57 [0] : vector<8x32x1xf32> to vector<32x1xf32>
    %291 = vector.shape_cast %290 : vector<32x1xf32> to vector<1x32x1xf32>
    %cst_58 = arith.constant 8.000000e+00 : f32
    %292 = vector.broadcast %cst_58 : f32 to vector<1x32x1xf32>
    %293 = arith.divf %291, %292 : vector<1x32x1xf32>
    %294 = vector.broadcast %284 : vector<1x32x1xf32> to vector<8x32x22xf32>
    %295 = arith.subf %274, %294 : vector<8x32x22xf32>
    %296 = arith.mulf %284, %284 : vector<1x32x1xf32>
    %297 = arith.subf %293, %296 : vector<1x32x1xf32>
    %cst_59 = arith.constant 9.99999974E-6 : f32
    %298 = vector.broadcast %cst_59 : f32 to vector<1x32x1xf32>
    %299 = arith.addf %297, %298 : vector<1x32x1xf32>
    %300 = math.rsqrt %299 : vector<1x32x1xf32>
    %301 = vector.broadcast %300 : vector<1x32x1xf32> to vector<8x32x22xf32>
    %302 = arith.mulf %295, %301 : vector<8x32x22xf32>
    %303 = vector.shape_cast %275 : vector<32x1xf32> to vector<1x32x1xf32>
    %304 = vector.broadcast %303 : vector<1x32x1xf32> to vector<8x32x22xf32>
    %305 = arith.mulf %302, %304 : vector<8x32x22xf32>
    %306 = vector.shape_cast %276 : vector<32x1xf32> to vector<1x32x1xf32>
    %307 = vector.broadcast %306 : vector<1x32x1xf32> to vector<8x32x22xf32>
    %308 = arith.addf %305, %307 : vector<8x32x22xf32>
    %309 = vector.extract_strided_slice %308 {offsets = [0, 0, 0], sizes = [8, 32, 15], strides = [1, 1, 1]} : vector<8x32x22xf32> to vector<8x32x15xf32>
    %310 = vector.extract_strided_slice %308 {offsets = [0, 0, 1], sizes = [8, 32, 15], strides = [1, 1, 1]} : vector<8x32x22xf32> to vector<8x32x15xf32>
    %311 = vector.extract_strided_slice %308 {offsets = [0, 0, 2], sizes = [8, 32, 15], strides = [1, 1, 1]} : vector<8x32x22xf32> to vector<8x32x15xf32>
    %312 = vector.extract_strided_slice %308 {offsets = [0, 0, 3], sizes = [8, 32, 15], strides = [1, 1, 1]} : vector<8x32x22xf32> to vector<8x32x15xf32>
    %313 = vector.extract_strided_slice %308 {offsets = [0, 0, 4], sizes = [8, 32, 15], strides = [1, 1, 1]} : vector<8x32x22xf32> to vector<8x32x15xf32>
    %314 = vector.extract_strided_slice %308 {offsets = [0, 0, 5], sizes = [8, 32, 15], strides = [1, 1, 1]} : vector<8x32x22xf32> to vector<8x32x15xf32>
    %315 = vector.extract_strided_slice %308 {offsets = [0, 0, 6], sizes = [8, 32, 15], strides = [1, 1, 1]} : vector<8x32x22xf32> to vector<8x32x15xf32>
    %316 = vector.extract_strided_slice %308 {offsets = [0, 0, 7], sizes = [8, 32, 15], strides = [1, 1, 1]} : vector<8x32x22xf32> to vector<8x32x15xf32>
    %317 = tpu.concatenate %309, %310, %311, %312, %313, %314, %315, %316 in 1 : vector<8x32x15xf32>, vector<8x32x15xf32>, vector<8x32x15xf32>, vector<8x32x15xf32>, vector<8x32x15xf32>, vector<8x32x15xf32>, vector<8x32x15xf32>, vector<8x32x15xf32> -> vector<8x256x15xf32>
    %c0_60 = arith.constant 0 : index
    %c0_61 = arith.constant 0 : index
    %318 = vector.load %arg3[%c0_60, %c0_61] : memref<16x256xf32, #tpu.memory_space<vmem>>, vector<16x256xf32>
    %319 = vector.extract_strided_slice %317 {offsets = [0, 0, 0], sizes = [1, 256, 15], strides = [1, 1, 1]} : vector<8x256x15xf32> to vector<1x256x15xf32>
    %320 = vector.shape_cast %319 : vector<1x256x15xf32> to vector<256x15xf32>
    %cst_62 = arith.constant dense<0.000000e+00> : vector<16x15xf32>
    %321 = tpu.matmul %318, %320, %cst_62 {dimension_numbers = #tpu.dot_dimension_numbers<[1], [0], [0], [1], [0, 0, 1, 1], [], []>} : vector<16x256xf32>, vector<256x15xf32>, vector<16x15xf32> -> vector<16x15xf32>
    %322 = vector.extract_strided_slice %317 {offsets = [1, 0, 0], sizes = [1, 256, 15], strides = [1, 1, 1]} : vector<8x256x15xf32> to vector<1x256x15xf32>
    %323 = vector.shape_cast %322 : vector<1x256x15xf32> to vector<256x15xf32>
    %cst_63 = arith.constant dense<0.000000e+00> : vector<16x15xf32>
    %324 = tpu.matmul %318, %323, %cst_63 {dimension_numbers = #tpu.dot_dimension_numbers<[1], [0], [0], [1], [0, 0, 1, 1], [], []>} : vector<16x256xf32>, vector<256x15xf32>, vector<16x15xf32> -> vector<16x15xf32>
    %325 = vector.extract_strided_slice %317 {offsets = [2, 0, 0], sizes = [1, 256, 15], strides = [1, 1, 1]} : vector<8x256x15xf32> to vector<1x256x15xf32>
    %326 = vector.shape_cast %325 : vector<1x256x15xf32> to vector<256x15xf32>
    %cst_64 = arith.constant dense<0.000000e+00> : vector<16x15xf32>
    %327 = tpu.matmul %318, %326, %cst_64 {dimension_numbers = #tpu.dot_dimension_numbers<[1], [0], [0], [1], [0, 0, 1, 1], [], []>} : vector<16x256xf32>, vector<256x15xf32>, vector<16x15xf32> -> vector<16x15xf32>
    %328 = vector.extract_strided_slice %317 {offsets = [3, 0, 0], sizes = [1, 256, 15], strides = [1, 1, 1]} : vector<8x256x15xf32> to vector<1x256x15xf32>
    %329 = vector.shape_cast %328 : vector<1x256x15xf32> to vector<256x15xf32>
    %cst_65 = arith.constant dense<0.000000e+00> : vector<16x15xf32>
    %330 = tpu.matmul %318, %329, %cst_65 {dimension_numbers = #tpu.dot_dimension_numbers<[1], [0], [0], [1], [0, 0, 1, 1], [], []>} : vector<16x256xf32>, vector<256x15xf32>, vector<16x15xf32> -> vector<16x15xf32>
    %331 = vector.extract_strided_slice %317 {offsets = [4, 0, 0], sizes = [1, 256, 15], strides = [1, 1, 1]} : vector<8x256x15xf32> to vector<1x256x15xf32>
    %332 = vector.shape_cast %331 : vector<1x256x15xf32> to vector<256x15xf32>
    %cst_66 = arith.constant dense<0.000000e+00> : vector<16x15xf32>
    %333 = tpu.matmul %318, %332, %cst_66 {dimension_numbers = #tpu.dot_dimension_numbers<[1], [0], [0], [1], [0, 0, 1, 1], [], []>} : vector<16x256xf32>, vector<256x15xf32>, vector<16x15xf32> -> vector<16x15xf32>
    %334 = vector.extract_strided_slice %317 {offsets = [5, 0, 0], sizes = [1, 256, 15], strides = [1, 1, 1]} : vector<8x256x15xf32> to vector<1x256x15xf32>
    %335 = vector.shape_cast %334 : vector<1x256x15xf32> to vector<256x15xf32>
    %cst_67 = arith.constant dense<0.000000e+00> : vector<16x15xf32>
    %336 = tpu.matmul %318, %335, %cst_67 {dimension_numbers = #tpu.dot_dimension_numbers<[1], [0], [0], [1], [0, 0, 1, 1], [], []>} : vector<16x256xf32>, vector<256x15xf32>, vector<16x15xf32> -> vector<16x15xf32>
    %337 = vector.extract_strided_slice %317 {offsets = [6, 0, 0], sizes = [1, 256, 15], strides = [1, 1, 1]} : vector<8x256x15xf32> to vector<1x256x15xf32>
    %338 = vector.shape_cast %337 : vector<1x256x15xf32> to vector<256x15xf32>
    %cst_68 = arith.constant dense<0.000000e+00> : vector<16x15xf32>
    %339 = tpu.matmul %318, %338, %cst_68 {dimension_numbers = #tpu.dot_dimension_numbers<[1], [0], [0], [1], [0, 0, 1, 1], [], []>} : vector<16x256xf32>, vector<256x15xf32>, vector<16x15xf32> -> vector<16x15xf32>
    %340 = vector.extract_strided_slice %317 {offsets = [7, 0, 0], sizes = [1, 256, 15], strides = [1, 1, 1]} : vector<8x256x15xf32> to vector<1x256x15xf32>
    %341 = vector.shape_cast %340 : vector<1x256x15xf32> to vector<256x15xf32>
    %cst_69 = arith.constant dense<0.000000e+00> : vector<16x15xf32>
    %342 = tpu.matmul %318, %341, %cst_69 {dimension_numbers = #tpu.dot_dimension_numbers<[1], [0], [0], [1], [0, 0, 1, 1], [], []>} : vector<16x256xf32>, vector<256x15xf32>, vector<16x15xf32> -> vector<16x15xf32>
    %343 = vector.shape_cast %321 : vector<16x15xf32> to vector<1x16x15xf32>
    %344 = vector.shape_cast %324 : vector<16x15xf32> to vector<1x16x15xf32>
    %345 = vector.shape_cast %327 : vector<16x15xf32> to vector<1x16x15xf32>
    %346 = vector.shape_cast %330 : vector<16x15xf32> to vector<1x16x15xf32>
    %347 = vector.shape_cast %333 : vector<16x15xf32> to vector<1x16x15xf32>
    %348 = vector.shape_cast %336 : vector<16x15xf32> to vector<1x16x15xf32>
    %349 = vector.shape_cast %339 : vector<16x15xf32> to vector<1x16x15xf32>
    %350 = vector.shape_cast %342 : vector<16x15xf32> to vector<1x16x15xf32>
    %351 = tpu.concatenate %343, %344, %345, %346, %347, %348, %349, %350 in 0 : vector<1x16x15xf32>, vector<1x16x15xf32>, vector<1x16x15xf32>, vector<1x16x15xf32>, vector<1x16x15xf32>, vector<1x16x15xf32>, vector<1x16x15xf32>, vector<1x16x15xf32> -> vector<8x16x15xf32>
    %352 = vector.extract_strided_slice %0 {offsets = [0, 12], sizes = [16, 1], strides = [1, 1]} : vector<32x22xf32> to vector<16x1xf32>
    %353 = vector.extract_strided_slice %0 {offsets = [0, 13], sizes = [16, 1], strides = [1, 1]} : vector<32x22xf32> to vector<16x1xf32>
    %cst_70 = arith.constant dense<0.000000e+00> : vector<8x16xf32>
    %354 = vector.multi_reduction <add>, %351, %cst_70 [2] : vector<8x16x15xf32> to vector<8x16xf32>
    %355 = vector.shape_cast %354 : vector<8x16xf32> to vector<8x16x1xf32>
    %cst_71 = arith.constant 1.500000e+01 : f32
    %356 = vector.broadcast %cst_71 : f32 to vector<8x16x1xf32>
    %357 = arith.divf %355, %356 : vector<8x16x1xf32>
    %cst_72 = arith.constant dense<0.000000e+00> : vector<16x1xf32>
    %358 = vector.multi_reduction <add>, %357, %cst_72 [0] : vector<8x16x1xf32> to vector<16x1xf32>
    %359 = vector.shape_cast %358 : vector<16x1xf32> to vector<1x16x1xf32>
    %cst_73 = arith.constant 8.000000e+00 : f32
    %360 = vector.broadcast %cst_73 : f32 to vector<1x16x1xf32>
    %361 = arith.divf %359, %360 : vector<1x16x1xf32>
    %362 = arith.mulf %351, %351 : vector<8x16x15xf32>
    %cst_74 = arith.constant dense<0.000000e+00> : vector<8x16xf32>
    %363 = vector.multi_reduction <add>, %362, %cst_74 [2] : vector<8x16x15xf32> to vector<8x16xf32>
    %364 = vector.shape_cast %363 : vector<8x16xf32> to vector<8x16x1xf32>
    %cst_75 = arith.constant 1.500000e+01 : f32
    %365 = vector.broadcast %cst_75 : f32 to vector<8x16x1xf32>
    %366 = arith.divf %364, %365 : vector<8x16x1xf32>
    %cst_76 = arith.constant dense<0.000000e+00> : vector<16x1xf32>
    %367 = vector.multi_reduction <add>, %366, %cst_76 [0] : vector<8x16x1xf32> to vector<16x1xf32>
    %368 = vector.shape_cast %367 : vector<16x1xf32> to vector<1x16x1xf32>
    %cst_77 = arith.constant 8.000000e+00 : f32
    %369 = vector.broadcast %cst_77 : f32 to vector<1x16x1xf32>
    %370 = arith.divf %368, %369 : vector<1x16x1xf32>
    %371 = vector.broadcast %361 : vector<1x16x1xf32> to vector<8x16x15xf32>
    %372 = arith.subf %351, %371 : vector<8x16x15xf32>
    %373 = arith.mulf %361, %361 : vector<1x16x1xf32>
    %374 = arith.subf %370, %373 : vector<1x16x1xf32>
    %cst_78 = arith.constant 9.99999974E-6 : f32
    %375 = vector.broadcast %cst_78 : f32 to vector<1x16x1xf32>
    %376 = arith.addf %374, %375 : vector<1x16x1xf32>
    %377 = math.rsqrt %376 : vector<1x16x1xf32>
    %378 = vector.broadcast %377 : vector<1x16x1xf32> to vector<8x16x15xf32>
    %379 = arith.mulf %372, %378 : vector<8x16x15xf32>
    %380 = vector.shape_cast %352 : vector<16x1xf32> to vector<1x16x1xf32>
    %381 = vector.broadcast %380 : vector<1x16x1xf32> to vector<8x16x15xf32>
    %382 = arith.mulf %379, %381 : vector<8x16x15xf32>
    %383 = vector.shape_cast %353 : vector<16x1xf32> to vector<1x16x1xf32>
    %384 = vector.broadcast %383 : vector<1x16x1xf32> to vector<8x16x15xf32>
    %385 = arith.addf %382, %384 : vector<8x16x15xf32>
    %cst_79 = arith.constant 0.000000e+00 : f32
    %386 = vector.broadcast %cst_79 : f32 to vector<8x32xf32>
    %387 = vector.extract_strided_slice %385 {offsets = [0, 0, 0], sizes = [8, 16, 4], strides = [1, 1, 1]} : vector<8x16x15xf32> to vector<8x16x4xf32>
    %cst_80 = arith.constant dense<0xFF800000> : vector<8x16xf32>
    %388 = vector.multi_reduction <maximumf>, %387, %cst_80 [2] : vector<8x16x4xf32> to vector<8x16xf32>
    %c0_81 = arith.constant 0 : index
    %c0_82 = arith.constant 0 : index
    %c0_83 = arith.constant 0 : index
    %389 = vector.load %arg4[%c0_81, %c0_82, %c0_83] : memref<3x16x32xf32, #tpu.memory_space<vmem>>, vector<1x16x32xf32>
    %390 = vector.shape_cast %389 : vector<1x16x32xf32> to vector<16x32xf32>
    %cst_84 = arith.constant dense<0.000000e+00> : vector<8x32xf32>
    %391 = tpu.matmul %388, %390, %cst_84 {dimension_numbers = #tpu.dot_dimension_numbers<[1], [0], [0], [1], [0, 0, 1, 1], [], []>} : vector<8x16xf32>, vector<16x32xf32>, vector<8x32xf32> -> vector<8x32xf32>
    %392 = arith.addf %386, %391 : vector<8x32xf32>
    %393 = vector.extract_strided_slice %385 {offsets = [0, 0, 4], sizes = [8, 16, 4], strides = [1, 1, 1]} : vector<8x16x15xf32> to vector<8x16x4xf32>
    %cst_85 = arith.constant dense<0xFF800000> : vector<8x16xf32>
    %394 = vector.multi_reduction <maximumf>, %393, %cst_85 [2] : vector<8x16x4xf32> to vector<8x16xf32>
    %c1 = arith.constant 1 : index
    %c0_86 = arith.constant 0 : index
    %c0_87 = arith.constant 0 : index
    %395 = vector.load %arg4[%c1, %c0_86, %c0_87] : memref<3x16x32xf32, #tpu.memory_space<vmem>>, vector<1x16x32xf32>
    %396 = vector.shape_cast %395 : vector<1x16x32xf32> to vector<16x32xf32>
    %cst_88 = arith.constant dense<0.000000e+00> : vector<8x32xf32>
    %397 = tpu.matmul %394, %396, %cst_88 {dimension_numbers = #tpu.dot_dimension_numbers<[1], [0], [0], [1], [0, 0, 1, 1], [], []>} : vector<8x16xf32>, vector<16x32xf32>, vector<8x32xf32> -> vector<8x32xf32>
    %398 = arith.addf %392, %397 : vector<8x32xf32>
    %399 = vector.extract_strided_slice %385 {offsets = [0, 0, 8], sizes = [8, 16, 4], strides = [1, 1, 1]} : vector<8x16x15xf32> to vector<8x16x4xf32>
    %cst_89 = arith.constant dense<0xFF800000> : vector<8x16xf32>
    %400 = vector.multi_reduction <maximumf>, %399, %cst_89 [2] : vector<8x16x4xf32> to vector<8x16xf32>
    %c2 = arith.constant 2 : index
    %c0_90 = arith.constant 0 : index
    %c0_91 = arith.constant 0 : index
    %401 = vector.load %arg4[%c2, %c0_90, %c0_91] : memref<3x16x32xf32, #tpu.memory_space<vmem>>, vector<1x16x32xf32>
    %402 = vector.shape_cast %401 : vector<1x16x32xf32> to vector<16x32xf32>
    %cst_92 = arith.constant dense<0.000000e+00> : vector<8x32xf32>
    %403 = tpu.matmul %400, %402, %cst_92 {dimension_numbers = #tpu.dot_dimension_numbers<[1], [0], [0], [1], [0, 0, 1, 1], [], []>} : vector<8x16xf32>, vector<16x32xf32>, vector<8x32xf32> -> vector<8x32xf32>
    %404 = arith.addf %398, %403 : vector<8x32xf32>
    %c0_93 = arith.constant 0 : index
    %c0_94 = arith.constant 0 : index
    %405 = vector.load %arg6[%c0_93, %c0_94] : memref<2x32xf32, #tpu.memory_space<vmem>>, vector<1x32xf32>
    %406 = vector.broadcast %405 : vector<1x32xf32> to vector<8x32xf32>
    %407 = arith.addf %404, %406 : vector<8x32xf32>
    %cst_95 = arith.constant 0.000000e+00 : f32
    %408 = vector.broadcast %cst_95 : f32 to vector<8x32xf32>
    %409 = arith.cmpf oge, %407, %408 : vector<8x32xf32>
    %cst_96 = arith.constant 2.000000e-01 : f32
    %410 = vector.broadcast %cst_96 : f32 to vector<8x32xf32>
    %411 = arith.mulf %410, %407 : vector<8x32xf32>
    %412 = arith.select %409, %407, %411 : vector<8x32xi1>, vector<8x32xf32>
    %413 = vector.extract_strided_slice %0 {offsets = [0, 14], sizes = [32, 8], strides = [1, 1]} : vector<32x22xf32> to vector<32x8xf32>
    %cst_97 = arith.constant dense<0.000000e+00> : vector<8x8xf32>
    %414 = tpu.matmul %412, %413, %cst_97 {dimension_numbers = #tpu.dot_dimension_numbers<[1], [0], [0], [1], [0, 0, 1, 1], [], []>} : vector<8x32xf32>, vector<32x8xf32>, vector<8x8xf32> -> vector<8x8xf32>
    %c1_98 = arith.constant 1 : index
    %c0_99 = arith.constant 0 : index
    %415 = vector.load %arg6[%c1_98, %c0_99] : memref<2x32xf32, #tpu.memory_space<vmem>>, vector<1x8xf32>
    %416 = vector.broadcast %415 : vector<1x8xf32> to vector<8x8xf32>
    %417 = arith.addf %414, %416 : vector<8x8xf32>
    %c0_100 = arith.constant 0 : index
    %c0_101 = arith.constant 0 : index
    %418 = vector.load %arg7[%c0_100, %c0_101] : memref<8x8xf32, #tpu.memory_space<vmem>>, vector<8x8xf32>
    tpu.vector_store %arg7[%c0_100, %c0_101], %417 {strides = array<i32>} : memref<8x8xf32, #tpu.memory_space<vmem>>, vector<8x8xf32>,
    return
  }
}

</mosaic_0001>

<llo_original>
// kernel: convkregion_forward.1
$region0: #{convkregion_forward.1}
  #allocation0 [shape = 'u32[]', space=smem, size = 0x4, offset = 0x4, fixed_abs, tag = 'smem constant byte address 0x4 - core index']
  #allocation1 [shape = 'u32[72,128]{1,0:T(1,128)}', space=vmem, size = 0x9000, scoped, tag = 'internal scratch']
  %s0 = inlined_call_operand.vmem [shape: f32[8,32], index: 0, kind: input, shape index: {}]
  %s1 = inlined_call_operand.vmem [shape: f32[8,32], index: 1, kind: input, shape index: {}]
  %s2 = inlined_call_operand.vmem [shape: bf16[32,256], index: 2, kind: input, shape index: {}]
  %s3 = inlined_call_operand.vmem [shape: f32[16,256], index: 3, kind: input, shape index: {}]
  %s4 = inlined_call_operand.vmem [shape: f32[3,16,32], index: 4, kind: input, shape index: {}]
  %s5 = inlined_call_operand.vmem [shape: f32[32,22], index: 5, kind: input, shape index: {}]
  %s6 = inlined_call_operand.vmem [shape: f32[2,32], index: 6, kind: input, shape index: {}]
  %s7 = inlined_call_operand.hbm [shape: f32[8,8], index: 7, kind: output, shape index: {}]
  %s8 = sld [smem:[#allocation0]]
  $region38: #{convkregion_forward.1} parent=0
    _
  %s10 = ssub.s32 1, %s8
  %s11 = scalar_select 0, %s10, %s8
  $region1: #{convkregion_forward.1} parent=0
    #allocation2 [shape = 'u8[4096]{0}', space=vmem, size = 0x1000, scoped, tag = 'output window, operand 0, single buffered']
    #allocation3 [shape = 's32[1]{0}', space=sflag, size = 0x4, scoped, tag = 'scoped memory for convkregion_forward.1']
    %12 = vsyncpa [#allocation3], 0
    // Predicated region
    $region2: #{convkregion_forward.1} parent=1 // pred_check
      _
    $region3: #{convkregion_forward.1} parent=1 // pred_check_branch
      %14 = sbr.rel (0) target = $region5
    $region4: #{convkregion_forward.1} parent=1 // pred_region
      _
    $region5: #{convkregion_forward.1} parent=1 // pred_fallthru
      _
    // Predicated region
    $region6: #{convkregion_forward.1} parent=1 // pred_check
      _
    $region7: #{convkregion_forward.1} parent=1 // pred_check_branch
      %16 = sbr.rel (0) target = $region9
    $region8: #{convkregion_forward.1} parent=1 // pred_region
      _
    $region9: #{convkregion_forward.1} parent=1 // pred_fallthru
      _
    // Predicated region
    $region10: #{convkregion_forward.1} parent=1 // pred_check
      _
    $region11: #{convkregion_forward.1} parent=1 // pred_check_branch
      %18 = sbr.rel (0) target = $region13
    $region12: #{convkregion_forward.1} parent=1 // pred_region
      _
    $region13: #{convkregion_forward.1} parent=1 // pred_fallthru
      _
    // Predicated region
    $region14: #{convkregion_forward.1} parent=1 // pred_check
      _
    $region15: #{convkregion_forward.1} parent=1 // pred_check_branch
      %20 = sbr.rel (0) target = $region17
    $region16: #{convkregion_forward.1} parent=1 // pred_region
      _
    $region17: #{convkregion_forward.1} parent=1 // pred_fallthru
      _
    // Predicated region
    $region18: #{convkregion_forward.1} parent=1 // pred_check
      _
    $region19: #{convkregion_forward.1} parent=1 // pred_check_branch
      %22 = sbr.rel (0) target = $region21
    $region20: #{convkregion_forward.1} parent=1 // pred_region
      _
    $region21: #{convkregion_forward.1} parent=1 // pred_fallthru
      _
    // Predicated region
    $region22: #{convkregion_forward.1} parent=1 // pred_check
      _
    $region23: #{convkregion_forward.1} parent=1 // pred_check_branch
      %24 = sbr.rel (0) target = $region25
    $region24: #{convkregion_forward.1} parent=1 // pred_region
      _
    $region25: #{convkregion_forward.1} parent=1 // pred_fallthru
      _
    // Predicated region
    $region26: #{convkregion_forward.1} parent=1 // pred_check
      _
    $region27: #{convkregion_forward.1} parent=1 // pred_check_branch
      %26 = sbr.rel (0) target = $region29
    $region28: #{convkregion_forward.1} parent=1 // pred_region
      _
    $region29: #{convkregion_forward.1} parent=1 // pred_fallthru
      _
    %v27 = vld [vmem:[%s5] sm:$0xff]
    %v28 = vld [vmem:[%s5 + $0x8] sm:$0xff]
    %v29 = vld [vmem:[%s5 + $0x10] sm:$0xff]
    %v30 = vld [vmem:[%s5 + $0x18] sm:$0xff]
    %v31 = vlaneseq
    %v32 = vshrl.u32 %v31, 7
    %v33 = vld [vmem:[%s0] sm:$0xff]
    %v34 = vmul.f32 %v33, %v33
    %vm35 = vcmp.ge.s32.totalorder %v32, 0
    %vm36 = vcmp.lt.s32.totalorder %v32, 4
    %vm37 = vmand %vm35, %vm36
    %v38 = vsel %vm37, 1, 0
    %v39 = vcvt.s32.f32 %v38
    %v40 = vmul.f32 %v33, %v39
    %vm41 = vcmask 261120
    %v42 = vsel %vm41, %v40, 0.0
    %v43 = vrot.slane %v42, 4
    %v44 = vadd.f32 %v42, %v43
    %v45 = vrot.slane %v44, 2
    %v46 = vadd.f32 %v44, %v45
    %v47 = vrot.slane %v46, 1
    %v48 = vadd.f32 %v46, %v47
    %v49 = vmul.f32 %v48, 0.25
    %v50 = vmul.f32 %v39, %v49
    %v51 = vadd.f32 %v50, 0.0
    %v52 = vmul.f32 %v34, %v39
    %v53 = vsel %vm41, %v52, 0.0
    %v54 = vrot.slane %v53, 4
    %v55 = vadd.f32 %v53, %v54
    %v56 = vrot.slane %v55, 2
    %v57 = vadd.f32 %v55, %v56
    %v58 = vrot.slane %v57, 1
    %v59 = vadd.f32 %v57, %v58
    %v60 = vmul.f32 %v59, 0.25
    %v61 = vmul.f32 %v39, %v60
    %v62 = vadd.f32 %v61, 0.0
    %vm63 = vcmp.ge.s32.totalorder %v32, 4
    %vm64 = vcmp.lt.s32.totalorder %v32, 8
    %vm65 = vmand %vm63, %vm64
    %v66 = vsel %vm65, 1, 0
    %v67 = vcvt.s32.f32 %v66
    %v68 = vmul.f32 %v33, %v67
    %v69 = vsel %vm41, %v68, 0.0
    %v70 = vrot.slane %v69, 4
    %v71 = vadd.f32 %v69, %v70
    %v72 = vrot.slane %v71, 2
    %v73 = vadd.f32 %v71, %v72
    %v74 = vrot.slane %v73, 1
    %v75 = vadd.f32 %v73, %v74
    %v76 = vmul.f32 %v75, 0.25
    %v77 = vmul.f32 %v67, %v76
    %v78 = vadd.f32 %v51, %v77
    %v79 = vmul.f32 %v34, %v67
    %v80 = vsel %vm41, %v79, 0.0
    %v81 = vrot.slane %v80, 4
    %v82 = vadd.f32 %v80, %v81
    %v83 = vrot.slane %v82, 2
    %v84 = vadd.f32 %v82, %v83
    %v85 = vrot.slane %v84, 1
    %v86 = vadd.f32 %v84, %v85
    %v87 = vmul.f32 %v86, 0.25
    %v88 = vmul.f32 %v67, %v87
    %v89 = vadd.f32 %v62, %v88
    %v90 = vsub.f32 %v33, %v78
    %v91 = vmul.f32 %v78, %v78
    %v92 = vsub.f32 %v89, %v91
    %v93 = vadd.f32 %v92, 1e-05
    %v94 = vrsqrt.pop %v93
    %v95 = vmul.f32 %v94, %v93
    %v96 = vmul.f32 %v95, %v94
    %v97 = vmul.f32 0.5, %v96
    %v98 = vsub.f32 1.5, %v97
    %v99 = vmul.f32 %v94, %v98
    %vm100 = vweird.f32 %v93
    %vm101 = vweird.f32 %v94
    %vm102 = vmor %vm100, %vm101
    %v103 = vsel %vm102, %v94, %v99
    %v104 = vmul.f32 %v90, %v103
    %v105 = vld [vmem:[%s1] sm:$0xff]
    %v106 = vmul.f32 %v105, %v105
    %v107 = vmul.f32 %v105, %v39
    %v108 = vsel %vm41, %v107, 0.0
    %v109 = vrot.slane %v108, 4
    %v110 = vadd.f32 %v108, %v109
    %v111 = vrot.slane %v110, 2
    %v112 = vadd.f32 %v110, %v111
    %v113 = vrot.slane %v112, 1
    %v114 = vadd.f32 %v112, %v113
    %v115 = vmul.f32 %v114, 0.25
    %v116 = vmul.f32 %v39, %v115
    %v117 = vadd.f32 %v116, 0.0
    %v118 = vmul.f32 %v106, %v39
    %v119 = vsel %vm41, %v118, 0.0
    %v120 = vrot.slane %v119, 4
    %v121 = vadd.f32 %v119, %v120
    %v122 = vrot.slane %v121, 2
    %v123 = vadd.f32 %v121, %v122
    %v124 = vrot.slane %v123, 1
    %v125 = vadd.f32 %v123, %v124
    %v126 = vmul.f32 %v125, 0.25
    %v127 = vmul.f32 %v39, %v126
    %v128 = vadd.f32 %v127, 0.0
    %v129 = vmul.f32 %v105, %v67
    %v130 = vsel %vm41, %v129, 0.0
    %v131 = vrot.slane %v130, 4
    %v132 = vadd.f32 %v130, %v131
    %v133 = vrot.slane %v132, 2
    %v134 = vadd.f32 %v132, %v133
    %v135 = vrot.slane %v134, 1
    %v136 = vadd.f32 %v134, %v135
    %v137 = vmul.f32 %v136, 0.25
    %v138 = vmul.f32 %v67, %v137
    %v139 = vadd.f32 %v117, %v138
    %v140 = vmul.f32 %v106, %v67
    %v141 = vsel %vm41, %v140, 0.0
    %v142 = vrot.slane %v141, 4
    %v143 = vadd.f32 %v141, %v142
    %v144 = vrot.slane %v143, 2
    %v145 = vadd.f32 %v143, %v144
    %v146 = vrot.slane %v145, 1
    %v147 = vadd.f32 %v145, %v146
    %v148 = vmul.f32 %v147, 0.25
    %v149 = vmul.f32 %v67, %v148
    %v150 = vadd.f32 %v128, %v149
    %v151 = vsub.f32 %v105, %v139
    %v152 = vmul.f32 %v139, %v139
    %v153 = vsub.f32 %v150, %v152
    %v154 = vadd.f32 %v153, 1e-05
    %v155 = vrsqrt.pop %v154
    %v156 = vmul.f32 %v155, %v154
    %v157 = vmul.f32 %v156, %v155
    %v158 = vmul.f32 0.5, %v157
    %v159 = vsub.f32 1.5, %v158
    %v160 = vmul.f32 %v155, %v159
    %vm161 = vweird.f32 %v154
    %vm162 = vweird.f32 %v155
    %vm163 = vmor %vm161, %vm162
    %v164 = vsel %vm163, %v155, %v160
    %v165 = vmul.f32 %v151, %v164
    %v167 = vrot.slane %v104, 1
    %v168 = vrot.slane %v104, 2
    %v169 = vrot.slane %v104, 3
    %v170 = vrot.slane %v104, 4
    %v171 = vrot.slane %v104, 5
    %v172 = vrot.slane %v104, 6
    %v173 = vrot.slane %v104, 7
    %v174 = vperm.slane %v104, 0
    %v175 = vperm.slane %v167, 0
    %v176 = vperm.slane %v168, 0
    %v177 = vperm.slane %v169, 0
    %v178 = vperm.slane %v170, 0
    %v179 = vperm.slane %v171, 0
    %v180 = vperm.slane %v172, 0
    %v181 = vperm.slane %v173, 0
    %191 = vset.pattern.permute.xlu0 0
    %192 = vperm.xlu0 %191, %v27
    %v193 = vpop.permute.xlu0 %192
    %196 = vset.pattern.permute.xlu0 0
    %197 = vperm.xlu0 %196, %v28
    %v198 = vpop.permute.xlu0 %197
    %201 = vset.pattern.permute.xlu0 0
    %202 = vperm.xlu0 %201, %v29
    %v203 = vpop.permute.xlu0 %202
    %206 = vset.pattern.permute.xlu0 0
    %207 = vperm.xlu0 %206, %v30
    %v208 = vpop.permute.xlu0 %207
    %v210 = vmul.f32 %v174, %v193
    %v211 = vmul.f32 %v174, %v198
    %v212 = vmul.f32 %v174, %v203
    %v213 = vmul.f32 %v174, %v208
    %v214 = vmul.f32 %v175, %v193
    %v215 = vmul.f32 %v175, %v198
    %v216 = vmul.f32 %v175, %v203
    %v217 = vmul.f32 %v175, %v208
    %v218 = vmul.f32 %v176, %v193
    %v219 = vmul.f32 %v176, %v198
    %v220 = vmul.f32 %v176, %v203
    %v221 = vmul.f32 %v176, %v208
    %v222 = vmul.f32 %v177, %v193
    %v223 = vmul.f32 %v177, %v198
    %v224 = vmul.f32 %v177, %v203
    %v225 = vmul.f32 %v177, %v208
    %v226 = vmul.f32 %v178, %v193
    %v227 = vmul.f32 %v178, %v198
    %v228 = vmul.f32 %v178, %v203
    %v229 = vmul.f32 %v178, %v208
    %v230 = vmul.f32 %v179, %v193
    %v231 = vmul.f32 %v179, %v198
    %v232 = vmul.f32 %v179, %v203
    %v233 = vmul.f32 %v179, %v208
    %v234 = vmul.f32 %v180, %v193
    %v235 = vmul.f32 %v180, %v198
    %v236 = vmul.f32 %v180, %v203
    %v237 = vmul.f32 %v180, %v208
    %v238 = vmul.f32 %v181, %v193
    %v239 = vmul.f32 %v181, %v198
    %v240 = vmul.f32 %v181, %v203
    %v241 = vmul.f32 %v181, %v208
    %v242 = vadd.f32 %v210, 0.0
    %v243 = vadd.f32 %v211, 0.0
    %v244 = vadd.f32 %v212, 0.0
    %v245 = vadd.f32 %v213, 0.0
    %v246 = vadd.f32 %v214, 0.0
    %v247 = vadd.f32 %v215, 0.0
    %v248 = vadd.f32 %v216, 0.0
    %v249 = vadd.f32 %v217, 0.0
    %v250 = vadd.f32 %v218, 0.0
    %v251 = vadd.f32 %v219, 0.0
    %v252 = vadd.f32 %v220, 0.0
    %v253 = vadd.f32 %v221, 0.0
    %v254 = vadd.f32 %v222, 0.0
    %v255 = vadd.f32 %v223, 0.0
    %v256 = vadd.f32 %v224, 0.0
    %v257 = vadd.f32 %v225, 0.0
    %v258 = vadd.f32 %v226, 0.0
    %v259 = vadd.f32 %v227, 0.0
    %v260 = vadd.f32 %v228, 0.0
    %v261 = vadd.f32 %v229, 0.0
    %v262 = vadd.f32 %v230, 0.0
    %v263 = vadd.f32 %v231, 0.0
    %v264 = vadd.f32 %v232, 0.0
    %v265 = vadd.f32 %v233, 0.0
    %v266 = vadd.f32 %v234, 0.0
    %v267 = vadd.f32 %v235, 0.0
    %v268 = vadd.f32 %v236, 0.0
    %v269 = vadd.f32 %v237, 0.0
    %v270 = vadd.f32 %v238, 0.0
    %v271 = vadd.f32 %v239, 0.0
    %v272 = vadd.f32 %v240, 0.0
    %v273 = vadd.f32 %v241, 0.0
    %v275 = vrot.slane %v165, 1
    %v276 = vrot.slane %v165, 2
    %v277 = vrot.slane %v165, 3
    %v278 = vrot.slane %v165, 4
    %v279 = vrot.slane %v165, 5
    %v280 = vrot.slane %v165, 6
    %v281 = vrot.slane %v165, 7
    %v282 = vperm.slane %v165, 0
    %v283 = vperm.slane %v275, 0
    %v284 = vperm.slane %v276, 0
    %v285 = vperm.slane %v277, 0
    %v286 = vperm.slane %v278, 0
    %v287 = vperm.slane %v279, 0
    %v288 = vperm.slane %v280, 0
    %v289 = vperm.slane %v281, 0
    %298 = vset.pattern.permute.xlu0 1
    %299 = vperm.xlu0 %298, %v27
    %v300 = vpop.permute.xlu0 %299
    %302 = vset.pattern.permute.xlu0 1
    %303 = vperm.xlu0 %302, %v28
    %v304 = vpop.permute.xlu0 %303
    %306 = vset.pattern.permute.xlu0 1
    %307 = vperm.xlu0 %306, %v29
    %v308 = vpop.permute.xlu0 %307
    %310 = vset.pattern.permute.xlu0 1
    %311 = vperm.xlu0 %310, %v30
    %v312 = vpop.permute.xlu0 %311
    %v314 = vmul.f32 %v282, %v300
    %v315 = vmul.f32 %v282, %v304
    %v316 = vmul.f32 %v282, %v308
    %v317 = vmul.f32 %v282, %v312
    %v318 = vmul.f32 %v283, %v300
    %v319 = vmul.f32 %v283, %v304
    %v320 = vmul.f32 %v283, %v308
    %v321 = vmul.f32 %v283, %v312
    %v322 = vmul.f32 %v284, %v300
    %v323 = vmul.f32 %v284, %v304
    %v324 = vmul.f32 %v284, %v308
    %v325 = vmul.f32 %v284, %v312
    %v326 = vmul.f32 %v285, %v300
    %v327 = vmul.f32 %v285, %v304
    %v328 = vmul.f32 %v285, %v308
    %v329 = vmul.f32 %v285, %v312
    %v330 = vmul.f32 %v286, %v300
    %v331 = vmul.f32 %v286, %v304
    %v332 = vmul.f32 %v286, %v308
    %v333 = vmul.f32 %v286, %v312
    %v334 = vmul.f32 %v287, %v300
    %v335 = vmul.f32 %v287, %v304
    %v336 = vmul.f32 %v287, %v308
    %v337 = vmul.f32 %v287, %v312
    %v338 = vmul.f32 %v288, %v300
    %v339 = vmul.f32 %v288, %v304
    %v340 = vmul.f32 %v288, %v308
    %v341 = vmul.f32 %v288, %v312
    %v342 = vmul.f32 %v289, %v300
    %v343 = vmul.f32 %v289, %v304
    %v344 = vmul.f32 %v289, %v308
    %v345 = vmul.f32 %v289, %v312
    %v346 = vadd.f32 %v242, %v314
    %v347 = vadd.f32 %v243, %v315
    %v348 = vadd.f32 %v244, %v316
    %v349 = vadd.f32 %v245, %v317
    %v350 = vadd.f32 %v246, %v318
    %v351 = vadd.f32 %v247, %v319
    %v352 = vadd.f32 %v248, %v320
    %v353 = vadd.f32 %v249, %v321
    %v354 = vadd.f32 %v250, %v322
    %v355 = vadd.f32 %v251, %v323
    %v356 = vadd.f32 %v252, %v324
    %v357 = vadd.f32 %v253, %v325
    %v358 = vadd.f32 %v254, %v326
    %v359 = vadd.f32 %v255, %v327
    %v360 = vadd.f32 %v256, %v328
    %v361 = vadd.f32 %v257, %v329
    %v362 = vadd.f32 %v258, %v330
    %v363 = vadd.f32 %v259, %v331
    %v364 = vadd.f32 %v260, %v332
    %v365 = vadd.f32 %v261, %v333
    %v366 = vadd.f32 %v262, %v334
    %v367 = vadd.f32 %v263, %v335
    %v368 = vadd.f32 %v264, %v336
    %v369 = vadd.f32 %v265, %v337
    %v370 = vadd.f32 %v266, %v338
    %v371 = vadd.f32 %v267, %v339
    %v372 = vadd.f32 %v268, %v340
    %v373 = vadd.f32 %v269, %v341
    %v374 = vadd.f32 %v270, %v342
    %v375 = vadd.f32 %v271, %v343
    %v376 = vadd.f32 %v272, %v344
    %v377 = vadd.f32 %v273, %v345
    %378 = vset.pattern.permute.xlu0 2
    %379 = vperm.xlu0 %378, %v27
    %v380 = vpop.permute.xlu0 %379
    %382 = vset.pattern.permute.xlu0 2
    %383 = vperm.xlu0 %382, %v28
    %v384 = vpop.permute.xlu0 %383
    %386 = vset.pattern.permute.xlu0 2
    %387 = vperm.xlu0 %386, %v29
    %v388 = vpop.permute.xlu0 %387
    %390 = vset.pattern.permute.xlu0 2
    %391 = vperm.xlu0 %390, %v30
    %v392 = vpop.permute.xlu0 %391
    %v394 = vmul.f32 %v174, %v380
    %v395 = vmul.f32 %v174, %v384
    %v396 = vmul.f32 %v174, %v388
    %v397 = vmul.f32 %v174, %v392
    %v398 = vmul.f32 %v175, %v380
    %v399 = vmul.f32 %v175, %v384
    %v400 = vmul.f32 %v175, %v388
    %v401 = vmul.f32 %v175, %v392
    %v402 = vmul.f32 %v176, %v380
    %v403 = vmul.f32 %v176, %v384
    %v404 = vmul.f32 %v176, %v388
    %v405 = vmul.f32 %v176, %v392
    %v406 = vmul.f32 %v177, %v380
    %v407 = vmul.f32 %v177, %v384
    %v408 = vmul.f32 %v177, %v388
    %v409 = vmul.f32 %v177, %v392
    %v410 = vmul.f32 %v178, %v380
    %v411 = vmul.f32 %v178, %v384
    %v412 = vmul.f32 %v178, %v388
    %v413 = vmul.f32 %v178, %v392
    %v414 = vmul.f32 %v179, %v380
    %v415 = vmul.f32 %v179, %v384
    %v416 = vmul.f32 %v179, %v388
    %v417 = vmul.f32 %v179, %v392
    %v418 = vmul.f32 %v180, %v380
    %v419 = vmul.f32 %v180, %v384
    %v420 = vmul.f32 %v180, %v388
    %v421 = vmul.f32 %v180, %v392
    %v422 = vmul.f32 %v181, %v380
    %v423 = vmul.f32 %v181, %v384
    %v424 = vmul.f32 %v181, %v388
    %v425 = vmul.f32 %v181, %v392
    %458 = vrot.lane.b32.xlu0 %v394, 127
    %v459 = vpop.permute.xlu0 %458
    %460 = vrot.lane.b32.xlu0 %v395, 127
    %v461 = vpop.permute.xlu0 %460
    %462 = vrot.lane.b32.xlu0 %v396, 127
    %v463 = vpop.permute.xlu0 %462
    %464 = vrot.lane.b32.xlu0 %v397, 127
    %v465 = vpop.permute.xlu0 %464
    %466 = vrot.lane.b32.xlu0 %v398, 127
    %v467 = vpop.permute.xlu0 %466
    %468 = vrot.lane.b32.xlu0 %v399, 127
    %v469 = vpop.permute.xlu0 %468
    %470 = vrot.lane.b32.xlu0 %v400, 127
    %v471 = vpop.permute.xlu0 %470
    %472 = vrot.lane.b32.xlu0 %v401, 127
    %v473 = vpop.permute.xlu0 %472
    %474 = vrot.lane.b32.xlu0 %v402, 127
    %v475 = vpop.permute.xlu0 %474
    %476 = vrot.lane.b32.xlu0 %v403, 127
    %v477 = vpop.permute.xlu0 %476
    %478 = vrot.lane.b32.xlu0 %v404, 127
    %v479 = vpop.permute.xlu0 %478
    %480 = vrot.lane.b32.xlu0 %v405, 127
    %v481 = vpop.permute.xlu0 %480
    %482 = vrot.lane.b32.xlu0 %v406, 127
    %v483 = vpop.permute.xlu0 %482
    %484 = vrot.lane.b32.xlu0 %v407, 127
    %v485 = vpop.permute.xlu0 %484
    %486 = vrot.lane.b32.xlu0 %v408, 127
    %v487 = vpop.permute.xlu0 %486
    %488 = vrot.lane.b32.xlu0 %v409, 127
    %v489 = vpop.permute.xlu0 %488
    %490 = vrot.lane.b32.xlu0 %v410, 127
    %v491 = vpop.permute.xlu0 %490
    %492 = vrot.lane.b32.xlu0 %v411, 127
    %v493 = vpop.permute.xlu0 %492
    %494 = vrot.lane.b32.xlu0 %v412, 127
    %v495 = vpop.permute.xlu0 %494
    %496 = vrot.lane.b32.xlu0 %v413, 127
    %v497 = vpop.permute.xlu0 %496
    %498 = vrot.lane.b32.xlu0 %v414, 127
    %v499 = vpop.permute.xlu0 %498
    %500 = vrot.lane.b32.xlu0 %v415, 127
    %v501 = vpop.permute.xlu0 %500
    %502 = vrot.lane.b32.xlu0 %v416, 127
    %v503 = vpop.permute.xlu0 %502
    %504 = vrot.lane.b32.xlu0 %v417, 127
    %v505 = vpop.permute.xlu0 %504
    %506 = vrot.lane.b32.xlu0 %v418, 127
    %v507 = vpop.permute.xlu0 %506
    %508 = vrot.lane.b32.xlu0 %v419, 127
    %v509 = vpop.permute.xlu0 %508
    %510 = vrot.lane.b32.xlu0 %v420, 127
    %v511 = vpop.permute.xlu0 %510
    %512 = vrot.lane.b32.xlu0 %v421, 127
    %v513 = vpop.permute.xlu0 %512
    %514 = vrot.lane.b32.xlu0 %v422, 127
    %v515 = vpop.permute.xlu0 %514
    %516 = vrot.lane.b32.xlu0 %v423, 127
    %v517 = vpop.permute.xlu0 %516
    %518 = vrot.lane.b32.xlu0 %v424, 127
    %v519 = vpop.permute.xlu0 %518
    %520 = vrot.lane.b32.xlu0 %v425, 127
    %v521 = vpop.permute.xlu0 %520
    %v554 = vadd.f32 %v346, %v459
    %v555 = vadd.f32 %v347, %v461
    %v556 = vadd.f32 %v348, %v463
    %v557 = vadd.f32 %v349, %v465
    %v558 = vadd.f32 %v350, %v467
    %v559 = vadd.f32 %v351, %v469
    %v560 = vadd.f32 %v352, %v471
    %v561 = vadd.f32 %v353, %v473
    %v562 = vadd.f32 %v354, %v475
    %v563 = vadd.f32 %v355, %v477
    %v564 = vadd.f32 %v356, %v479
    %v565 = vadd.f32 %v357, %v481
    %v566 = vadd.f32 %v358, %v483
    %v567 = vadd.f32 %v359, %v485
    %v568 = vadd.f32 %v360, %v487
    %v569 = vadd.f32 %v361, %v489
    %v570 = vadd.f32 %v362, %v491
    %v571 = vadd.f32 %v363, %v493
    %v572 = vadd.f32 %v364, %v495
    %v573 = vadd.f32 %v365, %v497
    %v574 = vadd.f32 %v366, %v499
    %v575 = vadd.f32 %v367, %v501
    %v576 = vadd.f32 %v368, %v503
    %v577 = vadd.f32 %v369, %v505
    %v578 = vadd.f32 %v370, %v507
    %v579 = vadd.f32 %v371, %v509
    %v580 = vadd.f32 %v372, %v511
    %v581 = vadd.f32 %v373, %v513
    %v582 = vadd.f32 %v374, %v515
    %v583 = vadd.f32 %v375, %v517
    %v584 = vadd.f32 %v376, %v519
    %v585 = vadd.f32 %v377, %v521
    %586 = vset.pattern.permute.xlu0 3
    %587 = vperm.xlu0 %586, %v27
    %v588 = vpop.permute.xlu0 %587
    %590 = vset.pattern.permute.xlu0 3
    %591 = vperm.xlu0 %590, %v28
    %v592 = vpop.permute.xlu0 %591
    %594 = vset.pattern.permute.xlu0 3
    %595 = vperm.xlu0 %594, %v29
    %v596 = vpop.permute.xlu0 %595
    %598 = vset.pattern.permute.xlu0 3
    %599 = vperm.xlu0 %598, %v30
    %v600 = vpop.permute.xlu0 %599
    %v602 = vmul.f32 %v282, %v588
    %v603 = vmul.f32 %v282, %v592
    %v604 = vmul.f32 %v282, %v596
    %v605 = vmul.f32 %v282, %v600
    %v606 = vmul.f32 %v283, %v588
    %v607 = vmul.f32 %v283, %v592
    %v608 = vmul.f32 %v283, %v596
    %v609 = vmul.f32 %v283, %v600
    %v610 = vmul.f32 %v284, %v588
    %v611 = vmul.f32 %v284, %v592
    %v612 = vmul.f32 %v284, %v596
    %v613 = vmul.f32 %v284, %v600
    %v614 = vmul.f32 %v285, %v588
    %v615 = vmul.f32 %v285, %v592
    %v616 = vmul.f32 %v285, %v596
    %v617 = vmul.f32 %v285, %v600
    %v618 = vmul.f32 %v286, %v588
    %v619 = vmul.f32 %v286, %v592
    %v620 = vmul.f32 %v286, %v596
    %v621 = vmul.f32 %v286, %v600
    %v622 = vmul.f32 %v287, %v588
    %v623 = vmul.f32 %v287, %v592
    %v624 = vmul.f32 %v287, %v596
    %v625 = vmul.f32 %v287, %v600
    %v626 = vmul.f32 %v288, %v588
    %v627 = vmul.f32 %v288, %v592
    %v628 = vmul.f32 %v288, %v596
    %v629 = vmul.f32 %v288, %v600
    %v630 = vmul.f32 %v289, %v588
    %v631 = vmul.f32 %v289, %v592
    %v632 = vmul.f32 %v289, %v596
    %v633 = vmul.f32 %v289, %v600
    %666 = vrot.lane.b32.xlu0 %v602, 127
    %v667 = vpop.permute.xlu0 %666
    %668 = vrot.lane.b32.xlu0 %v603, 127
    %v669 = vpop.permute.xlu0 %668
    %670 = vrot.lane.b32.xlu0 %v604, 127
    %v671 = vpop.permute.xlu0 %670
    %672 = vrot.lane.b32.xlu0 %v605, 127
    %v673 = vpop.permute.xlu0 %672
    %674 = vrot.lane.b32.xlu0 %v606, 127
    %v675 = vpop.permute.xlu0 %674
    %676 = vrot.lane.b32.xlu0 %v607, 127
    %v677 = vpop.permute.xlu0 %676
    %678 = vrot.lane.b32.xlu0 %v608, 127
    %v679 = vpop.permute.xlu0 %678
    %680 = vrot.lane.b32.xlu0 %v609, 127
    %v681 = vpop.permute.xlu0 %680
    %682 = vrot.lane.b32.xlu0 %v610, 127
    %v683 = vpop.permute.xlu0 %682
    %684 = vrot.lane.b32.xlu0 %v611, 127
    %v685 = vpop.permute.xlu0 %684
    %686 = vrot.lane.b32.xlu0 %v612, 127
    %v687 = vpop.permute.xlu0 %686
    %688 = vrot.lane.b32.xlu0 %v613, 127
    %v689 = vpop.permute.xlu0 %688
    %690 = vrot.lane.b32.xlu0 %v614, 127
    %v691 = vpop.permute.xlu0 %690
    %692 = vrot.lane.b32.xlu0 %v615, 127
    %v693 = vpop.permute.xlu0 %692
    %694 = vrot.lane.b32.xlu0 %v616, 127
    %v695 = vpop.permute.xlu0 %694
    %696 = vrot.lane.b32.xlu0 %v617, 127
    %v697 = vpop.permute.xlu0 %696
    %698 = vrot.lane.b32.xlu0 %v618, 127
    %v699 = vpop.permute.xlu0 %698
    %700 = vrot.lane.b32.xlu0 %v619, 127
    %v701 = vpop.permute.xlu0 %700
    %702 = vrot.lane.b32.xlu0 %v620, 127
    %v703 = vpop.permute.xlu0 %702
    %704 = vrot.lane.b32.xlu0 %v621, 127
    %v705 = vpop.permute.xlu0 %704
    %706 = vrot.lane.b32.xlu0 %v622, 127
    %v707 = vpop.permute.xlu0 %706
    %708 = vrot.lane.b32.xlu0 %v623, 127
    %v709 = vpop.permute.xlu0 %708
    %710 = vrot.lane.b32.xlu0 %v624, 127
    %v711 = vpop.permute.xlu0 %710
    %712 = vrot.lane.b32.xlu0 %v625, 127
    %v713 = vpop.permute.xlu0 %712
    %714 = vrot.lane.b32.xlu0 %v626, 127
    %v715 = vpop.permute.xlu0 %714
    %716 = vrot.lane.b32.xlu0 %v627, 127
    %v717 = vpop.permute.xlu0 %716
    %718 = vrot.lane.b32.xlu0 %v628, 127
    %v719 = vpop.permute.xlu0 %718
    %720 = vrot.lane.b32.xlu0 %v629, 127
    %v721 = vpop.permute.xlu0 %720
    %722 = vrot.lane.b32.xlu0 %v630, 127
    %v723 = vpop.permute.xlu0 %722
    %724 = vrot.lane.b32.xlu0 %v631, 127
    %v725 = vpop.permute.xlu0 %724
    %726 = vrot.lane.b32.xlu0 %v632, 127
    %v727 = vpop.permute.xlu0 %726
    %728 = vrot.lane.b32.xlu0 %v633, 127
    %v729 = vpop.permute.xlu0 %728
    %v762 = vadd.f32 %v554, %v667
    %v763 = vadd.f32 %v555, %v669
    %v764 = vadd.f32 %v556, %v671
    %v765 = vadd.f32 %v557, %v673
    %v766 = vadd.f32 %v558, %v675
    %v767 = vadd.f32 %v559, %v677
    %v768 = vadd.f32 %v560, %v679
    %v769 = vadd.f32 %v561, %v681
    %v770 = vadd.f32 %v562, %v683
    %v771 = vadd.f32 %v563, %v685
    %v772 = vadd.f32 %v564, %v687
    %v773 = vadd.f32 %v565, %v689
    %v774 = vadd.f32 %v566, %v691
    %v775 = vadd.f32 %v567, %v693
    %v776 = vadd.f32 %v568, %v695
    %v777 = vadd.f32 %v569, %v697
    %v778 = vadd.f32 %v570, %v699
    %v779 = vadd.f32 %v571, %v701
    %v780 = vadd.f32 %v572, %v703
    %v781 = vadd.f32 %v573, %v705
    %v782 = vadd.f32 %v574, %v707
    %v783 = vadd.f32 %v575, %v709
    %v784 = vadd.f32 %v576, %v711
    %v785 = vadd.f32 %v577, %v713
    %v786 = vadd.f32 %v578, %v715
    %v787 = vadd.f32 %v579, %v717
    %v788 = vadd.f32 %v580, %v719
    %v789 = vadd.f32 %v581, %v721
    %v790 = vadd.f32 %v582, %v723
    %v791 = vadd.f32 %v583, %v725
    %v792 = vadd.f32 %v584, %v727
    %v793 = vadd.f32 %v585, %v729
    %794 = vset.pattern.permute.xlu0 4
    %795 = vperm.xlu0 %794, %v27
    %v796 = vpop.permute.xlu0 %795
    %798 = vset.pattern.permute.xlu0 4
    %799 = vperm.xlu0 %798, %v28
    %v800 = vpop.permute.xlu0 %799
    %802 = vset.pattern.permute.xlu0 4
    %803 = vperm.xlu0 %802, %v29
    %v804 = vpop.permute.xlu0 %803
    %806 = vset.pattern.permute.xlu0 4
    %807 = vperm.xlu0 %806, %v30
    %v808 = vpop.permute.xlu0 %807
    %v810 = vmul.f32 %v174, %v796
    %v811 = vmul.f32 %v174, %v800
    %v812 = vmul.f32 %v174, %v804
    %v813 = vmul.f32 %v174, %v808
    %v814 = vmul.f32 %v175, %v796
    %v815 = vmul.f32 %v175, %v800
    %v816 = vmul.f32 %v175, %v804
    %v817 = vmul.f32 %v175, %v808
    %v818 = vmul.f32 %v176, %v796
    %v819 = vmul.f32 %v176, %v800
    %v820 = vmul.f32 %v176, %v804
    %v821 = vmul.f32 %v176, %v808
    %v822 = vmul.f32 %v177, %v796
    %v823 = vmul.f32 %v177, %v800
    %v824 = vmul.f32 %v177, %v804
    %v825 = vmul.f32 %v177, %v808
    %v826 = vmul.f32 %v178, %v796
    %v827 = vmul.f32 %v178, %v800
    %v828 = vmul.f32 %v178, %v804
    %v829 = vmul.f32 %v178, %v808
    %v830 = vmul.f32 %v179, %v796
    %v831 = vmul.f32 %v179, %v800
    %v832 = vmul.f32 %v179, %v804
    %v833 = vmul.f32 %v179, %v808
    %v834 = vmul.f32 %v180, %v796
    %v835 = vmul.f32 %v180, %v800
    %v836 = vmul.f32 %v180, %v804
    %v837 = vmul.f32 %v180, %v808
    %v838 = vmul.f32 %v181, %v796
    %v839 = vmul.f32 %v181, %v800
    %v840 = vmul.f32 %v181, %v804
    %v841 = vmul.f32 %v181, %v808
    %874 = vrot.lane.b32.xlu0 %v810, 126
    %v875 = vpop.permute.xlu0 %874
    %876 = vrot.lane.b32.xlu0 %v811, 126
    %v877 = vpop.permute.xlu0 %876
    %878 = vrot.lane.b32.xlu0 %v812, 126
    %v879 = vpop.permute.xlu0 %878
    %880 = vrot.lane.b32.xlu0 %v813, 126
    %v881 = vpop.permute.xlu0 %880
    %882 = vrot.lane.b32.xlu0 %v814, 126
    %v883 = vpop.permute.xlu0 %882
    %884 = vrot.lane.b32.xlu0 %v815, 126
    %v885 = vpop.permute.xlu0 %884
    %886 = vrot.lane.b32.xlu0 %v816, 126
    %v887 = vpop.permute.xlu0 %886
    %888 = vrot.lane.b32.xlu0 %v817, 126
    %v889 = vpop.permute.xlu0 %888
    %890 = vrot.lane.b32.xlu0 %v818, 126
    %v891 = vpop.permute.xlu0 %890
    %892 = vrot.lane.b32.xlu0 %v819, 126
    %v893 = vpop.permute.xlu0 %892
    %894 = vrot.lane.b32.xlu0 %v820, 126
    %v895 = vpop.permute.xlu0 %894
    %896 = vrot.lane.b32.xlu0 %v821, 126
    %v897 = vpop.permute.xlu0 %896
    %898 = vrot.lane.b32.xlu0 %v822, 126
    %v899 = vpop.permute.xlu0 %898
    %900 = vrot.lane.b32.xlu0 %v823, 126
    %v901 = vpop.permute.xlu0 %900
    %902 = vrot.lane.b32.xlu0 %v824, 126
    %v903 = vpop.permute.xlu0 %902
    %904 = vrot.lane.b32.xlu0 %v825, 126
    %v905 = vpop.permute.xlu0 %904
    %906 = vrot.lane.b32.xlu0 %v826, 126
    %v907 = vpop.permute.xlu0 %906
    %908 = vrot.lane.b32.xlu0 %v827, 126
    %v909 = vpop.permute.xlu0 %908
    %910 = vrot.lane.b32.xlu0 %v828, 126
    %v911 = vpop.permute.xlu0 %910
    %912 = vrot.lane.b32.xlu0 %v829, 126
    %v913 = vpop.permute.xlu0 %912
    %914 = vrot.lane.b32.xlu0 %v830, 126
    %v915 = vpop.permute.xlu0 %914
    %916 = vrot.lane.b32.xlu0 %v831, 126
    %v917 = vpop.permute.xlu0 %916
    %918 = vrot.lane.b32.xlu0 %v832, 126
    %v919 = vpop.permute.xlu0 %918
    %920 = vrot.lane.b32.xlu0 %v833, 126
    %v921 = vpop.permute.xlu0 %920
    %922 = vrot.lane.b32.xlu0 %v834, 126
    %v923 = vpop.permute.xlu0 %922
    %924 = vrot.lane.b32.xlu0 %v835, 126
    %v925 = vpop.permute.xlu0 %924
    %926 = vrot.lane.b32.xlu0 %v836, 126
    %v927 = vpop.permute.xlu0 %926
    %928 = vrot.lane.b32.xlu0 %v837, 126
    %v929 = vpop.permute.xlu0 %928
    %930 = vrot.lane.b32.xlu0 %v838, 126
    %v931 = vpop.permute.xlu0 %930
    %932 = vrot.lane.b32.xlu0 %v839, 126
    %v933 = vpop.permute.xlu0 %932
    %934 = vrot.lane.b32.xlu0 %v840, 126
    %v935 = vpop.permute.xlu0 %934
    %936 = vrot.lane.b32.xlu0 %v841, 126
    %v937 = vpop.permute.xlu0 %936
    %v970 = vadd.f32 %v762, %v875
    %v971 = vadd.f32 %v763, %v877
    %v972 = vadd.f32 %v764, %v879
    %v973 = vadd.f32 %v765, %v881
    %v974 = vadd.f32 %v766, %v883
    %v975 = vadd.f32 %v767, %v885
    %v976 = vadd.f32 %v768, %v887
    %v977 = vadd.f32 %v769, %v889
    %v978 = vadd.f32 %v770, %v891
    %v979 = vadd.f32 %v771, %v893
    %v980 = vadd.f32 %v772, %v895
    %v981 = vadd.f32 %v773, %v897
    %v982 = vadd.f32 %v774, %v899
    %v983 = vadd.f32 %v775, %v901
    %v984 = vadd.f32 %v776, %v903
    %v985 = vadd.f32 %v777, %v905
    %v986 = vadd.f32 %v778, %v907
    %v987 = vadd.f32 %v779, %v909
    %v988 = vadd.f32 %v780, %v911
    %v989 = vadd.f32 %v781, %v913
    %v990 = vadd.f32 %v782, %v915
    %v991 = vadd.f32 %v783, %v917
    %v992 = vadd.f32 %v784, %v919
    %v993 = vadd.f32 %v785, %v921
    %v994 = vadd.f32 %v786, %v923
    %v995 = vadd.f32 %v787, %v925
    %v996 = vadd.f32 %v788, %v927
    %v997 = vadd.f32 %v789, %v929
    %v998 = vadd.f32 %v790, %v931
    %v999 = vadd.f32 %v791, %v933
    %v1000 = vadd.f32 %v792, %v935
    %v1001 = vadd.f32 %v793, %v937
    %1002 = vset.pattern.permute.xlu0 5
    %1003 = vperm.xlu0 %1002, %v27
    %v1004 = vpop.permute.xlu0 %1003
    %1006 = vset.pattern.permute.xlu0 5
    %1007 = vperm.xlu0 %1006, %v28
    %v1008 = vpop.permute.xlu0 %1007
    %1010 = vset.pattern.permute.xlu0 5
    %1011 = vperm.xlu0 %1010, %v29
    %v1012 = vpop.permute.xlu0 %1011
    %1014 = vset.pattern.permute.xlu0 5
    %1015 = vperm.xlu0 %1014, %v30
    %v1016 = vpop.permute.xlu0 %1015
    %v1018 = vmul.f32 %v282, %v1004
    %v1019 = vmul.f32 %v282, %v1008
    %v1020 = vmul.f32 %v282, %v1012
    %v1021 = vmul.f32 %v282, %v1016
    %v1022 = vmul.f32 %v283, %v1004
    %v1023 = vmul.f32 %v283, %v1008
    %v1024 = vmul.f32 %v283, %v1012
    %v1025 = vmul.f32 %v283, %v1016
    %v1026 = vmul.f32 %v284, %v1004
    %v1027 = vmul.f32 %v284, %v1008
    %v1028 = vmul.f32 %v284, %v1012
    %v1029 = vmul.f32 %v284, %v1016
    %v1030 = vmul.f32 %v285, %v1004
    %v1031 = vmul.f32 %v285, %v1008
    %v1032 = vmul.f32 %v285, %v1012
    %v1033 = vmul.f32 %v285, %v1016
    %v1034 = vmul.f32 %v286, %v1004
    %v1035 = vmul.f32 %v286, %v1008
    %v1036 = vmul.f32 %v286, %v1012
    %v1037 = vmul.f32 %v286, %v1016
    %v1038 = vmul.f32 %v287, %v1004
    %v1039 = vmul.f32 %v287, %v1008
    %v1040 = vmul.f32 %v287, %v1012
    %v1041 = vmul.f32 %v287, %v1016
    %v1042 = vmul.f32 %v288, %v1004
    %v1043 = vmul.f32 %v288, %v1008
    %v1044 = vmul.f32 %v288, %v1012
    %v1045 = vmul.f32 %v288, %v1016
    %v1046 = vmul.f32 %v289, %v1004
    %v1047 = vmul.f32 %v289, %v1008
    %v1048 = vmul.f32 %v289, %v1012
    %v1049 = vmul.f32 %v289, %v1016
    %1082 = vrot.lane.b32.xlu0 %v1018, 126
    %v1083 = vpop.permute.xlu0 %1082
    %1084 = vrot.lane.b32.xlu0 %v1019, 126
    %v1085 = vpop.permute.xlu0 %1084
    %1086 = vrot.lane.b32.xlu0 %v1020, 126
    %v1087 = vpop.permute.xlu0 %1086
    %1088 = vrot.lane.b32.xlu0 %v1021, 126
    %v1089 = vpop.permute.xlu0 %1088
    %1090 = vrot.lane.b32.xlu0 %v1022, 126
    %v1091 = vpop.permute.xlu0 %1090
    %1092 = vrot.lane.b32.xlu0 %v1023, 126
    %v1093 = vpop.permute.xlu0 %1092
    %1094 = vrot.lane.b32.xlu0 %v1024, 126
    %v1095 = vpop.permute.xlu0 %1094
    %1096 = vrot.lane.b32.xlu0 %v1025, 126
    %v1097 = vpop.permute.xlu0 %1096
    %1098 = vrot.lane.b32.xlu0 %v1026, 126
    %v1099 = vpop.permute.xlu0 %1098
    %1100 = vrot.lane.b32.xlu0 %v1027, 126
    %v1101 = vpop.permute.xlu0 %1100
    %1102 = vrot.lane.b32.xlu0 %v1028, 126
    %v1103 = vpop.permute.xlu0 %1102
    %1104 = vrot.lane.b32.xlu0 %v1029, 126
    %v1105 = vpop.permute.xlu0 %1104
    %1106 = vrot.lane.b32.xlu0 %v1030, 126
    %v1107 = vpop.permute.xlu0 %1106
    %1108 = vrot.lane.b32.xlu0 %v1031, 126
    %v1109 = vpop.permute.xlu0 %1108
    %1110 = vrot.lane.b32.xlu0 %v1032, 126
    %v1111 = vpop.permute.xlu0 %1110
    %1112 = vrot.lane.b32.xlu0 %v1033, 126
    %v1113 = vpop.permute.xlu0 %1112
    %1114 = vrot.lane.b32.xlu0 %v1034, 126
    %v1115 = vpop.permute.xlu0 %1114
    %1116 = vrot.lane.b32.xlu0 %v1035, 126
    %v1117 = vpop.permute.xlu0 %1116
    %1118 = vrot.lane.b32.xlu0 %v1036, 126
    %v1119 = vpop.permute.xlu0 %1118
    %1120 = vrot.lane.b32.xlu0 %v1037, 126
    %v1121 = vpop.permute.xlu0 %1120
    %1122 = vrot.lane.b32.xlu0 %v1038, 126
    %v1123 = vpop.permute.xlu0 %1122
    %1124 = vrot.lane.b32.xlu0 %v1039, 126
    %v1125 = vpop.permute.xlu0 %1124
    %1126 = vrot.lane.b32.xlu0 %v1040, 126
    %v1127 = vpop.permute.xlu0 %1126
    %1128 = vrot.lane.b32.xlu0 %v1041, 126
    %v1129 = vpop.permute.xlu0 %1128
    %1130 = vrot.lane.b32.xlu0 %v1042, 126
    %v1131 = vpop.permute.xlu0 %1130
    %1132 = vrot.lane.b32.xlu0 %v1043, 126
    %v1133 = vpop.permute.xlu0 %1132
    %1134 = vrot.lane.b32.xlu0 %v1044, 126
    %v1135 = vpop.permute.xlu0 %1134
    %1136 = vrot.lane.b32.xlu0 %v1045, 126
    %v1137 = vpop.permute.xlu0 %1136
    %1138 = vrot.lane.b32.xlu0 %v1046, 126
    %v1139 = vpop.permute.xlu0 %1138
    %1140 = vrot.lane.b32.xlu0 %v1047, 126
    %v1141 = vpop.permute.xlu0 %1140
    %1142 = vrot.lane.b32.xlu0 %v1048, 126
    %v1143 = vpop.permute.xlu0 %1142
    %1144 = vrot.lane.b32.xlu0 %v1049, 126
    %v1145 = vpop.permute.xlu0 %1144
    %v1178 = vadd.f32 %v970, %v1083
    %v1179 = vadd.f32 %v971, %v1085
    %v1180 = vadd.f32 %v972, %v1087
    %v1181 = vadd.f32 %v973, %v1089
    %v1182 = vadd.f32 %v974, %v1091
    %v1183 = vadd.f32 %v975, %v1093
    %v1184 = vadd.f32 %v976, %v1095
    %v1185 = vadd.f32 %v977, %v1097
    %v1186 = vadd.f32 %v978, %v1099
    %v1187 = vadd.f32 %v979, %v1101
    %v1188 = vadd.f32 %v980, %v1103
    %v1189 = vadd.f32 %v981, %v1105
    %v1190 = vadd.f32 %v982, %v1107
    %v1191 = vadd.f32 %v983, %v1109
    %v1192 = vadd.f32 %v984, %v1111
    %v1193 = vadd.f32 %v985, %v1113
    %v1194 = vadd.f32 %v986, %v1115
    %v1195 = vadd.f32 %v987, %v1117
    %v1196 = vadd.f32 %v988, %v1119
    %v1197 = vadd.f32 %v989, %v1121
    %v1198 = vadd.f32 %v990, %v1123
    %v1199 = vadd.f32 %v991, %v1125
    %v1200 = vadd.f32 %v992, %v1127
    %v1201 = vadd.f32 %v993, %v1129
    %v1202 = vadd.f32 %v994, %v1131
    %v1203 = vadd.f32 %v995, %v1133
    %v1204 = vadd.f32 %v996, %v1135
    %v1205 = vadd.f32 %v997, %v1137
    %v1206 = vadd.f32 %v998, %v1139
    %v1207 = vadd.f32 %v999, %v1141
    %v1208 = vadd.f32 %v1000, %v1143
    %v1209 = vadd.f32 %v1001, %v1145
    %1210 = vset.pattern.permute.xlu0 6
    %1211 = vperm.xlu0 %1210, %v27
    %v1212 = vpop.permute.xlu0 %1211
    %1214 = vset.pattern.permute.xlu0 6
    %1215 = vperm.xlu0 %1214, %v28
    %v1216 = vpop.permute.xlu0 %1215
    %1218 = vset.pattern.permute.xlu0 6
    %1219 = vperm.xlu0 %1218, %v29
    %v1220 = vpop.permute.xlu0 %1219
    %1222 = vset.pattern.permute.xlu0 6
    %1223 = vperm.xlu0 %1222, %v30
    %v1224 = vpop.permute.xlu0 %1223
    %v1226 = vmul.f32 %v174, %v1212
    %v1227 = vmul.f32 %v174, %v1216
    %v1228 = vmul.f32 %v174, %v1220
    %v1229 = vmul.f32 %v174, %v1224
    %v1230 = vmul.f32 %v175, %v1212
    %v1231 = vmul.f32 %v175, %v1216
    %v1232 = vmul.f32 %v175, %v1220
    %v1233 = vmul.f32 %v175, %v1224
    %v1234 = vmul.f32 %v176, %v1212
    %v1235 = vmul.f32 %v176, %v1216
    %v1236 = vmul.f32 %v176, %v1220
    %v1237 = vmul.f32 %v176, %v1224
    %v1238 = vmul.f32 %v177, %v1212
    %v1239 = vmul.f32 %v177, %v1216
    %v1240 = vmul.f32 %v177, %v1220
    %v1241 = vmul.f32 %v177, %v1224
    %v1242 = vmul.f32 %v178, %v1212
    %v1243 = vmul.f32 %v178, %v1216
    %v1244 = vmul.f32 %v178, %v1220
    %v1245 = vmul.f32 %v178, %v1224
    %v1246 = vmul.f32 %v179, %v1212
    %v1247 = vmul.f32 %v179, %v1216
    %v1248 = vmul.f32 %v179, %v1220
    %v1249 = vmul.f32 %v179, %v1224
    %v1250 = vmul.f32 %v180, %v1212
    %v1251 = vmul.f32 %v180, %v1216
    %v1252 = vmul.f32 %v180, %v1220
    %v1253 = vmul.f32 %v180, %v1224
    %v1254 = vmul.f32 %v181, %v1212
    %v1255 = vmul.f32 %v181, %v1216
    %v1256 = vmul.f32 %v181, %v1220
    %v1257 = vmul.f32 %v181, %v1224
    %1290 = vrot.lane.b32.xlu0 %v1226, 125
    %v1291 = vpop.permute.xlu0 %1290
    %1292 = vrot.lane.b32.xlu0 %v1227, 125
    %v1293 = vpop.permute.xlu0 %1292
    %1294 = vrot.lane.b32.xlu0 %v1228, 125
    %v1295 = vpop.permute.xlu0 %1294
    %1296 = vrot.lane.b32.xlu0 %v1229, 125
    %v1297 = vpop.permute.xlu0 %1296
    %1298 = vrot.lane.b32.xlu0 %v1230, 125
    %v1299 = vpop.permute.xlu0 %1298
    %1300 = vrot.lane.b32.xlu0 %v1231, 125
    %v1301 = vpop.permute.xlu0 %1300
    %1302 = vrot.lane.b32.xlu0 %v1232, 125
    %v1303 = vpop.permute.xlu0 %1302
    %1304 = vrot.lane.b32.xlu0 %v1233, 125
    %v1305 = vpop.permute.xlu0 %1304
    %1306 = vrot.lane.b32.xlu0 %v1234, 125
    %v1307 = vpop.permute.xlu0 %1306
    %1308 = vrot.lane.b32.xlu0 %v1235, 125
    %v1309 = vpop.permute.xlu0 %1308
    %1310 = vrot.lane.b32.xlu0 %v1236, 125
    %v1311 = vpop.permute.xlu0 %1310
    %1312 = vrot.lane.b32.xlu0 %v1237, 125
    %v1313 = vpop.permute.xlu0 %1312
    %1314 = vrot.lane.b32.xlu0 %v1238, 125
    %v1315 = vpop.permute.xlu0 %1314
    %1316 = vrot.lane.b32.xlu0 %v1239, 125
    %v1317 = vpop.permute.xlu0 %1316
    %1318 = vrot.lane.b32.xlu0 %v1240, 125
    %v1319 = vpop.permute.xlu0 %1318
    %1320 = vrot.lane.b32.xlu0 %v1241, 125
    %v1321 = vpop.permute.xlu0 %1320
    %1322 = vrot.lane.b32.xlu0 %v1242, 125
    %v1323 = vpop.permute.xlu0 %1322
    %1324 = vrot.lane.b32.xlu0 %v1243, 125
    %v1325 = vpop.permute.xlu0 %1324
    %1326 = vrot.lane.b32.xlu0 %v1244, 125
    %v1327 = vpop.permute.xlu0 %1326
    %1328 = vrot.lane.b32.xlu0 %v1245, 125
    %v1329 = vpop.permute.xlu0 %1328
    %1330 = vrot.lane.b32.xlu0 %v1246, 125
    %v1331 = vpop.permute.xlu0 %1330
    %1332 = vrot.lane.b32.xlu0 %v1247, 125
    %v1333 = vpop.permute.xlu0 %1332
    %1334 = vrot.lane.b32.xlu0 %v1248, 125
    %v1335 = vpop.permute.xlu0 %1334
    %1336 = vrot.lane.b32.xlu0 %v1249, 125
    %v1337 = vpop.permute.xlu0 %1336
    %1338 = vrot.lane.b32.xlu0 %v1250, 125
    %v1339 = vpop.permute.xlu0 %1338
    %1340 = vrot.lane.b32.xlu0 %v1251, 125
    %v1341 = vpop.permute.xlu0 %1340
    %1342 = vrot.lane.b32.xlu0 %v1252, 125
    %v1343 = vpop.permute.xlu0 %1342
    %1344 = vrot.lane.b32.xlu0 %v1253, 125
    %v1345 = vpop.permute.xlu0 %1344
    %1346 = vrot.lane.b32.xlu0 %v1254, 125
    %v1347 = vpop.permute.xlu0 %1346
    %1348 = vrot.lane.b32.xlu0 %v1255, 125
    %v1349 = vpop.permute.xlu0 %1348
    %1350 = vrot.lane.b32.xlu0 %v1256, 125
    %v1351 = vpop.permute.xlu0 %1350
    %1352 = vrot.lane.b32.xlu0 %v1257, 125
    %v1353 = vpop.permute.xlu0 %1352
    %v1386 = vadd.f32 %v1178, %v1291
    %v1387 = vadd.f32 %v1179, %v1293
    %v1388 = vadd.f32 %v1180, %v1295
    %v1389 = vadd.f32 %v1181, %v1297
    %v1390 = vadd.f32 %v1182, %v1299
    %v1391 = vadd.f32 %v1183, %v1301
    %v1392 = vadd.f32 %v1184, %v1303
    %v1393 = vadd.f32 %v1185, %v1305
    %v1394 = vadd.f32 %v1186, %v1307
    %v1395 = vadd.f32 %v1187, %v1309
    %v1396 = vadd.f32 %v1188, %v1311
    %v1397 = vadd.f32 %v1189, %v1313
    %v1398 = vadd.f32 %v1190, %v1315
    %v1399 = vadd.f32 %v1191, %v1317
    %v1400 = vadd.f32 %v1192, %v1319
    %v1401 = vadd.f32 %v1193, %v1321
    %v1402 = vadd.f32 %v1194, %v1323
    %v1403 = vadd.f32 %v1195, %v1325
    %v1404 = vadd.f32 %v1196, %v1327
    %v1405 = vadd.f32 %v1197, %v1329
    %v1406 = vadd.f32 %v1198, %v1331
    %v1407 = vadd.f32 %v1199, %v1333
    %v1408 = vadd.f32 %v1200, %v1335
    %v1409 = vadd.f32 %v1201, %v1337
    %v1410 = vadd.f32 %v1202, %v1339
    %v1411 = vadd.f32 %v1203, %v1341
    %v1412 = vadd.f32 %v1204, %v1343
    %v1413 = vadd.f32 %v1205, %v1345
    %v1414 = vadd.f32 %v1206, %v1347
    %v1415 = vadd.f32 %v1207, %v1349
    %v1416 = vadd.f32 %v1208, %v1351
    %v1417 = vadd.f32 %v1209, %v1353
    %1418 = vset.pattern.permute.xlu0 7
    %1419 = vperm.xlu0 %1418, %v27
    %v1420 = vpop.permute.xlu0 %1419
    %1422 = vset.pattern.permute.xlu0 7
    %1423 = vperm.xlu0 %1422, %v28
    %v1424 = vpop.permute.xlu0 %1423
    %1426 = vset.pattern.permute.xlu0 7
    %1427 = vperm.xlu0 %1426, %v29
    %v1428 = vpop.permute.xlu0 %1427
    %1430 = vset.pattern.permute.xlu0 7
    %1431 = vperm.xlu0 %1430, %v30
    %v1432 = vpop.permute.xlu0 %1431
    %v1434 = vmul.f32 %v282, %v1420
    %v1435 = vmul.f32 %v282, %v1424
    %v1436 = vmul.f32 %v282, %v1428
    %v1437 = vmul.f32 %v282, %v1432
    %v1438 = vmul.f32 %v283, %v1420
    %v1439 = vmul.f32 %v283, %v1424
    %v1440 = vmul.f32 %v283, %v1428
    %v1441 = vmul.f32 %v283, %v1432
    %v1442 = vmul.f32 %v284, %v1420
    %v1443 = vmul.f32 %v284, %v1424
    %v1444 = vmul.f32 %v284, %v1428
    %v1445 = vmul.f32 %v284, %v1432
    %v1446 = vmul.f32 %v285, %v1420
    %v1447 = vmul.f32 %v285, %v1424
    %v1448 = vmul.f32 %v285, %v1428
    %v1449 = vmul.f32 %v285, %v1432
    %v1450 = vmul.f32 %v286, %v1420
    %v1451 = vmul.f32 %v286, %v1424
    %v1452 = vmul.f32 %v286, %v1428
    %v1453 = vmul.f32 %v286, %v1432
    %v1454 = vmul.f32 %v287, %v1420
    %v1455 = vmul.f32 %v287, %v1424
    %v1456 = vmul.f32 %v287, %v1428
    %v1457 = vmul.f32 %v287, %v1432
    %v1458 = vmul.f32 %v288, %v1420
    %v1459 = vmul.f32 %v288, %v1424
    %v1460 = vmul.f32 %v288, %v1428
    %v1461 = vmul.f32 %v288, %v1432
    %v1462 = vmul.f32 %v289, %v1420
    %v1463 = vmul.f32 %v289, %v1424
    %v1464 = vmul.f32 %v289, %v1428
    %v1465 = vmul.f32 %v289, %v1432
    %1498 = vrot.lane.b32.xlu0 %v1434, 125
    %v1499 = vpop.permute.xlu0 %1498
    %1500 = vrot.lane.b32.xlu0 %v1435, 125
    %v1501 = vpop.permute.xlu0 %1500
    %1502 = vrot.lane.b32.xlu0 %v1436, 125
    %v1503 = vpop.permute.xlu0 %1502
    %1504 = vrot.lane.b32.xlu0 %v1437, 125
    %v1505 = vpop.permute.xlu0 %1504
    %1506 = vrot.lane.b32.xlu0 %v1438, 125
    %v1507 = vpop.permute.xlu0 %1506
    %1508 = vrot.lane.b32.xlu0 %v1439, 125
    %v1509 = vpop.permute.xlu0 %1508
    %1510 = vrot.lane.b32.xlu0 %v1440, 125
    %v1511 = vpop.permute.xlu0 %1510
    %1512 = vrot.lane.b32.xlu0 %v1441, 125
    %v1513 = vpop.permute.xlu0 %1512
    %1514 = vrot.lane.b32.xlu0 %v1442, 125
    %v1515 = vpop.permute.xlu0 %1514
    %1516 = vrot.lane.b32.xlu0 %v1443, 125
    %v1517 = vpop.permute.xlu0 %1516
    %1518 = vrot.lane.b32.xlu0 %v1444, 125
    %v1519 = vpop.permute.xlu0 %1518
    %1520 = vrot.lane.b32.xlu0 %v1445, 125
    %v1521 = vpop.permute.xlu0 %1520
    %1522 = vrot.lane.b32.xlu0 %v1446, 125
    %v1523 = vpop.permute.xlu0 %1522
    %1524 = vrot.lane.b32.xlu0 %v1447, 125
    %v1525 = vpop.permute.xlu0 %1524
    %1526 = vrot.lane.b32.xlu0 %v1448, 125
    %v1527 = vpop.permute.xlu0 %1526
    %1528 = vrot.lane.b32.xlu0 %v1449, 125
    %v1529 = vpop.permute.xlu0 %1528
    %1530 = vrot.lane.b32.xlu0 %v1450, 125
    %v1531 = vpop.permute.xlu0 %1530
    %1532 = vrot.lane.b32.xlu0 %v1451, 125
    %v1533 = vpop.permute.xlu0 %1532
    %1534 = vrot.lane.b32.xlu0 %v1452, 125
    %v1535 = vpop.permute.xlu0 %1534
    %1536 = vrot.lane.b32.xlu0 %v1453, 125
    %v1537 = vpop.permute.xlu0 %1536
    %1538 = vrot.lane.b32.xlu0 %v1454, 125
    %v1539 = vpop.permute.xlu0 %1538
    %1540 = vrot.lane.b32.xlu0 %v1455, 125
    %v1541 = vpop.permute.xlu0 %1540
    %1542 = vrot.lane.b32.xlu0 %v1456, 125
    %v1543 = vpop.permute.xlu0 %1542
    %1544 = vrot.lane.b32.xlu0 %v1457, 125
    %v1545 = vpop.permute.xlu0 %1544
    %1546 = vrot.lane.b32.xlu0 %v1458, 125
    %v1547 = vpop.permute.xlu0 %1546
    %1548 = vrot.lane.b32.xlu0 %v1459, 125
    %v1549 = vpop.permute.xlu0 %1548
    %1550 = vrot.lane.b32.xlu0 %v1460, 125
    %v1551 = vpop.permute.xlu0 %1550
    %1552 = vrot.lane.b32.xlu0 %v1461, 125
    %v1553 = vpop.permute.xlu0 %1552
    %1554 = vrot.lane.b32.xlu0 %v1462, 125
    %v1555 = vpop.permute.xlu0 %1554
    %1556 = vrot.lane.b32.xlu0 %v1463, 125
    %v1557 = vpop.permute.xlu0 %1556
    %1558 = vrot.lane.b32.xlu0 %v1464, 125
    %v1559 = vpop.permute.xlu0 %1558
    %1560 = vrot.lane.b32.xlu0 %v1465, 125
    %v1561 = vpop.permute.xlu0 %1560
    %v1594 = vadd.f32 %v1386, %v1499
    %v1595 = vadd.f32 %v1387, %v1501
    %v1596 = vadd.f32 %v1388, %v1503
    %v1597 = vadd.f32 %v1389, %v1505
    %v1598 = vadd.f32 %v1390, %v1507
    %v1599 = vadd.f32 %v1391, %v1509
    %v1600 = vadd.f32 %v1392, %v1511
    %v1601 = vadd.f32 %v1393, %v1513
    %v1602 = vadd.f32 %v1394, %v1515
    %v1603 = vadd.f32 %v1395, %v1517
    %v1604 = vadd.f32 %v1396, %v1519
    %v1605 = vadd.f32 %v1397, %v1521
    %v1606 = vadd.f32 %v1398, %v1523
    %v1607 = vadd.f32 %v1399, %v1525
    %v1608 = vadd.f32 %v1400, %v1527
    %v1609 = vadd.f32 %v1401, %v1529
    %v1610 = vadd.f32 %v1402, %v1531
    %v1611 = vadd.f32 %v1403, %v1533
    %v1612 = vadd.f32 %v1404, %v1535
    %v1613 = vadd.f32 %v1405, %v1537
    %v1614 = vadd.f32 %v1406, %v1539
    %v1615 = vadd.f32 %v1407, %v1541
    %v1616 = vadd.f32 %v1408, %v1543
    %v1617 = vadd.f32 %v1409, %v1545
    %v1618 = vadd.f32 %v1410, %v1547
    %v1619 = vadd.f32 %v1411, %v1549
    %v1620 = vadd.f32 %v1412, %v1551
    %v1621 = vadd.f32 %v1413, %v1553
    %v1622 = vadd.f32 %v1414, %v1555
    %v1623 = vadd.f32 %v1415, %v1557
    %v1624 = vadd.f32 %v1416, %v1559
    %v1625 = vadd.f32 %v1417, %v1561
    %vm1626 = vcmask 236544
    %v1627 = vsel %vm1626, %v1594, 0.0
    %1628 = vadd.xlane.f32.xlu0 %v1627
    %v1629 = vpop.xlane.xlu0 %1628
    %v1630 = vsel %vm1626, %v1595, 0.0
    %1631 = vadd.xlane.f32.xlu0 %v1630
    %v1632 = vpop.xlane.xlu0 %1631
    %v1633 = vsel %vm1626, %v1596, 0.0
    %1634 = vadd.xlane.f32.xlu0 %v1633
    %v1635 = vpop.xlane.xlu0 %1634
    %v1636 = vsel %vm1626, %v1597, 0.0
    %1637 = vadd.xlane.f32.xlu0 %v1636
    %v1638 = vpop.xlane.xlu0 %1637
    %v1639 = vsel %vm1626, %v1598, 0.0
    %1640 = vadd.xlane.f32.xlu0 %v1639
    %v1641 = vpop.xlane.xlu0 %1640
    %v1642 = vsel %vm1626, %v1599, 0.0
    %1643 = vadd.xlane.f32.xlu0 %v1642
    %v1644 = vpop.xlane.xlu0 %1643
    %v1645 = vsel %vm1626, %v1600, 0.0
    %1646 = vadd.xlane.f32.xlu0 %v1645
    %v1647 = vpop.xlane.xlu0 %1646
    %v1648 = vsel %vm1626, %v1601, 0.0
    %1649 = vadd.xlane.f32.xlu0 %v1648
    %v1650 = vpop.xlane.xlu0 %1649
    %v1651 = vsel %vm1626, %v1602, 0.0
    %1652 = vadd.xlane.f32.xlu0 %v1651
    %v1653 = vpop.xlane.xlu0 %1652
    %v1654 = vsel %vm1626, %v1603, 0.0
    %1655 = vadd.xlane.f32.xlu0 %v1654
    %v1656 = vpop.xlane.xlu0 %1655
    %v1657 = vsel %vm1626, %v1604, 0.0
    %1658 = vadd.xlane.f32.xlu0 %v1657
    %v1659 = vpop.xlane.xlu0 %1658
    %v1660 = vsel %vm1626, %v1605, 0.0
    %1661 = vadd.xlane.f32.xlu0 %v1660
    %v1662 = vpop.xlane.xlu0 %1661
    %v1663 = vsel %vm1626, %v1606, 0.0
    %1664 = vadd.xlane.f32.xlu0 %v1663
    %v1665 = vpop.xlane.xlu0 %1664
    %v1666 = vsel %vm1626, %v1607, 0.0
    %1667 = vadd.xlane.f32.xlu0 %v1666
    %v1668 = vpop.xlane.xlu0 %1667
    %v1669 = vsel %vm1626, %v1608, 0.0
    %1670 = vadd.xlane.f32.xlu0 %v1669
    %v1671 = vpop.xlane.xlu0 %1670
    %v1672 = vsel %vm1626, %v1609, 0.0
    %1673 = vadd.xlane.f32.xlu0 %v1672
    %v1674 = vpop.xlane.xlu0 %1673
    %v1675 = vsel %vm1626, %v1610, 0.0
    %1676 = vadd.xlane.f32.xlu0 %v1675
    %v1677 = vpop.xlane.xlu0 %1676
    %v1678 = vsel %vm1626, %v1611, 0.0
    %1679 = vadd.xlane.f32.xlu0 %v1678
    %v1680 = vpop.xlane.xlu0 %1679
    %v1681 = vsel %vm1626, %v1612, 0.0
    %1682 = vadd.xlane.f32.xlu0 %v1681
    %v1683 = vpop.xlane.xlu0 %1682
    %v1684 = vsel %vm1626, %v1613, 0.0
    %1685 = vadd.xlane.f32.xlu0 %v1684
    %v1686 = vpop.xlane.xlu0 %1685
    %v1687 = vsel %vm1626, %v1614, 0.0
    %1688 = vadd.xlane.f32.xlu0 %v1687
    %v1689 = vpop.xlane.xlu0 %1688
    %v1690 = vsel %vm1626, %v1615, 0.0
    %1691 = vadd.xlane.f32.xlu0 %v1690
    %v1692 = vpop.xlane.xlu0 %1691
    %v1693 = vsel %vm1626, %v1616, 0.0
    %1694 = vadd.xlane.f32.xlu0 %v1693
    %v1695 = vpop.xlane.xlu0 %1694
    %v1696 = vsel %vm1626, %v1617, 0.0
    %1697 = vadd.xlane.f32.xlu0 %v1696
    %v1698 = vpop.xlane.xlu0 %1697
    %v1699 = vsel %vm1626, %v1618, 0.0
    %1700 = vadd.xlane.f32.xlu0 %v1699
    %v1701 = vpop.xlane.xlu0 %1700
    %v1702 = vsel %vm1626, %v1619, 0.0
    %1703 = vadd.xlane.f32.xlu0 %v1702
    %v1704 = vpop.xlane.xlu0 %1703
    %v1705 = vsel %vm1626, %v1620, 0.0
    %1706 = vadd.xlane.f32.xlu0 %v1705
    %v1707 = vpop.xlane.xlu0 %1706
    %v1708 = vsel %vm1626, %v1621, 0.0
    %1709 = vadd.xlane.f32.xlu0 %v1708
    %v1710 = vpop.xlane.xlu0 %1709
    %v1711 = vsel %vm1626, %v1622, 0.0
    %1712 = vadd.xlane.f32.xlu0 %v1711
    %v1713 = vpop.xlane.xlu0 %1712
    %v1714 = vsel %vm1626, %v1623, 0.0
    %1715 = vadd.xlane.f32.xlu0 %v1714
    %v1716 = vpop.xlane.xlu0 %1715
    %v1717 = vsel %vm1626, %v1624, 0.0
    %1718 = vadd.xlane.f32.xlu0 %v1717
    %v1719 = vpop.xlane.xlu0 %1718
    %v1720 = vsel %vm1626, %v1625, 0.0
    %1721 = vadd.xlane.f32.xlu0 %v1720
    %v1722 = vpop.xlane.xlu0 %1721
    %v1723 = vrcp.pop 29.0
    %v1724 = vmul.f32 29.0, %v1723
    %v1725 = vsub.f32 1.0, %v1724
    %v1726 = vmul.f32 %v1723, %v1725
    %v1727 = vadd.f32 %v1723, %v1726
    %vm1728 = vweird.f32 %v1723
    %v1729 = vsel %vm1728, %v1723, %v1727
    %v1730 = vmul.f32 %v1629, %v1729
    %v1731 = vmul.f32 %v1632, %v1729
    %v1732 = vmul.f32 %v1635, %v1729
    %v1733 = vmul.f32 %v1638, %v1729
    %v1734 = vmul.f32 %v1641, %v1729
    %v1735 = vmul.f32 %v1644, %v1729
    %v1736 = vmul.f32 %v1647, %v1729
    %v1737 = vmul.f32 %v1650, %v1729
    %v1738 = vmul.f32 %v1653, %v1729
    %v1739 = vmul.f32 %v1656, %v1729
    %v1740 = vmul.f32 %v1659, %v1729
    %v1741 = vmul.f32 %v1662, %v1729
    %v1742 = vmul.f32 %v1665, %v1729
    %v1743 = vmul.f32 %v1668, %v1729
    %v1744 = vmul.f32 %v1671, %v1729
    %v1745 = vmul.f32 %v1674, %v1729
    %v1746 = vmul.f32 %v1677, %v1729
    %v1747 = vmul.f32 %v1680, %v1729
    %v1748 = vmul.f32 %v1683, %v1729
    %v1749 = vmul.f32 %v1686, %v1729
    %v1750 = vmul.f32 %v1689, %v1729
    %v1751 = vmul.f32 %v1692, %v1729
    %v1752 = vmul.f32 %v1695, %v1729
    %v1753 = vmul.f32 %v1698, %v1729
    %v1754 = vmul.f32 %v1701, %v1729
    %v1755 = vmul.f32 %v1704, %v1729
    %v1756 = vmul.f32 %v1707, %v1729
    %v1757 = vmul.f32 %v1710, %v1729
    %v1758 = vmul.f32 %v1713, %v1729
    %v1759 = vmul.f32 %v1716, %v1729
    %v1760 = vmul.f32 %v1719, %v1729
    %v1761 = vmul.f32 %v1722, %v1729
    %v1762 = vadd.f32 %v1730, %v1734
    %v1763 = vadd.f32 %v1762, %v1738
    %v1764 = vadd.f32 %v1763, %v1742
    %v1765 = vadd.f32 %v1764, %v1746
    %v1766 = vadd.f32 %v1765, %v1750
    %v1767 = vadd.f32 %v1766, %v1754
    %v1768 = vadd.f32 %v1767, %v1758
    %v1769 = vadd.f32 %v1731, %v1735
    %v1770 = vadd.f32 %v1769, %v1739
    %v1771 = vadd.f32 %v1770, %v1743
    %v1772 = vadd.f32 %v1771, %v1747
    %v1773 = vadd.f32 %v1772, %v1751
    %v1774 = vadd.f32 %v1773, %v1755
    %v1775 = vadd.f32 %v1774, %v1759
    %v1776 = vadd.f32 %v1732, %v1736
    %v1777 = vadd.f32 %v1776, %v1740
    %v1778 = vadd.f32 %v1777, %v1744
    %v1779 = vadd.f32 %v1778, %v1748
    %v1780 = vadd.f32 %v1779, %v1752
    %v1781 = vadd.f32 %v1780, %v1756
    %v1782 = vadd.f32 %v1781, %v1760
    %v1783 = vadd.f32 %v1733, %v1737
    %v1784 = vadd.f32 %v1783, %v1741
    %v1785 = vadd.f32 %v1784, %v1745
    %v1786 = vadd.f32 %v1785, %v1749
    %v1787 = vadd.f32 %v1786, %v1753
    %v1788 = vadd.f32 %v1787, %v1757
    %v1789 = vadd.f32 %v1788, %v1761
    %v1790 = vrcp.pop 8.0
    %v1791 = vmul.f32 8.0, %v1790
    %v1792 = vsub.f32 1.0, %v1791
    %v1793 = vmul.f32 %v1790, %v1792
    %v1794 = vadd.f32 %v1790, %v1793
    %vm1795 = vweird.f32 %v1790
    %v1796 = vsel %vm1795, %v1790, %v1794
    %v1797 = vmul.f32 %v1768, %v1796
    %v1798 = vmul.f32 %v1775, %v1796
    %v1799 = vmul.f32 %v1782, %v1796
    %v1800 = vmul.f32 %v1789, %v1796
    %v1801 = vmul.f32 %v1594, %v1594
    %v1802 = vmul.f32 %v1595, %v1595
    %v1803 = vmul.f32 %v1596, %v1596
    %v1804 = vmul.f32 %v1597, %v1597
    %v1805 = vmul.f32 %v1598, %v1598
    %v1806 = vmul.f32 %v1599, %v1599
    %v1807 = vmul.f32 %v1600, %v1600
    %v1808 = vmul.f32 %v1601, %v1601
    %v1809 = vmul.f32 %v1602, %v1602
    %v1810 = vmul.f32 %v1603, %v1603
    %v1811 = vmul.f32 %v1604, %v1604
    %v1812 = vmul.f32 %v1605, %v1605
    %v1813 = vmul.f32 %v1606, %v1606
    %v1814 = vmul.f32 %v1607, %v1607
    %v1815 = vmul.f32 %v1608, %v1608
    %v1816 = vmul.f32 %v1609, %v1609
    %v1817 = vmul.f32 %v1610, %v1610
    %v1818 = vmul.f32 %v1611, %v1611
    %v1819 = vmul.f32 %v1612, %v1612
    %v1820 = vmul.f32 %v1613, %v1613
    %v1821 = vmul.f32 %v1614, %v1614
    %v1822 = vmul.f32 %v1615, %v1615
    %v1823 = vmul.f32 %v1616, %v1616
    %v1824 = vmul.f32 %v1617, %v1617
    %v1825 = vmul.f32 %v1618, %v1618
    %v1826 = vmul.f32 %v1619, %v1619
    %v1827 = vmul.f32 %v1620, %v1620
    %v1828 = vmul.f32 %v1621, %v1621
    %v1829 = vmul.f32 %v1622, %v1622
    %v1830 = vmul.f32 %v1623, %v1623
    %v1831 = vmul.f32 %v1624, %v1624
    %v1832 = vmul.f32 %v1625, %v1625
    %v1833 = vsel %vm1626, %v1801, 0.0
    %1834 = vadd.xlane.f32.xlu0 %v1833
    %v1835 = vpop.xlane.xlu0 %1834
    %v1836 = vsel %vm1626, %v1802, 0.0
    %1837 = vadd.xlane.f32.xlu0 %v1836
    %v1838 = vpop.xlane.xlu0 %1837
    %v1839 = vsel %vm1626, %v1803, 0.0
    %1840 = vadd.xlane.f32.xlu0 %v1839
    %v1841 = vpop.xlane.xlu0 %1840
    %v1842 = vsel %vm1626, %v1804, 0.0
    %1843 = vadd.xlane.f32.xlu0 %v1842
    %v1844 = vpop.xlane.xlu0 %1843
    %v1845 = vsel %vm1626, %v1805, 0.0
    %1846 = vadd.xlane.f32.xlu0 %v1845
    %v1847 = vpop.xlane.xlu0 %1846
    %v1848 = vsel %vm1626, %v1806, 0.0
    %1849 = vadd.xlane.f32.xlu0 %v1848
    %v1850 = vpop.xlane.xlu0 %1849
    %v1851 = vsel %vm1626, %v1807, 0.0
    %1852 = vadd.xlane.f32.xlu0 %v1851
    %v1853 = vpop.xlane.xlu0 %1852
    %v1854 = vsel %vm1626, %v1808, 0.0
    %1855 = vadd.xlane.f32.xlu0 %v1854
    %v1856 = vpop.xlane.xlu0 %1855
    %v1857 = vsel %vm1626, %v1809, 0.0
    %1858 = vadd.xlane.f32.xlu0 %v1857
    %v1859 = vpop.xlane.xlu0 %1858
    %v1860 = vsel %vm1626, %v1810, 0.0
    %1861 = vadd.xlane.f32.xlu0 %v1860
    %v1862 = vpop.xlane.xlu0 %1861
    %v1863 = vsel %vm1626, %v1811, 0.0
    %1864 = vadd.xlane.f32.xlu0 %v1863
    %v1865 = vpop.xlane.xlu0 %1864
    %v1866 = vsel %vm1626, %v1812, 0.0
    %1867 = vadd.xlane.f32.xlu0 %v1866
    %v1868 = vpop.xlane.xlu0 %1867
    %v1869 = vsel %vm1626, %v1813, 0.0
    %1870 = vadd.xlane.f32.xlu0 %v1869
    %v1871 = vpop.xlane.xlu0 %1870
    %v1872 = vsel %vm1626, %v1814, 0.0
    %1873 = vadd.xlane.f32.xlu0 %v1872
    %v1874 = vpop.xlane.xlu0 %1873
    %v1875 = vsel %vm1626, %v1815, 0.0
    %1876 = vadd.xlane.f32.xlu0 %v1875
    %v1877 = vpop.xlane.xlu0 %1876
    %v1878 = vsel %vm1626, %v1816, 0.0
    %1879 = vadd.xlane.f32.xlu0 %v1878
    %v1880 = vpop.xlane.xlu0 %1879
    %v1881 = vsel %vm1626, %v1817, 0.0
    %1882 = vadd.xlane.f32.xlu0 %v1881
    %v1883 = vpop.xlane.xlu0 %1882
    %v1884 = vsel %vm1626, %v1818, 0.0
    %1885 = vadd.xlane.f32.xlu0 %v1884
    %v1886 = vpop.xlane.xlu0 %1885
    %v1887 = vsel %vm1626, %v1819, 0.0
    %1888 = vadd.xlane.f32.xlu0 %v1887
    %v1889 = vpop.xlane.xlu0 %1888
    %v1890 = vsel %vm1626, %v1820, 0.0
    %1891 = vadd.xlane.f32.xlu0 %v1890
    %v1892 = vpop.xlane.xlu0 %1891
    %v1893 = vsel %vm1626, %v1821, 0.0
    %1894 = vadd.xlane.f32.xlu0 %v1893
    %v1895 = vpop.xlane.xlu0 %1894
    %v1896 = vsel %vm1626, %v1822, 0.0
    %1897 = vadd.xlane.f32.xlu0 %v1896
    %v1898 = vpop.xlane.xlu0 %1897
    %v1899 = vsel %vm1626, %v1823, 0.0
    %1900 = vadd.xlane.f32.xlu0 %v1899
    %v1901 = vpop.xlane.xlu0 %1900
    %v1902 = vsel %vm1626, %v1824, 0.0
    %1903 = vadd.xlane.f32.xlu0 %v1902
    %v1904 = vpop.xlane.xlu0 %1903
    %v1905 = vsel %vm1626, %v1825, 0.0
    %1906 = vadd.xlane.f32.xlu0 %v1905
    %v1907 = vpop.xlane.xlu0 %1906
    %v1908 = vsel %vm1626, %v1826, 0.0
    %1909 = vadd.xlane.f32.xlu0 %v1908
    %v1910 = vpop.xlane.xlu0 %1909
    %v1911 = vsel %vm1626, %v1827, 0.0
    %1912 = vadd.xlane.f32.xlu0 %v1911
    %v1913 = vpop.xlane.xlu0 %1912
    %v1914 = vsel %vm1626, %v1828, 0.0
    %1915 = vadd.xlane.f32.xlu0 %v1914
    %v1916 = vpop.xlane.xlu0 %1915
    %v1917 = vsel %vm1626, %v1829, 0.0
    %1918 = vadd.xlane.f32.xlu0 %v1917
    %v1919 = vpop.xlane.xlu0 %1918
    %v1920 = vsel %vm1626, %v1830, 0.0
    %1921 = vadd.xlane.f32.xlu0 %v1920
    %v1922 = vpop.xlane.xlu0 %1921
    %v1923 = vsel %vm1626, %v1831, 0.0
    %1924 = vadd.xlane.f32.xlu0 %v1923
    %v1925 = vpop.xlane.xlu0 %1924
    %v1926 = vsel %vm1626, %v1832, 0.0
    %1927 = vadd.xlane.f32.xlu0 %v1926
    %v1928 = vpop.xlane.xlu0 %1927
    %v1929 = vmul.f32 %v1835, %v1729
    %v1930 = vmul.f32 %v1838, %v1729
    %v1931 = vmul.f32 %v1841, %v1729
    %v1932 = vmul.f32 %v1844, %v1729
    %v1933 = vmul.f32 %v1847, %v1729
    %v1934 = vmul.f32 %v1850, %v1729
    %v1935 = vmul.f32 %v1853, %v1729
    %v1936 = vmul.f32 %v1856, %v1729
    %v1937 = vmul.f32 %v1859, %v1729
    %v1938 = vmul.f32 %v1862, %v1729
    %v1939 = vmul.f32 %v1865, %v1729
    %v1940 = vmul.f32 %v1868, %v1729
    %v1941 = vmul.f32 %v1871, %v1729
    %v1942 = vmul.f32 %v1874, %v1729
    %v1943 = vmul.f32 %v1877, %v1729
    %v1944 = vmul.f32 %v1880, %v1729
    %v1945 = vmul.f32 %v1883, %v1729
    %v1946 = vmul.f32 %v1886, %v1729
    %v1947 = vmul.f32 %v1889, %v1729
    %v1948 = vmul.f32 %v1892, %v1729
    %v1949 = vmul.f32 %v1895, %v1729
    %v1950 = vmul.f32 %v1898, %v1729
    %v1951 = vmul.f32 %v1901, %v1729
    %v1952 = vmul.f32 %v1904, %v1729
    %v1953 = vmul.f32 %v1907, %v1729
    %v1954 = vmul.f32 %v1910, %v1729
    %v1955 = vmul.f32 %v1913, %v1729
    %v1956 = vmul.f32 %v1916, %v1729
    %v1957 = vmul.f32 %v1919, %v1729
    %v1958 = vmul.f32 %v1922, %v1729
    %v1959 = vmul.f32 %v1925, %v1729
    %v1960 = vmul.f32 %v1928, %v1729
    %v1961 = vadd.f32 %v1929, %v1933
    %v1962 = vadd.f32 %v1961, %v1937
    %v1963 = vadd.f32 %v1962, %v1941
    %v1964 = vadd.f32 %v1963, %v1945
    %v1965 = vadd.f32 %v1964, %v1949
    %v1966 = vadd.f32 %v1965, %v1953
    %v1967 = vadd.f32 %v1966, %v1957
    %v1968 = vadd.f32 %v1930, %v1934
    %v1969 = vadd.f32 %v1968, %v1938
    %v1970 = vadd.f32 %v1969, %v1942
    %v1971 = vadd.f32 %v1970, %v1946
    %v1972 = vadd.f32 %v1971, %v1950
    %v1973 = vadd.f32 %v1972, %v1954
    %v1974 = vadd.f32 %v1973, %v1958
    %v1975 = vadd.f32 %v1931, %v1935
    %v1976 = vadd.f32 %v1975, %v1939
    %v1977 = vadd.f32 %v1976, %v1943
    %v1978 = vadd.f32 %v1977, %v1947
    %v1979 = vadd.f32 %v1978, %v1951
    %v1980 = vadd.f32 %v1979, %v1955
    %v1981 = vadd.f32 %v1980, %v1959
    %v1982 = vadd.f32 %v1932, %v1936
    %v1983 = vadd.f32 %v1982, %v1940
    %v1984 = vadd.f32 %v1983, %v1944
    %v1985 = vadd.f32 %v1984, %v1948
    %v1986 = vadd.f32 %v1985, %v1952
    %v1987 = vadd.f32 %v1986, %v1956
    %v1988 = vadd.f32 %v1987, %v1960
    %v1989 = vmul.f32 %v1967, %v1796
    %v1990 = vmul.f32 %v1974, %v1796
    %v1991 = vmul.f32 %v1981, %v1796
    %v1992 = vmul.f32 %v1988, %v1796
    %v1993 = vsub.f32 %v1594, %v1797
    %v1994 = vsub.f32 %v1595, %v1798
    %v1995 = vsub.f32 %v1596, %v1799
    %v1996 = vsub.f32 %v1597, %v1800
    %v1997 = vsub.f32 %v1598, %v1797
    %v1998 = vsub.f32 %v1599, %v1798
    %v1999 = vsub.f32 %v1600, %v1799
    %v2000 = vsub.f32 %v1601, %v1800
    %v2001 = vsub.f32 %v1602, %v1797
    %v2002 = vsub.f32 %v1603, %v1798
    %v2003 = vsub.f32 %v1604, %v1799
    %v2004 = vsub.f32 %v1605, %v1800
    %v2005 = vsub.f32 %v1606, %v1797
    %v2006 = vsub.f32 %v1607, %v1798
    %v2007 = vsub.f32 %v1608, %v1799
    %v2008 = vsub.f32 %v1609, %v1800
    %v2009 = vsub.f32 %v1610, %v1797
    %v2010 = vsub.f32 %v1611, %v1798
    %v2011 = vsub.f32 %v1612, %v1799
    %v2012 = vsub.f32 %v1613, %v1800
    %v2013 = vsub.f32 %v1614, %v1797
    %v2014 = vsub.f32 %v1615, %v1798
    %v2015 = vsub.f32 %v1616, %v1799
    %v2016 = vsub.f32 %v1617, %v1800
    %v2017 = vsub.f32 %v1618, %v1797
    %v2018 = vsub.f32 %v1619, %v1798
    %v2019 = vsub.f32 %v1620, %v1799
    %v2020 = vsub.f32 %v1621, %v1800
    %v2021 = vsub.f32 %v1622, %v1797
    %v2022 = vsub.f32 %v1623, %v1798
    %v2023 = vsub.f32 %v1624, %v1799
    %v2024 = vsub.f32 %v1625, %v1800
    %v2025 = vmul.f32 %v1797, %v1797
    %v2026 = vmul.f32 %v1798, %v1798
    %v2027 = vmul.f32 %v1799, %v1799
    %v2028 = vmul.f32 %v1800, %v1800
    %v2029 = vsub.f32 %v1989, %v2025
    %v2030 = vsub.f32 %v1990, %v2026
    %v2031 = vsub.f32 %v1991, %v2027
    %v2032 = vsub.f32 %v1992, %v2028
    %v2033 = vadd.f32 %v2029, 1e-05
    %v2034 = vadd.f32 %v2030, 1e-05
    %v2035 = vadd.f32 %v2031, 1e-05
    %v2036 = vadd.f32 %v2032, 1e-05
    %v2037 = vrsqrt.pop %v2033
    %v2038 = vmul.f32 %v2037, %v2033
    %v2039 = vmul.f32 %v2038, %v2037
    %v2040 = vmul.f32 0.5, %v2039
    %v2041 = vsub.f32 1.5, %v2040
    %v2042 = vmul.f32 %v2037, %v2041
    %vm2043 = vweird.f32 %v2033
    %vm2044 = vweird.f32 %v2037
    %vm2045 = vmor %vm2043, %vm2044
    %v2046 = vsel %vm2045, %v2037, %v2042
    %v2047 = vrsqrt.pop %v2034
    %v2048 = vmul.f32 %v2047, %v2034
    %v2049 = vmul.f32 %v2048, %v2047
    %v2050 = vmul.f32 0.5, %v2049
    %v2051 = vsub.f32 1.5, %v2050
    %v2052 = vmul.f32 %v2047, %v2051
    %vm2053 = vweird.f32 %v2034
    %vm2054 = vweird.f32 %v2047
    %vm2055 = vmor %vm2053, %vm2054
    %v2056 = vsel %vm2055, %v2047, %v2052
    %v2057 = vrsqrt.pop %v2035
    %v2058 = vmul.f32 %v2057, %v2035
    %v2059 = vmul.f32 %v2058, %v2057
    %v2060 = vmul.f32 0.5, %v2059
    %v2061 = vsub.f32 1.5, %v2060
    %v2062 = vmul.f32 %v2057, %v2061
    %vm2063 = vweird.f32 %v2035
    %vm2064 = vweird.f32 %v2057
    %vm2065 = vmor %vm2063, %vm2064
    %v2066 = vsel %vm2065, %v2057, %v2062
    %v2067 = vrsqrt.pop %v2036
    %v2068 = vmul.f32 %v2067, %v2036
    %v2069 = vmul.f32 %v2068, %v2067
    %v2070 = vmul.f32 0.5, %v2069
    %v2071 = vsub.f32 1.5, %v2070
    %v2072 = vmul.f32 %v2067, %v2071
    %vm2073 = vweird.f32 %v2036
    %vm2074 = vweird.f32 %v2067
    %vm2075 = vmor %vm2073, %vm2074
    %v2076 = vsel %vm2075, %v2067, %v2072
    %v2077 = vmul.f32 %v1993, %v2046
    %v2078 = vmul.f32 %v1994, %v2056
    %v2079 = vmul.f32 %v1995, %v2066
    %v2080 = vmul.f32 %v1996, %v2076
    %v2081 = vmul.f32 %v1997, %v2046
    %v2082 = vmul.f32 %v1998, %v2056
    %v2083 = vmul.f32 %v1999, %v2066
    %v2084 = vmul.f32 %v2000, %v2076
    %v2085 = vmul.f32 %v2001, %v2046
    %v2086 = vmul.f32 %v2002, %v2056
    %v2087 = vmul.f32 %v2003, %v2066
    %v2088 = vmul.f32 %v2004, %v2076
    %v2089 = vmul.f32 %v2005, %v2046
    %v2090 = vmul.f32 %v2006, %v2056
    %v2091 = vmul.f32 %v2007, %v2066
    %v2092 = vmul.f32 %v2008, %v2076
    %v2093 = vmul.f32 %v2009, %v2046
    %v2094 = vmul.f32 %v2010, %v2056
    %v2095 = vmul.f32 %v2011, %v2066
    %v2096 = vmul.f32 %v2012, %v2076
    %v2097 = vmul.f32 %v2013, %v2046
    %v2098 = vmul.f32 %v2014, %v2056
    %v2099 = vmul.f32 %v2015, %v2066
    %v2100 = vmul.f32 %v2016, %v2076
    %v2101 = vmul.f32 %v2017, %v2046
    %v2102 = vmul.f32 %v2018, %v2056
    %v2103 = vmul.f32 %v2019, %v2066
    %v2104 = vmul.f32 %v2020, %v2076
    %v2105 = vmul.f32 %v2021, %v2046
    %v2106 = vmul.f32 %v2022, %v2056
    %v2107 = vmul.f32 %v2023, %v2066
    %v2108 = vmul.f32 %v2024, %v2076
    %2109 = vset.pattern.permute.xlu0 8
    %2110 = vperm.xlu0 %2109, %v27
    %v2111 = vpop.permute.xlu0 %2110
    %2113 = vset.pattern.permute.xlu0 8
    %2114 = vperm.xlu0 %2113, %v28
    %v2115 = vpop.permute.xlu0 %2114
    %2117 = vset.pattern.permute.xlu0 8
    %2118 = vperm.xlu0 %2117, %v29
    %v2119 = vpop.permute.xlu0 %2118
    %2121 = vset.pattern.permute.xlu0 8
    %2122 = vperm.xlu0 %2121, %v30
    %v2123 = vpop.permute.xlu0 %2122
    %v2125 = vmul.f32 %v2077, %v2111
    %v2126 = vmul.f32 %v2078, %v2115
    %v2127 = vmul.f32 %v2079, %v2119
    %v2128 = vmul.f32 %v2080, %v2123
    %v2129 = vmul.f32 %v2081, %v2111
    %v2130 = vmul.f32 %v2082, %v2115
    %v2131 = vmul.f32 %v2083, %v2119
    %v2132 = vmul.f32 %v2084, %v2123
    %v2133 = vmul.f32 %v2085, %v2111
    %v2134 = vmul.f32 %v2086, %v2115
    %v2135 = vmul.f32 %v2087, %v2119
    %v2136 = vmul.f32 %v2088, %v2123
    %v2137 = vmul.f32 %v2089, %v2111
    %v2138 = vmul.f32 %v2090, %v2115
    %v2139 = vmul.f32 %v2091, %v2119
    %v2140 = vmul.f32 %v2092, %v2123
    %v2141 = vmul.f32 %v2093, %v2111
    %v2142 = vmul.f32 %v2094, %v2115
    %v2143 = vmul.f32 %v2095, %v2119
    %v2144 = vmul.f32 %v2096, %v2123
    %v2145 = vmul.f32 %v2097, %v2111
    %v2146 = vmul.f32 %v2098, %v2115
    %v2147 = vmul.f32 %v2099, %v2119
    %v2148 = vmul.f32 %v2100, %v2123
    %v2149 = vmul.f32 %v2101, %v2111
    %v2150 = vmul.f32 %v2102, %v2115
    %v2151 = vmul.f32 %v2103, %v2119
    %v2152 = vmul.f32 %v2104, %v2123
    %v2153 = vmul.f32 %v2105, %v2111
    %v2154 = vmul.f32 %v2106, %v2115
    %v2155 = vmul.f32 %v2107, %v2119
    %v2156 = vmul.f32 %v2108, %v2123
    %2157 = vset.pattern.permute.xlu0 9
    %2158 = vperm.xlu0 %2157, %v27
    %v2159 = vpop.permute.xlu0 %2158
    %2161 = vset.pattern.permute.xlu0 9
    %2162 = vperm.xlu0 %2161, %v28
    %v2163 = vpop.permute.xlu0 %2162
    %2165 = vset.pattern.permute.xlu0 9
    %2166 = vperm.xlu0 %2165, %v29
    %v2167 = vpop.permute.xlu0 %2166
    %2169 = vset.pattern.permute.xlu0 9
    %2170 = vperm.xlu0 %2169, %v30
    %v2171 = vpop.permute.xlu0 %2170
    %v2173 = vadd.f32 %v2125, %v2159
    %v2174 = vadd.f32 %v2126, %v2163
    %v2175 = vadd.f32 %v2127, %v2167
    %v2176 = vadd.f32 %v2128, %v2171
    %v2177 = vadd.f32 %v2129, %v2159
    %v2178 = vadd.f32 %v2130, %v2163
    %v2179 = vadd.f32 %v2131, %v2167
    %v2180 = vadd.f32 %v2132, %v2171
    %v2181 = vadd.f32 %v2133, %v2159
    %v2182 = vadd.f32 %v2134, %v2163
    %v2183 = vadd.f32 %v2135, %v2167
    %v2184 = vadd.f32 %v2136, %v2171
    %v2185 = vadd.f32 %v2137, %v2159
    %v2186 = vadd.f32 %v2138, %v2163
    %v2187 = vadd.f32 %v2139, %v2167
    %v2188 = vadd.f32 %v2140, %v2171
    %v2189 = vadd.f32 %v2141, %v2159
    %v2190 = vadd.f32 %v2142, %v2163
    %v2191 = vadd.f32 %v2143, %v2167
    %v2192 = vadd.f32 %v2144, %v2171
    %v2193 = vadd.f32 %v2145, %v2159
    %v2194 = vadd.f32 %v2146, %v2163
    %v2195 = vadd.f32 %v2147, %v2167
    %v2196 = vadd.f32 %v2148, %v2171
    %v2197 = vadd.f32 %v2149, %v2159
    %v2198 = vadd.f32 %v2150, %v2163
    %v2199 = vadd.f32 %v2151, %v2167
    %v2200 = vadd.f32 %v2152, %v2171
    %v2201 = vadd.f32 %v2153, %v2159
    %v2202 = vadd.f32 %v2154, %v2163
    %v2203 = vadd.f32 %v2155, %v2167
    %v2204 = vadd.f32 %v2156, %v2171
    %v2205 = vpack.c.bf16 %v2173, %v2173
    %v2206 = vpack.c.bf16 %v2174, %v2174
    %v2207 = vpack.c.bf16 %v2175, %v2175
    %v2208 = vpack.c.bf16 %v2176, %v2176
    %v2209 = vpack.c.bf16 %v2177, %v2177
    %v2210 = vpack.c.bf16 %v2178, %v2178
    %v2211 = vpack.c.bf16 %v2179, %v2179
    %v2212 = vpack.c.bf16 %v2180, %v2180
    %v2213 = vpack.c.bf16 %v2181, %v2181
    %v2214 = vpack.c.bf16 %v2182, %v2182
    %v2215 = vpack.c.bf16 %v2183, %v2183
    %v2216 = vpack.c.bf16 %v2184, %v2184
    %v2217 = vpack.c.bf16 %v2185, %v2185
    %v2218 = vpack.c.bf16 %v2186, %v2186
    %v2219 = vpack.c.bf16 %v2187, %v2187
    %v2220 = vpack.c.bf16 %v2188, %v2188
    %v2221 = vpack.c.bf16 %v2189, %v2189
    %v2222 = vpack.c.bf16 %v2190, %v2190
    %v2223 = vpack.c.bf16 %v2191, %v2191
    %v2224 = vpack.c.bf16 %v2192, %v2192
    %v2225 = vpack.c.bf16 %v2193, %v2193
    %v2226 = vpack.c.bf16 %v2194, %v2194
    %v2227 = vpack.c.bf16 %v2195, %v2195
    %v2228 = vpack.c.bf16 %v2196, %v2196
    %v2229 = vpack.c.bf16 %v2197, %v2197
    %v2230 = vpack.c.bf16 %v2198, %v2198
    %v2231 = vpack.c.bf16 %v2199, %v2199
    %v2232 = vpack.c.bf16 %v2200, %v2200
    %v2233 = vpack.c.bf16 %v2201, %v2201
    %v2234 = vpack.c.bf16 %v2202, %v2202
    %v2235 = vpack.c.bf16 %v2203, %v2203
    %v2236 = vpack.c.bf16 %v2204, %v2204
    %v2269 = vunpack.c.l.b16 %v2205
    %v2270 = vunpack.c.l.b16 %v2206
    %v2271 = vunpack.c.l.b16 %v2207
    %v2272 = vunpack.c.l.b16 %v2208
    %v2273 = vunpack.c.l.b16 %v2209
    %v2274 = vunpack.c.l.b16 %v2210
    %v2275 = vunpack.c.l.b16 %v2211
    %v2276 = vunpack.c.l.b16 %v2212
    %v2277 = vunpack.c.l.b16 %v2213
    %v2278 = vunpack.c.l.b16 %v2214
    %v2279 = vunpack.c.l.b16 %v2215
    %v2280 = vunpack.c.l.b16 %v2216
    %v2281 = vunpack.c.l.b16 %v2217
    %v2282 = vunpack.c.l.b16 %v2218
    %v2283 = vunpack.c.l.b16 %v2219
    %v2284 = vunpack.c.l.b16 %v2220
    %v2285 = vunpack.c.l.b16 %v2221
    %v2286 = vunpack.c.l.b16 %v2222
    %v2287 = vunpack.c.l.b16 %v2223
    %v2288 = vunpack.c.l.b16 %v2224
    %v2289 = vunpack.c.l.b16 %v2225
    %v2290 = vunpack.c.l.b16 %v2226
    %v2291 = vunpack.c.l.b16 %v2227
    %v2292 = vunpack.c.l.b16 %v2228
    %v2293 = vunpack.c.l.b16 %v2229
    %v2294 = vunpack.c.l.b16 %v2230
    %v2295 = vunpack.c.l.b16 %v2231
    %v2296 = vunpack.c.l.b16 %v2232
    %v2297 = vunpack.c.l.b16 %v2233
    %v2298 = vunpack.c.l.b16 %v2234
    %v2299 = vunpack.c.l.b16 %v2235
    %v2300 = vunpack.c.l.b16 %v2236
    %v2301 = vpack.c.b16 %v2270, %v2269
    %v2302 = vpack.c.b16 %v2272, %v2271
    %v2303 = vpack.c.b16 %v2274, %v2273
    %v2304 = vpack.c.b16 %v2276, %v2275
    %v2305 = vpack.c.b16 %v2278, %v2277
    %v2306 = vpack.c.b16 %v2280, %v2279
    %v2307 = vpack.c.b16 %v2282, %v2281
    %v2308 = vpack.c.b16 %v2284, %v2283
    %v2309 = vpack.c.b16 %v2286, %v2285
    %v2310 = vpack.c.b16 %v2288, %v2287
    %v2311 = vpack.c.b16 %v2290, %v2289
    %v2312 = vpack.c.b16 %v2292, %v2291
    %v2313 = vpack.c.b16 %v2294, %v2293
    %v2314 = vpack.c.b16 %v2296, %v2295
    %v2315 = vpack.c.b16 %v2298, %v2297
    %v2316 = vpack.c.b16 %v2300, %v2299
    %2333 = vrot.lane.b32.xlu0 %v2301, 127
    %v2334 = vpop.permute.xlu0 %2333
    %2335 = vrot.lane.b32.xlu0 %v2302, 127
    %v2336 = vpop.permute.xlu0 %2335
    %2337 = vrot.lane.b32.xlu0 %v2303, 127
    %v2338 = vpop.permute.xlu0 %2337
    %2339 = vrot.lane.b32.xlu0 %v2304, 127
    %v2340 = vpop.permute.xlu0 %2339
    %2341 = vrot.lane.b32.xlu0 %v2305, 127
    %v2342 = vpop.permute.xlu0 %2341
    %2343 = vrot.lane.b32.xlu0 %v2306, 127
    %v2344 = vpop.permute.xlu0 %2343
    %2345 = vrot.lane.b32.xlu0 %v2307, 127
    %v2346 = vpop.permute.xlu0 %2345
    %2347 = vrot.lane.b32.xlu0 %v2308, 127
    %v2348 = vpop.permute.xlu0 %2347
    %2349 = vrot.lane.b32.xlu0 %v2309, 127
    %v2350 = vpop.permute.xlu0 %2349
    %2351 = vrot.lane.b32.xlu0 %v2310, 127
    %v2352 = vpop.permute.xlu0 %2351
    %2353 = vrot.lane.b32.xlu0 %v2311, 127
    %v2354 = vpop.permute.xlu0 %2353
    %2355 = vrot.lane.b32.xlu0 %v2312, 127
    %v2356 = vpop.permute.xlu0 %2355
    %2357 = vrot.lane.b32.xlu0 %v2313, 127
    %v2358 = vpop.permute.xlu0 %2357
    %2359 = vrot.lane.b32.xlu0 %v2314, 127
    %v2360 = vpop.permute.xlu0 %2359
    %2361 = vrot.lane.b32.xlu0 %v2315, 127
    %v2362 = vpop.permute.xlu0 %2361
    %2363 = vrot.lane.b32.xlu0 %v2316, 127
    %v2364 = vpop.permute.xlu0 %2363
    %2381 = vrot.lane.b32.xlu0 %v2301, 126
    %v2382 = vpop.permute.xlu0 %2381
    %2383 = vrot.lane.b32.xlu0 %v2302, 126
    %v2384 = vpop.permute.xlu0 %2383
    %2385 = vrot.lane.b32.xlu0 %v2303, 126
    %v2386 = vpop.permute.xlu0 %2385
    %2387 = vrot.lane.b32.xlu0 %v2304, 126
    %v2388 = vpop.permute.xlu0 %2387
    %2389 = vrot.lane.b32.xlu0 %v2305, 126
    %v2390 = vpop.permute.xlu0 %2389
    %2391 = vrot.lane.b32.xlu0 %v2306, 126
    %v2392 = vpop.permute.xlu0 %2391
    %2393 = vrot.lane.b32.xlu0 %v2307, 126
    %v2394 = vpop.permute.xlu0 %2393
    %2395 = vrot.lane.b32.xlu0 %v2308, 126
    %v2396 = vpop.permute.xlu0 %2395
    %2397 = vrot.lane.b32.xlu0 %v2309, 126
    %v2398 = vpop.permute.xlu0 %2397
    %2399 = vrot.lane.b32.xlu0 %v2310, 126
    %v2400 = vpop.permute.xlu0 %2399
    %2401 = vrot.lane.b32.xlu0 %v2311, 126
    %v2402 = vpop.permute.xlu0 %2401
    %2403 = vrot.lane.b32.xlu0 %v2312, 126
    %v2404 = vpop.permute.xlu0 %2403
    %2405 = vrot.lane.b32.xlu0 %v2313, 126
    %v2406 = vpop.permute.xlu0 %2405
    %2407 = vrot.lane.b32.xlu0 %v2314, 126
    %v2408 = vpop.permute.xlu0 %2407
    %2409 = vrot.lane.b32.xlu0 %v2315, 126
    %v2410 = vpop.permute.xlu0 %2409
    %2411 = vrot.lane.b32.xlu0 %v2316, 126
    %v2412 = vpop.permute.xlu0 %2411
    %2429 = vrot.lane.b32.xlu0 %v2301, 125
    %v2430 = vpop.permute.xlu0 %2429
    %2431 = vrot.lane.b32.xlu0 %v2302, 125
    %v2432 = vpop.permute.xlu0 %2431
    %2433 = vrot.lane.b32.xlu0 %v2303, 125
    %v2434 = vpop.permute.xlu0 %2433
    %2435 = vrot.lane.b32.xlu0 %v2304, 125
    %v2436 = vpop.permute.xlu0 %2435
    %2437 = vrot.lane.b32.xlu0 %v2305, 125
    %v2438 = vpop.permute.xlu0 %2437
    %2439 = vrot.lane.b32.xlu0 %v2306, 125
    %v2440 = vpop.permute.xlu0 %2439
    %2441 = vrot.lane.b32.xlu0 %v2307, 125
    %v2442 = vpop.permute.xlu0 %2441
    %2443 = vrot.lane.b32.xlu0 %v2308, 125
    %v2444 = vpop.permute.xlu0 %2443
    %2445 = vrot.lane.b32.xlu0 %v2309, 125
    %v2446 = vpop.permute.xlu0 %2445
    %2447 = vrot.lane.b32.xlu0 %v2310, 125
    %v2448 = vpop.permute.xlu0 %2447
    %2449 = vrot.lane.b32.xlu0 %v2311, 125
    %v2450 = vpop.permute.xlu0 %2449
    %2451 = vrot.lane.b32.xlu0 %v2312, 125
    %v2452 = vpop.permute.xlu0 %2451
    %2453 = vrot.lane.b32.xlu0 %v2313, 125
    %v2454 = vpop.permute.xlu0 %2453
    %2455 = vrot.lane.b32.xlu0 %v2314, 125
    %v2456 = vpop.permute.xlu0 %2455
    %2457 = vrot.lane.b32.xlu0 %v2315, 125
    %v2458 = vpop.permute.xlu0 %2457
    %2459 = vrot.lane.b32.xlu0 %v2316, 125
    %v2460 = vpop.permute.xlu0 %2459
    %2477 = vrot.lane.b32.xlu0 %v2301, 124
    %v2478 = vpop.permute.xlu0 %2477
    %2479 = vrot.lane.b32.xlu0 %v2302, 124
    %v2480 = vpop.permute.xlu0 %2479
    %2481 = vrot.lane.b32.xlu0 %v2303, 124
    %v2482 = vpop.permute.xlu0 %2481
    %2483 = vrot.lane.b32.xlu0 %v2304, 124
    %v2484 = vpop.permute.xlu0 %2483
    %2485 = vrot.lane.b32.xlu0 %v2305, 124
    %v2486 = vpop.permute.xlu0 %2485
    %2487 = vrot.lane.b32.xlu0 %v2306, 124
    %v2488 = vpop.permute.xlu0 %2487
    %2489 = vrot.lane.b32.xlu0 %v2307, 124
    %v2490 = vpop.permute.xlu0 %2489
    %2491 = vrot.lane.b32.xlu0 %v2308, 124
    %v2492 = vpop.permute.xlu0 %2491
    %2493 = vrot.lane.b32.xlu0 %v2309, 124
    %v2494 = vpop.permute.xlu0 %2493
    %2495 = vrot.lane.b32.xlu0 %v2310, 124
    %v2496 = vpop.permute.xlu0 %2495
    %2497 = vrot.lane.b32.xlu0 %v2311, 124
    %v2498 = vpop.permute.xlu0 %2497
    %2499 = vrot.lane.b32.xlu0 %v2312, 124
    %v2500 = vpop.permute.xlu0 %2499
    %2501 = vrot.lane.b32.xlu0 %v2313, 124
    %v2502 = vpop.permute.xlu0 %2501
    %2503 = vrot.lane.b32.xlu0 %v2314, 124
    %v2504 = vpop.permute.xlu0 %2503
    %2505 = vrot.lane.b32.xlu0 %v2315, 124
    %v2506 = vpop.permute.xlu0 %2505
    %2507 = vrot.lane.b32.xlu0 %v2316, 124
    %v2508 = vpop.permute.xlu0 %2507
    %2525 = vrot.lane.b32.xlu0 %v2301, 123
    %v2526 = vpop.permute.xlu0 %2525
    %2527 = vrot.lane.b32.xlu0 %v2302, 123
    %v2528 = vpop.permute.xlu0 %2527
    %2529 = vrot.lane.b32.xlu0 %v2303, 123
    %v2530 = vpop.permute.xlu0 %2529
    %2531 = vrot.lane.b32.xlu0 %v2304, 123
    %v2532 = vpop.permute.xlu0 %2531
    %2533 = vrot.lane.b32.xlu0 %v2305, 123
    %v2534 = vpop.permute.xlu0 %2533
    %2535 = vrot.lane.b32.xlu0 %v2306, 123
    %v2536 = vpop.permute.xlu0 %2535
    %2537 = vrot.lane.b32.xlu0 %v2307, 123
    %v2538 = vpop.permute.xlu0 %2537
    %2539 = vrot.lane.b32.xlu0 %v2308, 123
    %v2540 = vpop.permute.xlu0 %2539
    %2541 = vrot.lane.b32.xlu0 %v2309, 123
    %v2542 = vpop.permute.xlu0 %2541
    %2543 = vrot.lane.b32.xlu0 %v2310, 123
    %v2544 = vpop.permute.xlu0 %2543
    %2545 = vrot.lane.b32.xlu0 %v2311, 123
    %v2546 = vpop.permute.xlu0 %2545
    %2547 = vrot.lane.b32.xlu0 %v2312, 123
    %v2548 = vpop.permute.xlu0 %2547
    %2549 = vrot.lane.b32.xlu0 %v2313, 123
    %v2550 = vpop.permute.xlu0 %2549
    %2551 = vrot.lane.b32.xlu0 %v2314, 123
    %v2552 = vpop.permute.xlu0 %2551
    %2553 = vrot.lane.b32.xlu0 %v2315, 123
    %v2554 = vpop.permute.xlu0 %2553
    %2555 = vrot.lane.b32.xlu0 %v2316, 123
    %v2556 = vpop.permute.xlu0 %2555
    %2573 = vrot.lane.b32.xlu0 %v2301, 122
    %v2574 = vpop.permute.xlu0 %2573
    %2575 = vrot.lane.b32.xlu0 %v2302, 122
    %v2576 = vpop.permute.xlu0 %2575
    %2577 = vrot.lane.b32.xlu0 %v2303, 122
    %v2578 = vpop.permute.xlu0 %2577
    %2579 = vrot.lane.b32.xlu0 %v2304, 122
    %v2580 = vpop.permute.xlu0 %2579
    %2581 = vrot.lane.b32.xlu0 %v2305, 122
    %v2582 = vpop.permute.xlu0 %2581
    %2583 = vrot.lane.b32.xlu0 %v2306, 122
    %v2584 = vpop.permute.xlu0 %2583
    %2585 = vrot.lane.b32.xlu0 %v2307, 122
    %v2586 = vpop.permute.xlu0 %2585
    %2587 = vrot.lane.b32.xlu0 %v2308, 122
    %v2588 = vpop.permute.xlu0 %2587
    %2589 = vrot.lane.b32.xlu0 %v2309, 122
    %v2590 = vpop.permute.xlu0 %2589
    %2591 = vrot.lane.b32.xlu0 %v2310, 122
    %v2592 = vpop.permute.xlu0 %2591
    %2593 = vrot.lane.b32.xlu0 %v2311, 122
    %v2594 = vpop.permute.xlu0 %2593
    %2595 = vrot.lane.b32.xlu0 %v2312, 122
    %v2596 = vpop.permute.xlu0 %2595
    %2597 = vrot.lane.b32.xlu0 %v2313, 122
    %v2598 = vpop.permute.xlu0 %2597
    %2599 = vrot.lane.b32.xlu0 %v2314, 122
    %v2600 = vpop.permute.xlu0 %2599
    %2601 = vrot.lane.b32.xlu0 %v2315, 122
    %v2602 = vpop.permute.xlu0 %2601
    %2603 = vrot.lane.b32.xlu0 %v2316, 122
    %v2604 = vpop.permute.xlu0 %2603
    %2621 = vrot.lane.b32.xlu0 %v2301, 121
    %v2622 = vpop.permute.xlu0 %2621
    %2623 = vrot.lane.b32.xlu0 %v2302, 121
    %v2624 = vpop.permute.xlu0 %2623
    %2625 = vrot.lane.b32.xlu0 %v2303, 121
    %v2626 = vpop.permute.xlu0 %2625
    %2627 = vrot.lane.b32.xlu0 %v2304, 121
    %v2628 = vpop.permute.xlu0 %2627
    %2629 = vrot.lane.b32.xlu0 %v2305, 121
    %v2630 = vpop.permute.xlu0 %2629
    %2631 = vrot.lane.b32.xlu0 %v2306, 121
    %v2632 = vpop.permute.xlu0 %2631
    %2633 = vrot.lane.b32.xlu0 %v2307, 121
    %v2634 = vpop.permute.xlu0 %2633
    %2635 = vrot.lane.b32.xlu0 %v2308, 121
    %v2636 = vpop.permute.xlu0 %2635
    %2637 = vrot.lane.b32.xlu0 %v2309, 121
    %v2638 = vpop.permute.xlu0 %2637
    %2639 = vrot.lane.b32.xlu0 %v2310, 121
    %v2640 = vpop.permute.xlu0 %2639
    %2641 = vrot.lane.b32.xlu0 %v2311, 121
    %v2642 = vpop.permute.xlu0 %2641
    %2643 = vrot.lane.b32.xlu0 %v2312, 121
    %v2644 = vpop.permute.xlu0 %2643
    %2645 = vrot.lane.b32.xlu0 %v2313, 121
    %v2646 = vpop.permute.xlu0 %2645
    %2647 = vrot.lane.b32.xlu0 %v2314, 121
    %v2648 = vpop.permute.xlu0 %2647
    %2649 = vrot.lane.b32.xlu0 %v2315, 121
    %v2650 = vpop.permute.xlu0 %2649
    %2651 = vrot.lane.b32.xlu0 %v2316, 121
    %v2652 = vpop.permute.xlu0 %2651
    %v2669 = vld [vmem:[%s2] sm:$0xff]
    %v2670 = vld [vmem:[%s2 + $0x8] sm:$0xff]
    %v2671 = vld [vmem:[%s2 + $0x10] sm:$0xff]
    %v2672 = vld [vmem:[%s2 + $0x18] sm:$0xff]
    %v2677 = vunpack.c.l.b16 %v2669
    %v2678 = vunpack.c.h.b16 %v2669
    %v2679 = vunpack.c.l.b16 %v2670
    %v2680 = vunpack.c.h.b16 %v2670
    %v2681 = vunpack.c.l.b16 %v2671
    %v2682 = vunpack.c.h.b16 %v2671
    %v2683 = vunpack.c.l.b16 %v2672
    %v2684 = vunpack.c.h.b16 %v2672
    %v2685 = vpack.c.b16 %v2679, %v2677
    %v2686 = vpack.c.b16 %v2680, %v2678
    %v2687 = vpack.c.b16 %v2683, %v2681
    %v2688 = vpack.c.b16 %v2684, %v2682
    %2693 = vmatpush.bf16.msra.mxu0 %v2432
    %2694 = vmatpush.bf16.msra.mxu0 %v2430
    %2695 = vmatpush.bf16.msra.mxu0 %v2384
    %2696 = vmatpush.bf16.msra.mxu0 %v2382
    %2697 = vmatpush.bf16.msra.mxu0 %v2336
    %2698 = vmatpush.bf16.msra.mxu0 %v2334
    %2699 = vmatpush.bf16.msra.mxu0 %v2302
    %2700 = vmatpush.bf16.msra.mxu0 %v2301
    %2701 = vmatmul.bf16.gmra.mxu0 %v2685
    %v2702 = vpop.f32.mrf.mxu0
    %v2703 = vadd.f32 0.0, %v2702
    %v2704 = vpop.f32.mrf.mxu0
    %v2705 = vadd.f32 0.0, %v2704
    %2706 = vmatmul.bf16.gmra.mxu0 %v2687
    %v2707 = vpop.f32.mrf.mxu0
    %v2708 = vadd.f32 0.0, %v2707
    %v2709 = vpop.f32.mrf.mxu0
    %v2710 = vadd.f32 0.0, %v2709
    %2711 = vdwg.mxu0
    %2712 = vmatpush.bf16.msra.mxu0 %v2624
    %2713 = vmatpush.bf16.msra.mxu0 %v2622
    %2714 = vmatpush.bf16.msra.mxu0 %v2576
    %2715 = vmatpush.bf16.msra.mxu0 %v2574
    %2716 = vmatpush.bf16.msra.mxu0 %v2528
    %2717 = vmatpush.bf16.msra.mxu0 %v2526
    %2718 = vmatpush.bf16.msra.mxu0 %v2480
    %2719 = vmatpush.bf16.msra.mxu0 %v2478
    %2720 = vmatmul.bf16.gmra.mxu0 %v2686
    %v2721 = vpop.f32.mrf.mxu0
    %v2722 = vadd.f32 %v2703, %v2721
    %v2723 = vpop.f32.mrf.mxu0
    %v2724 = vadd.f32 %v2705, %v2723
    %2725 = vmatmul.bf16.gmra.mxu0 %v2688
    %v2726 = vpop.f32.mrf.mxu0
    %v2727 = vadd.f32 %v2708, %v2726
    %v2728 = vpop.f32.mrf.mxu0
    %v2729 = vadd.f32 %v2710, %v2728
    %2730 = vdwg.mxu0
    %2731 = vmatpush.bf16.msra.mxu0 %v2436
    %2732 = vmatpush.bf16.msra.mxu0 %v2434
    %2733 = vmatpush.bf16.msra.mxu0 %v2388
    %2734 = vmatpush.bf16.msra.mxu0 %v2386
    %2735 = vmatpush.bf16.msra.mxu0 %v2340
    %2736 = vmatpush.bf16.msra.mxu0 %v2338
    %2737 = vmatpush.bf16.msra.mxu0 %v2304
    %2738 = vmatpush.bf16.msra.mxu0 %v2303
    %2739 = vmatmul.bf16.gmra.mxu0 %v2685
    %v2740 = vpop.f32.mrf.mxu0
    %v2741 = vadd.f32 0.0, %v2740
    %v2742 = vpop.f32.mrf.mxu0
    %v2743 = vadd.f32 0.0, %v2742
    %2744 = vmatmul.bf16.gmra.mxu0 %v2687
    %v2745 = vpop.f32.mrf.mxu0
    %v2746 = vadd.f32 0.0, %v2745
    %v2747 = vpop.f32.mrf.mxu0
    %v2748 = vadd.f32 0.0, %v2747
    %2749 = vdwg.mxu0
    %2750 = vmatpush.bf16.msra.mxu0 %v2628
    %2751 = vmatpush.bf16.msra.mxu0 %v2626
    %2752 = vmatpush.bf16.msra.mxu0 %v2580
    %2753 = vmatpush.bf16.msra.mxu0 %v2578
    %2754 = vmatpush.bf16.msra.mxu0 %v2532
    %2755 = vmatpush.bf16.msra.mxu0 %v2530
    %2756 = vmatpush.bf16.msra.mxu0 %v2484
    %2757 = vmatpush.bf16.msra.mxu0 %v2482
    %2758 = vmatmul.bf16.gmra.mxu0 %v2686
    %v2759 = vpop.f32.mrf.mxu0
    %v2760 = vadd.f32 %v2741, %v2759
    %v2761 = vpop.f32.mrf.mxu0
    %v2762 = vadd.f32 %v2743, %v2761
    %2763 = vmatmul.bf16.gmra.mxu0 %v2688
    %v2764 = vpop.f32.mrf.mxu0
    %v2765 = vadd.f32 %v2746, %v2764
    %v2766 = vpop.f32.mrf.mxu0
    %v2767 = vadd.f32 %v2748, %v2766
    %2768 = vdwg.mxu0
    %2769 = vmatpush.bf16.msra.mxu0 %v2440
    %2770 = vmatpush.bf16.msra.mxu0 %v2438
    %2771 = vmatpush.bf16.msra.mxu0 %v2392
    %2772 = vmatpush.bf16.msra.mxu0 %v2390
    %2773 = vmatpush.bf16.msra.mxu0 %v2344
    %2774 = vmatpush.bf16.msra.mxu0 %v2342
    %2775 = vmatpush.bf16.msra.mxu0 %v2306
    %2776 = vmatpush.bf16.msra.mxu0 %v2305
    %2777 = vmatmul.bf16.gmra.mxu0 %v2685
    %v2778 = vpop.f32.mrf.mxu0
    %v2779 = vadd.f32 0.0, %v2778
    %v2780 = vpop.f32.mrf.mxu0
    %v2781 = vadd.f32 0.0, %v2780
    %2782 = vmatmul.bf16.gmra.mxu0 %v2687
    %v2783 = vpop.f32.mrf.mxu0
    %v2784 = vadd.f32 0.0, %v2783
    %v2785 = vpop.f32.mrf.mxu0
    %v2786 = vadd.f32 0.0, %v2785
    %2787 = vdwg.mxu0
    %2788 = vmatpush.bf16.msra.mxu0 %v2632
    %2789 = vmatpush.bf16.msra.mxu0 %v2630
    %2790 = vmatpush.bf16.msra.mxu0 %v2584
    %2791 = vmatpush.bf16.msra.mxu0 %v2582
    %2792 = vmatpush.bf16.msra.mxu0 %v2536
    %2793 = vmatpush.bf16.msra.mxu0 %v2534
    %2794 = vmatpush.bf16.msra.mxu0 %v2488
    %2795 = vmatpush.bf16.msra.mxu0 %v2486
    %2796 = vmatmul.bf16.gmra.mxu0 %v2686
    %v2797 = vpop.f32.mrf.mxu0
    %v2798 = vadd.f32 %v2779, %v2797
    %v2799 = vpop.f32.mrf.mxu0
    %v2800 = vadd.f32 %v2781, %v2799
    %2801 = vmatmul.bf16.gmra.mxu0 %v2688
    %v2802 = vpop.f32.mrf.mxu0
    %v2803 = vadd.f32 %v2784, %v2802
    %v2804 = vpop.f32.mrf.mxu0
    %v2805 = vadd.f32 %v2786, %v2804
    %2806 = vdwg.mxu0
    %2807 = vmatpush.bf16.msra.mxu0 %v2444
    %2808 = vmatpush.bf16.msra.mxu0 %v2442
    %2809 = vmatpush.bf16.msra.mxu0 %v2396
    %2810 = vmatpush.bf16.msra.mxu0 %v2394
    %2811 = vmatpush.bf16.msra.mxu0 %v2348
    %2812 = vmatpush.bf16.msra.mxu0 %v2346
    %2813 = vmatpush.bf16.msra.mxu0 %v2308
    %2814 = vmatpush.bf16.msra.mxu0 %v2307
    %2815 = vmatmul.bf16.gmra.mxu0 %v2685
    %v2816 = vpop.f32.mrf.mxu0
    %v2817 = vadd.f32 0.0, %v2816
    %v2818 = vpop.f32.mrf.mxu0
    %v2819 = vadd.f32 0.0, %v2818
    %2820 = vmatmul.bf16.gmra.mxu0 %v2687
    %v2821 = vpop.f32.mrf.mxu0
    %v2822 = vadd.f32 0.0, %v2821
    %v2823 = vpop.f32.mrf.mxu0
    %v2824 = vadd.f32 0.0, %v2823
    %2825 = vdwg.mxu0
    %2826 = vmatpush.bf16.msra.mxu0 %v2636
    %2827 = vmatpush.bf16.msra.mxu0 %v2634
    %2828 = vmatpush.bf16.msra.mxu0 %v2588
    %2829 = vmatpush.bf16.msra.mxu0 %v2586
    %2830 = vmatpush.bf16.msra.mxu0 %v2540
    %2831 = vmatpush.bf16.msra.mxu0 %v2538
    %2832 = vmatpush.bf16.msra.mxu0 %v2492
    %2833 = vmatpush.bf16.msra.mxu0 %v2490
    %2834 = vmatmul.bf16.gmra.mxu0 %v2686
    %v2835 = vpop.f32.mrf.mxu0
    %v2836 = vadd.f32 %v2817, %v2835
    %v2837 = vpop.f32.mrf.mxu0
    %v2838 = vadd.f32 %v2819, %v2837
    %2839 = vmatmul.bf16.gmra.mxu0 %v2688
    %v2840 = vpop.f32.mrf.mxu0
    %v2841 = vadd.f32 %v2822, %v2840
    %v2842 = vpop.f32.mrf.mxu0
    %v2843 = vadd.f32 %v2824, %v2842
    %2844 = vdwg.mxu0
    %2845 = vmatpush.bf16.msra.mxu0 %v2448
    %2846 = vmatpush.bf16.msra.mxu0 %v2446
    %2847 = vmatpush.bf16.msra.mxu0 %v2400
    %2848 = vmatpush.bf16.msra.mxu0 %v2398
    %2849 = vmatpush.bf16.msra.mxu0 %v2352
    %2850 = vmatpush.bf16.msra.mxu0 %v2350
    %2851 = vmatpush.bf16.msra.mxu0 %v2310
    %2852 = vmatpush.bf16.msra.mxu0 %v2309
    %2853 = vmatmul.bf16.gmra.mxu0 %v2685
    %v2854 = vpop.f32.mrf.mxu0
    %v2855 = vadd.f32 0.0, %v2854
    %v2856 = vpop.f32.mrf.mxu0
    %v2857 = vadd.f32 0.0, %v2856
    %2858 = vmatmul.bf16.gmra.mxu0 %v2687
    %v2859 = vpop.f32.mrf.mxu0
    %v2860 = vadd.f32 0.0, %v2859
    %v2861 = vpop.f32.mrf.mxu0
    %v2862 = vadd.f32 0.0, %v2861
    %2863 = vdwg.mxu0
    %2864 = vmatpush.bf16.msra.mxu0 %v2640
    %2865 = vmatpush.bf16.msra.mxu0 %v2638
    %2866 = vmatpush.bf16.msra.mxu0 %v2592
    %2867 = vmatpush.bf16.msra.mxu0 %v2590
    %2868 = vmatpush.bf16.msra.mxu0 %v2544
    %2869 = vmatpush.bf16.msra.mxu0 %v2542
    %2870 = vmatpush.bf16.msra.mxu0 %v2496
    %2871 = vmatpush.bf16.msra.mxu0 %v2494
    %2872 = vmatmul.bf16.gmra.mxu0 %v2686
    %v2873 = vpop.f32.mrf.mxu0
    %v2874 = vadd.f32 %v2855, %v2873
    %v2875 = vpop.f32.mrf.mxu0
    %v2876 = vadd.f32 %v2857, %v2875
    %2877 = vmatmul.bf16.gmra.mxu0 %v2688
    %v2878 = vpop.f32.mrf.mxu0
    %v2879 = vadd.f32 %v2860, %v2878
    %v2880 = vpop.f32.mrf.mxu0
    %v2881 = vadd.f32 %v2862, %v2880
    %2882 = vdwg.mxu0
    %2883 = vmatpush.bf16.msra.mxu0 %v2452
    %2884 = vmatpush.bf16.msra.mxu0 %v2450
    %2885 = vmatpush.bf16.msra.mxu0 %v2404
    %2886 = vmatpush.bf16.msra.mxu0 %v2402
    %2887 = vmatpush.bf16.msra.mxu0 %v2356
    %2888 = vmatpush.bf16.msra.mxu0 %v2354
    %2889 = vmatpush.bf16.msra.mxu0 %v2312
    %2890 = vmatpush.bf16.msra.mxu0 %v2311
    %2891 = vmatmul.bf16.gmra.mxu0 %v2685
    %v2892 = vpop.f32.mrf.mxu0
    %v2893 = vadd.f32 0.0, %v2892
    %v2894 = vpop.f32.mrf.mxu0
    %v2895 = vadd.f32 0.0, %v2894
    %2896 = vmatmul.bf16.gmra.mxu0 %v2687
    %v2897 = vpop.f32.mrf.mxu0
    %v2898 = vadd.f32 0.0, %v2897
    %v2899 = vpop.f32.mrf.mxu0
    %v2900 = vadd.f32 0.0, %v2899
    %2901 = vdwg.mxu0
    %2902 = vmatpush.bf16.msra.mxu0 %v2644
    %2903 = vmatpush.bf16.msra.mxu0 %v2642
    %2904 = vmatpush.bf16.msra.mxu0 %v2596
    %2905 = vmatpush.bf16.msra.mxu0 %v2594
    %2906 = vmatpush.bf16.msra.mxu0 %v2548
    %2907 = vmatpush.bf16.msra.mxu0 %v2546
    %2908 = vmatpush.bf16.msra.mxu0 %v2500
    %2909 = vmatpush.bf16.msra.mxu0 %v2498
    %2910 = vmatmul.bf16.gmra.mxu0 %v2686
    %v2911 = vpop.f32.mrf.mxu0
    %v2912 = vadd.f32 %v2893, %v2911
    %v2913 = vpop.f32.mrf.mxu0
    %v2914 = vadd.f32 %v2895, %v2913
    %2915 = vmatmul.bf16.gmra.mxu0 %v2688
    %v2916 = vpop.f32.mrf.mxu0
    %v2917 = vadd.f32 %v2898, %v2916
    %v2918 = vpop.f32.mrf.mxu0
    %v2919 = vadd.f32 %v2900, %v2918
    %2920 = vdwg.mxu0
    %2921 = vmatpush.bf16.msra.mxu0 %v2456
    %2922 = vmatpush.bf16.msra.mxu0 %v2454
    %2923 = vmatpush.bf16.msra.mxu0 %v2408
    %2924 = vmatpush.bf16.msra.mxu0 %v2406
    %2925 = vmatpush.bf16.msra.mxu0 %v2360
    %2926 = vmatpush.bf16.msra.mxu0 %v2358
    %2927 = vmatpush.bf16.msra.mxu0 %v2314
    %2928 = vmatpush.bf16.msra.mxu0 %v2313
    %2929 = vmatmul.bf16.gmra.mxu0 %v2685
    %v2930 = vpop.f32.mrf.mxu0
    %v2931 = vadd.f32 0.0, %v2930
    %v2932 = vpop.f32.mrf.mxu0
    %v2933 = vadd.f32 0.0, %v2932
    %2934 = vmatmul.bf16.gmra.mxu0 %v2687
    %v2935 = vpop.f32.mrf.mxu0
    %v2936 = vadd.f32 0.0, %v2935
    %v2937 = vpop.f32.mrf.mxu0
    %v2938 = vadd.f32 0.0, %v2937
    %2939 = vdwg.mxu0
    %2940 = vmatpush.bf16.msra.mxu0 %v2648
    %2941 = vmatpush.bf16.msra.mxu0 %v2646
    %2942 = vmatpush.bf16.msra.mxu0 %v2600
    %2943 = vmatpush.bf16.msra.mxu0 %v2598
    %2944 = vmatpush.bf16.msra.mxu0 %v2552
    %2945 = vmatpush.bf16.msra.mxu0 %v2550
    %2946 = vmatpush.bf16.msra.mxu0 %v2504
    %2947 = vmatpush.bf16.msra.mxu0 %v2502
    %2948 = vmatmul.bf16.gmra.mxu0 %v2686
    %v2949 = vpop.f32.mrf.mxu0
    %v2950 = vadd.f32 %v2931, %v2949
    %v2951 = vpop.f32.mrf.mxu0
    %v2952 = vadd.f32 %v2933, %v2951
    %2953 = vmatmul.bf16.gmra.mxu0 %v2688
    %v2954 = vpop.f32.mrf.mxu0
    %v2955 = vadd.f32 %v2936, %v2954
    %v2956 = vpop.f32.mrf.mxu0
    %v2957 = vadd.f32 %v2938, %v2956
    %2958 = vdwg.mxu0
    %2959 = vmatpush.bf16.msra.mxu0 %v2460
    %2960 = vmatpush.bf16.msra.mxu0 %v2458
    %2961 = vmatpush.bf16.msra.mxu0 %v2412
    %2962 = vmatpush.bf16.msra.mxu0 %v2410
    %2963 = vmatpush.bf16.msra.mxu0 %v2364
    %2964 = vmatpush.bf16.msra.mxu0 %v2362
    %2965 = vmatpush.bf16.msra.mxu0 %v2316
    %2966 = vmatpush.bf16.msra.mxu0 %v2315
    %2967 = vmatmul.bf16.gmra.mxu0 %v2685
    %v2968 = vpop.f32.mrf.mxu0
    %v2969 = vadd.f32 0.0, %v2968
    %v2970 = vpop.f32.mrf.mxu0
    %v2971 = vadd.f32 0.0, %v2970
    %2972 = vmatmul.bf16.gmra.mxu0 %v2687
    %v2973 = vpop.f32.mrf.mxu0
    %v2974 = vadd.f32 0.0, %v2973
    %v2975 = vpop.f32.mrf.mxu0
    %v2976 = vadd.f32 0.0, %v2975
    %2977 = vdwg.mxu0
    %2978 = vmatpush.bf16.msra.mxu0 %v2652
    %2979 = vmatpush.bf16.msra.mxu0 %v2650
    %2980 = vmatpush.bf16.msra.mxu0 %v2604
    %2981 = vmatpush.bf16.msra.mxu0 %v2602
    %2982 = vmatpush.bf16.msra.mxu0 %v2556
    %2983 = vmatpush.bf16.msra.mxu0 %v2554
    %2984 = vmatpush.bf16.msra.mxu0 %v2508
    %2985 = vmatpush.bf16.msra.mxu0 %v2506
    %2986 = vmatmul.bf16.gmra.mxu0 %v2686
    %v2987 = vpop.f32.mrf.mxu0
    %v2988 = vadd.f32 %v2969, %v2987
    %v2989 = vpop.f32.mrf.mxu0
    %v2990 = vadd.f32 %v2971, %v2989
    %2991 = vmatmul.bf16.gmra.mxu0 %v2688
    %v2992 = vpop.f32.mrf.mxu0
    %v2993 = vadd.f32 %v2974, %v2992
    %v2994 = vpop.f32.mrf.mxu0
    %v2995 = vadd.f32 %v2976, %v2994
    %2996 = vdwg.mxu0
    %vm2997 = vcmask 179200
    %v2998 = vsel %vm2997, %v2722, 0.0
    %2999 = vadd.xlane.f32.xlu0 %v2998
    %v3000 = vpop.xlane.xlu0 %2999
    %v3001 = vsel %vm2997, %v2724, 0.0
    %3002 = vadd.xlane.f32.xlu0 %v3001
    %v3003 = vpop.xlane.xlu0 %3002
    %v3004 = vsel %vm2997, %v2727, 0.0
    %3005 = vadd.xlane.f32.xlu0 %v3004
    %v3006 = vpop.xlane.xlu0 %3005
    %v3007 = vsel %vm2997, %v2729, 0.0
    %3008 = vadd.xlane.f32.xlu0 %v3007
    %v3009 = vpop.xlane.xlu0 %3008
    %v3010 = vsel %vm2997, %v2760, 0.0
    %3011 = vadd.xlane.f32.xlu0 %v3010
    %v3012 = vpop.xlane.xlu0 %3011
    %v3013 = vsel %vm2997, %v2762, 0.0
    %3014 = vadd.xlane.f32.xlu0 %v3013
    %v3015 = vpop.xlane.xlu0 %3014
    %v3016 = vsel %vm2997, %v2765, 0.0
    %3017 = vadd.xlane.f32.xlu0 %v3016
    %v3018 = vpop.xlane.xlu0 %3017
    %v3019 = vsel %vm2997, %v2767, 0.0
    %3020 = vadd.xlane.f32.xlu0 %v3019
    %v3021 = vpop.xlane.xlu0 %3020
    %v3022 = vsel %vm2997, %v2798, 0.0
    %3023 = vadd.xlane.f32.xlu0 %v3022
    %v3024 = vpop.xlane.xlu0 %3023
    %v3025 = vsel %vm2997, %v2800, 0.0
    %3026 = vadd.xlane.f32.xlu0 %v3025
    %v3027 = vpop.xlane.xlu0 %3026
    %v3028 = vsel %vm2997, %v2803, 0.0
    %3029 = vadd.xlane.f32.xlu0 %v3028
    %v3030 = vpop.xlane.xlu0 %3029
    %v3031 = vsel %vm2997, %v2805, 0.0
    %3032 = vadd.xlane.f32.xlu0 %v3031
    %v3033 = vpop.xlane.xlu0 %3032
    %v3034 = vsel %vm2997, %v2836, 0.0
    %3035 = vadd.xlane.f32.xlu0 %v3034
    %v3036 = vpop.xlane.xlu0 %3035
    %v3037 = vsel %vm2997, %v2838, 0.0
    %3038 = vadd.xlane.f32.xlu0 %v3037
    %v3039 = vpop.xlane.xlu0 %3038
    %v3040 = vsel %vm2997, %v2841, 0.0
    %3041 = vadd.xlane.f32.xlu0 %v3040
    %v3042 = vpop.xlane.xlu0 %3041
    %v3043 = vsel %vm2997, %v2843, 0.0
    %3044 = vadd.xlane.f32.xlu0 %v3043
    %v3045 = vpop.xlane.xlu0 %3044
    %v3046 = vsel %vm2997, %v2874, 0.0
    %3047 = vadd.xlane.f32.xlu0 %v3046
    %v3048 = vpop.xlane.xlu0 %3047
    %v3049 = vsel %vm2997, %v2876, 0.0
    %3050 = vadd.xlane.f32.xlu0 %v3049
    %v3051 = vpop.xlane.xlu0 %3050
    %v3052 = vsel %vm2997, %v2879, 0.0
    %3053 = vadd.xlane.f32.xlu0 %v3052
    %v3054 = vpop.xlane.xlu0 %3053
    %v3055 = vsel %vm2997, %v2881, 0.0
    %3056 = vadd.xlane.f32.xlu0 %v3055
    %v3057 = vpop.xlane.xlu0 %3056
    %v3058 = vsel %vm2997, %v2912, 0.0
    %3059 = vadd.xlane.f32.xlu0 %v3058
    %v3060 = vpop.xlane.xlu0 %3059
    %v3061 = vsel %vm2997, %v2914, 0.0
    %3062 = vadd.xlane.f32.xlu0 %v3061
    %v3063 = vpop.xlane.xlu0 %3062
    %v3064 = vsel %vm2997, %v2917, 0.0
    %3065 = vadd.xlane.f32.xlu0 %v3064
    %v3066 = vpop.xlane.xlu0 %3065
    %v3067 = vsel %vm2997, %v2919, 0.0
    %3068 = vadd.xlane.f32.xlu0 %v3067
    %v3069 = vpop.xlane.xlu0 %3068
    %v3070 = vsel %vm2997, %v2950, 0.0
    %3071 = vadd.xlane.f32.xlu0 %v3070
    %v3072 = vpop.xlane.xlu0 %3071
    %v3073 = vsel %vm2997, %v2952, 0.0
    %3074 = vadd.xlane.f32.xlu0 %v3073
    %v3075 = vpop.xlane.xlu0 %3074
    %v3076 = vsel %vm2997, %v2955, 0.0
    %3077 = vadd.xlane.f32.xlu0 %v3076
    %v3078 = vpop.xlane.xlu0 %3077
    %v3079 = vsel %vm2997, %v2957, 0.0
    %3080 = vadd.xlane.f32.xlu0 %v3079
    %v3081 = vpop.xlane.xlu0 %3080
    %v3082 = vsel %vm2997, %v2988, 0.0
    %3083 = vadd.xlane.f32.xlu0 %v3082
    %v3084 = vpop.xlane.xlu0 %3083
    %v3085 = vsel %vm2997, %v2990, 0.0
    %3086 = vadd.xlane.f32.xlu0 %v3085
    %v3087 = vpop.xlane.xlu0 %3086
    %v3088 = vsel %vm2997, %v2993, 0.0
    %3089 = vadd.xlane.f32.xlu0 %v3088
    %v3090 = vpop.xlane.xlu0 %3089
    %v3091 = vsel %vm2997, %v2995, 0.0
    %3092 = vadd.xlane.f32.xlu0 %v3091
    %v3093 = vpop.xlane.xlu0 %3092
    %v3094 = vrcp.pop 22.0
    %v3095 = vmul.f32 22.0, %v3094
    %v3096 = vsub.f32 1.0, %v3095
    %v3097 = vmul.f32 %v3094, %v3096
    %v3098 = vadd.f32 %v3094, %v3097
    %vm3099 = vweird.f32 %v3094
    %v3100 = vsel %vm3099, %v3094, %v3098
    %v3101 = vmul.f32 %v3000, %v3100
    %v3102 = vmul.f32 %v3003, %v3100
    %v3103 = vmul.f32 %v3006, %v3100
    %v3104 = vmul.f32 %v3009, %v3100
    %v3105 = vmul.f32 %v3012, %v3100
    %v3106 = vmul.f32 %v3015, %v3100
    %v3107 = vmul.f32 %v3018, %v3100
    %v3108 = vmul.f32 %v3021, %v3100
    %v3109 = vmul.f32 %v3024, %v3100
    %v3110 = vmul.f32 %v3027, %v3100
    %v3111 = vmul.f32 %v3030, %v3100
    %v3112 = vmul.f32 %v3033, %v3100
    %v3113 = vmul.f32 %v3036, %v3100
    %v3114 = vmul.f32 %v3039, %v3100
    %v3115 = vmul.f32 %v3042, %v3100
    %v3116 = vmul.f32 %v3045, %v3100
    %v3117 = vmul.f32 %v3048, %v3100
    %v3118 = vmul.f32 %v3051, %v3100
    %v3119 = vmul.f32 %v3054, %v3100
    %v3120 = vmul.f32 %v3057, %v3100
    %v3121 = vmul.f32 %v3060, %v3100
    %v3122 = vmul.f32 %v3063, %v3100
    %v3123 = vmul.f32 %v3066, %v3100
    %v3124 = vmul.f32 %v3069, %v3100
    %v3125 = vmul.f32 %v3072, %v3100
    %v3126 = vmul.f32 %v3075, %v3100
    %v3127 = vmul.f32 %v3078, %v3100
    %v3128 = vmul.f32 %v3081, %v3100
    %v3129 = vmul.f32 %v3084, %v3100
    %v3130 = vmul.f32 %v3087, %v3100
    %v3131 = vmul.f32 %v3090, %v3100
    %v3132 = vmul.f32 %v3093, %v3100
    %v3133 = vadd.f32 %v3101, %v3105
    %v3134 = vadd.f32 %v3133, %v3109
    %v3135 = vadd.f32 %v3134, %v3113
    %v3136 = vadd.f32 %v3135, %v3117
    %v3137 = vadd.f32 %v3136, %v3121
    %v3138 = vadd.f32 %v3137, %v3125
    %v3139 = vadd.f32 %v3138, %v3129
    %v3140 = vadd.f32 %v3102, %v3106
    %v3141 = vadd.f32 %v3140, %v3110
    %v3142 = vadd.f32 %v3141, %v3114
    %v3143 = vadd.f32 %v3142, %v3118
    %v3144 = vadd.f32 %v3143, %v3122
    %v3145 = vadd.f32 %v3144, %v3126
    %v3146 = vadd.f32 %v3145, %v3130
    %v3147 = vadd.f32 %v3103, %v3107
    %v3148 = vadd.f32 %v3147, %v3111
    %v3149 = vadd.f32 %v3148, %v3115
    %v3150 = vadd.f32 %v3149, %v3119
    %v3151 = vadd.f32 %v3150, %v3123
    %v3152 = vadd.f32 %v3151, %v3127
    %v3153 = vadd.f32 %v3152, %v3131
    %v3154 = vadd.f32 %v3104, %v3108
    %v3155 = vadd.f32 %v3154, %v3112
    %v3156 = vadd.f32 %v3155, %v3116
    %v3157 = vadd.f32 %v3156, %v3120
    %v3158 = vadd.f32 %v3157, %v3124
    %v3159 = vadd.f32 %v3158, %v3128
    %v3160 = vadd.f32 %v3159, %v3132
    %v3161 = vmul.f32 %v3139, %v1796
    %v3162 = vmul.f32 %v3146, %v1796
    %v3163 = vmul.f32 %v3153, %v1796
    %v3164 = vmul.f32 %v3160, %v1796
    %v3165 = vmul.f32 %v2722, %v2722
    %v3166 = vmul.f32 %v2724, %v2724
    %v3167 = vmul.f32 %v2727, %v2727
    %v3168 = vmul.f32 %v2729, %v2729
    %v3169 = vmul.f32 %v2760, %v2760
    %v3170 = vmul.f32 %v2762, %v2762
    %v3171 = vmul.f32 %v2765, %v2765
    %v3172 = vmul.f32 %v2767, %v2767
    %v3173 = vmul.f32 %v2798, %v2798
    %v3174 = vmul.f32 %v2800, %v2800
    %v3175 = vmul.f32 %v2803, %v2803
    %v3176 = vmul.f32 %v2805, %v2805
    %v3177 = vmul.f32 %v2836, %v2836
    %v3178 = vmul.f32 %v2838, %v2838
    %v3179 = vmul.f32 %v2841, %v2841
    %v3180 = vmul.f32 %v2843, %v2843
    %v3181 = vmul.f32 %v2874, %v2874
    %v3182 = vmul.f32 %v2876, %v2876
    %v3183 = vmul.f32 %v2879, %v2879
    %v3184 = vmul.f32 %v2881, %v2881
    %v3185 = vmul.f32 %v2912, %v2912
    %v3186 = vmul.f32 %v2914, %v2914
    %v3187 = vmul.f32 %v2917, %v2917
    %v3188 = vmul.f32 %v2919, %v2919
    %v3189 = vmul.f32 %v2950, %v2950
    %v3190 = vmul.f32 %v2952, %v2952
    %v3191 = vmul.f32 %v2955, %v2955
    %v3192 = vmul.f32 %v2957, %v2957
    %v3193 = vmul.f32 %v2988, %v2988
    %v3194 = vmul.f32 %v2990, %v2990
    %v3195 = vmul.f32 %v2993, %v2993
    %v3196 = vmul.f32 %v2995, %v2995
    %v3197 = vsel %vm2997, %v3165, 0.0
    %3198 = vadd.xlane.f32.xlu0 %v3197
    %v3199 = vpop.xlane.xlu0 %3198
    %v3200 = vsel %vm2997, %v3166, 0.0
    %3201 = vadd.xlane.f32.xlu0 %v3200
    %v3202 = vpop.xlane.xlu0 %3201
    %v3203 = vsel %vm2997, %v3167, 0.0
    %3204 = vadd.xlane.f32.xlu0 %v3203
    %v3205 = vpop.xlane.xlu0 %3204
    %v3206 = vsel %vm2997, %v3168, 0.0
    %3207 = vadd.xlane.f32.xlu0 %v3206
    %v3208 = vpop.xlane.xlu0 %3207
    %v3209 = vsel %vm2997, %v3169, 0.0
    %3210 = vadd.xlane.f32.xlu0 %v3209
    %v3211 = vpop.xlane.xlu0 %3210
    %v3212 = vsel %vm2997, %v3170, 0.0
    %3213 = vadd.xlane.f32.xlu0 %v3212
    %v3214 = vpop.xlane.xlu0 %3213
    %v3215 = vsel %vm2997, %v3171, 0.0
    %3216 = vadd.xlane.f32.xlu0 %v3215
    %v3217 = vpop.xlane.xlu0 %3216
    %v3218 = vsel %vm2997, %v3172, 0.0
    %3219 = vadd.xlane.f32.xlu0 %v3218
    %v3220 = vpop.xlane.xlu0 %3219
    %v3221 = vsel %vm2997, %v3173, 0.0
    %3222 = vadd.xlane.f32.xlu0 %v3221
    %v3223 = vpop.xlane.xlu0 %3222
    %v3224 = vsel %vm2997, %v3174, 0.0
    %3225 = vadd.xlane.f32.xlu0 %v3224
    %v3226 = vpop.xlane.xlu0 %3225
    %v3227 = vsel %vm2997, %v3175, 0.0
    %3228 = vadd.xlane.f32.xlu0 %v3227
    %v3229 = vpop.xlane.xlu0 %3228
    %v3230 = vsel %vm2997, %v3176, 0.0
    %3231 = vadd.xlane.f32.xlu0 %v3230
    %v3232 = vpop.xlane.xlu0 %3231
    %v3233 = vsel %vm2997, %v3177, 0.0
    %3234 = vadd.xlane.f32.xlu0 %v3233
    %v3235 = vpop.xlane.xlu0 %3234
    %v3236 = vsel %vm2997, %v3178, 0.0
    %3237 = vadd.xlane.f32.xlu0 %v3236
    %v3238 = vpop.xlane.xlu0 %3237
    %v3239 = vsel %vm2997, %v3179, 0.0
    %3240 = vadd.xlane.f32.xlu0 %v3239
    %v3241 = vpop.xlane.xlu0 %3240
    %v3242 = vsel %vm2997, %v3180, 0.0
    %3243 = vadd.xlane.f32.xlu0 %v3242
    %v3244 = vpop.xlane.xlu0 %3243
    %v3245 = vsel %vm2997, %v3181, 0.0
    %3246 = vadd.xlane.f32.xlu0 %v3245
    %v3247 = vpop.xlane.xlu0 %3246
    %v3248 = vsel %vm2997, %v3182, 0.0
    %3249 = vadd.xlane.f32.xlu0 %v3248
    %v3250 = vpop.xlane.xlu0 %3249
    %v3251 = vsel %vm2997, %v3183, 0.0
    %3252 = vadd.xlane.f32.xlu0 %v3251
    %v3253 = vpop.xlane.xlu0 %3252
    %v3254 = vsel %vm2997, %v3184, 0.0
    %3255 = vadd.xlane.f32.xlu0 %v3254
    %v3256 = vpop.xlane.xlu0 %3255
    %v3257 = vsel %vm2997, %v3185, 0.0
    %3258 = vadd.xlane.f32.xlu0 %v3257
    %v3259 = vpop.xlane.xlu0 %3258
    %v3260 = vsel %vm2997, %v3186, 0.0
    %3261 = vadd.xlane.f32.xlu0 %v3260
    %v3262 = vpop.xlane.xlu0 %3261
    %v3263 = vsel %vm2997, %v3187, 0.0
    %3264 = vadd.xlane.f32.xlu0 %v3263
    %v3265 = vpop.xlane.xlu0 %3264
    %v3266 = vsel %vm2997, %v3188, 0.0
    %3267 = vadd.xlane.f32.xlu0 %v3266
    %v3268 = vpop.xlane.xlu0 %3267
    %v3269 = vsel %vm2997, %v3189, 0.0
    %3270 = vadd.xlane.f32.xlu0 %v3269
    %v3271 = vpop.xlane.xlu0 %3270
    %v3272 = vsel %vm2997, %v3190, 0.0
    %3273 = vadd.xlane.f32.xlu0 %v3272
    %v3274 = vpop.xlane.xlu0 %3273
    %v3275 = vsel %vm2997, %v3191, 0.0
    %3276 = vadd.xlane.f32.xlu0 %v3275
    %v3277 = vpop.xlane.xlu0 %3276
    %v3278 = vsel %vm2997, %v3192, 0.0
    %3279 = vadd.xlane.f32.xlu0 %v3278
    %v3280 = vpop.xlane.xlu0 %3279
    %v3281 = vsel %vm2997, %v3193, 0.0
    %3282 = vadd.xlane.f32.xlu0 %v3281
    %v3283 = vpop.xlane.xlu0 %3282
    %v3284 = vsel %vm2997, %v3194, 0.0
    %3285 = vadd.xlane.f32.xlu0 %v3284
    %v3286 = vpop.xlane.xlu0 %3285
    %v3287 = vsel %vm2997, %v3195, 0.0
    %3288 = vadd.xlane.f32.xlu0 %v3287
    %v3289 = vpop.xlane.xlu0 %3288
    %v3290 = vsel %vm2997, %v3196, 0.0
    %3291 = vadd.xlane.f32.xlu0 %v3290
    %v3292 = vpop.xlane.xlu0 %3291
    %v3293 = vmul.f32 %v3199, %v3100
    %v3294 = vmul.f32 %v3202, %v3100
    %v3295 = vmul.f32 %v3205, %v3100
    %v3296 = vmul.f32 %v3208, %v3100
    %v3297 = vmul.f32 %v3211, %v3100
    %v3298 = vmul.f32 %v3214, %v3100
    %v3299 = vmul.f32 %v3217, %v3100
    %v3300 = vmul.f32 %v3220, %v3100
    %v3301 = vmul.f32 %v3223, %v3100
    %v3302 = vmul.f32 %v3226, %v3100
    %v3303 = vmul.f32 %v3229, %v3100
    %v3304 = vmul.f32 %v3232, %v3100
    %v3305 = vmul.f32 %v3235, %v3100
    %v3306 = vmul.f32 %v3238, %v3100
    %v3307 = vmul.f32 %v3241, %v3100
    %v3308 = vmul.f32 %v3244, %v3100
    %v3309 = vmul.f32 %v3247, %v3100
    %v3310 = vmul.f32 %v3250, %v3100
    %v3311 = vmul.f32 %v3253, %v3100
    %v3312 = vmul.f32 %v3256, %v3100
    %v3313 = vmul.f32 %v3259, %v3100
    %v3314 = vmul.f32 %v3262, %v3100
    %v3315 = vmul.f32 %v3265, %v3100
    %v3316 = vmul.f32 %v3268, %v3100
    %v3317 = vmul.f32 %v3271, %v3100
    %v3318 = vmul.f32 %v3274, %v3100
    %v3319 = vmul.f32 %v3277, %v3100
    %v3320 = vmul.f32 %v3280, %v3100
    %v3321 = vmul.f32 %v3283, %v3100
    %v3322 = vmul.f32 %v3286, %v3100
    %v3323 = vmul.f32 %v3289, %v3100
    %v3324 = vmul.f32 %v3292, %v3100
    %v3325 = vadd.f32 %v3293, %v3297
    %v3326 = vadd.f32 %v3325, %v3301
    %v3327 = vadd.f32 %v3326, %v3305
    %v3328 = vadd.f32 %v3327, %v3309
    %v3329 = vadd.f32 %v3328, %v3313
    %v3330 = vadd.f32 %v3329, %v3317
    %v3331 = vadd.f32 %v3330, %v3321
    %v3332 = vadd.f32 %v3294, %v3298
    %v3333 = vadd.f32 %v3332, %v3302
    %v3334 = vadd.f32 %v3333, %v3306
    %v3335 = vadd.f32 %v3334, %v3310
    %v3336 = vadd.f32 %v3335, %v3314
    %v3337 = vadd.f32 %v3336, %v3318
    %v3338 = vadd.f32 %v3337, %v3322
    %v3339 = vadd.f32 %v3295, %v3299
    %v3340 = vadd.f32 %v3339, %v3303
    %v3341 = vadd.f32 %v3340, %v3307
    %v3342 = vadd.f32 %v3341, %v3311
    %v3343 = vadd.f32 %v3342, %v3315
    %v3344 = vadd.f32 %v3343, %v3319
    %v3345 = vadd.f32 %v3344, %v3323
    %v3346 = vadd.f32 %v3296, %v3300
    %v3347 = vadd.f32 %v3346, %v3304
    %v3348 = vadd.f32 %v3347, %v3308
    %v3349 = vadd.f32 %v3348, %v3312
    %v3350 = vadd.f32 %v3349, %v3316
    %v3351 = vadd.f32 %v3350, %v3320
    %v3352 = vadd.f32 %v3351, %v3324
    %v3353 = vmul.f32 %v3331, %v1796
    %v3354 = vmul.f32 %v3338, %v1796
    %v3355 = vmul.f32 %v3345, %v1796
    %v3356 = vmul.f32 %v3352, %v1796
    %v3357 = vsub.f32 %v2722, %v3161
    %v3358 = vsub.f32 %v2724, %v3162
    %v3359 = vsub.f32 %v2727, %v3163
    %v3360 = vsub.f32 %v2729, %v3164
    %v3361 = vsub.f32 %v2760, %v3161
    %v3362 = vsub.f32 %v2762, %v3162
    %v3363 = vsub.f32 %v2765, %v3163
    %v3364 = vsub.f32 %v2767, %v3164
    %v3365 = vsub.f32 %v2798, %v3161
    %v3366 = vsub.f32 %v2800, %v3162
    %v3367 = vsub.f32 %v2803, %v3163
    %v3368 = vsub.f32 %v2805, %v3164
    %v3369 = vsub.f32 %v2836, %v3161
    %v3370 = vsub.f32 %v2838, %v3162
    %v3371 = vsub.f32 %v2841, %v3163
    %v3372 = vsub.f32 %v2843, %v3164
    %v3373 = vsub.f32 %v2874, %v3161
    %v3374 = vsub.f32 %v2876, %v3162
    %v3375 = vsub.f32 %v2879, %v3163
    %v3376 = vsub.f32 %v2881, %v3164
    %v3377 = vsub.f32 %v2912, %v3161
    %v3378 = vsub.f32 %v2914, %v3162
    %v3379 = vsub.f32 %v2917, %v3163
    %v3380 = vsub.f32 %v2919, %v3164
    %v3381 = vsub.f32 %v2950, %v3161
    %v3382 = vsub.f32 %v2952, %v3162
    %v3383 = vsub.f32 %v2955, %v3163
    %v3384 = vsub.f32 %v2957, %v3164
    %v3385 = vsub.f32 %v2988, %v3161
    %v3386 = vsub.f32 %v2990, %v3162
    %v3387 = vsub.f32 %v2993, %v3163
    %v3388 = vsub.f32 %v2995, %v3164
    %v3389 = vmul.f32 %v3161, %v3161
    %v3390 = vmul.f32 %v3162, %v3162
    %v3391 = vmul.f32 %v3163, %v3163
    %v3392 = vmul.f32 %v3164, %v3164
    %v3393 = vsub.f32 %v3353, %v3389
    %v3394 = vsub.f32 %v3354, %v3390
    %v3395 = vsub.f32 %v3355, %v3391
    %v3396 = vsub.f32 %v3356, %v3392
    %v3397 = vadd.f32 %v3393, 1e-05
    %v3398 = vadd.f32 %v3394, 1e-05
    %v3399 = vadd.f32 %v3395, 1e-05
    %v3400 = vadd.f32 %v3396, 1e-05
    %v3401 = vrsqrt.pop %v3397
    %v3402 = vmul.f32 %v3401, %v3397
    %v3403 = vmul.f32 %v3402, %v3401
    %v3404 = vmul.f32 0.5, %v3403
    %v3405 = vsub.f32 1.5, %v3404
    %v3406 = vmul.f32 %v3401, %v3405
    %vm3407 = vweird.f32 %v3397
    %vm3408 = vweird.f32 %v3401
    %vm3409 = vmor %vm3407, %vm3408
    %v3410 = vsel %vm3409, %v3401, %v3406
    %v3411 = vrsqrt.pop %v3398
    %v3412 = vmul.f32 %v3411, %v3398
    %v3413 = vmul.f32 %v3412, %v3411
    %v3414 = vmul.f32 0.5, %v3413
    %v3415 = vsub.f32 1.5, %v3414
    %v3416 = vmul.f32 %v3411, %v3415
    %vm3417 = vweird.f32 %v3398
    %vm3418 = vweird.f32 %v3411
    %vm3419 = vmor %vm3417, %vm3418
    %v3420 = vsel %vm3419, %v3411, %v3416
    %v3421 = vrsqrt.pop %v3399
    %v3422 = vmul.f32 %v3421, %v3399
    %v3423 = vmul.f32 %v3422, %v3421
    %v3424 = vmul.f32 0.5, %v3423
    %v3425 = vsub.f32 1.5, %v3424
    %v3426 = vmul.f32 %v3421, %v3425
    %vm3427 = vweird.f32 %v3399
    %vm3428 = vweird.f32 %v3421
    %vm3429 = vmor %vm3427, %vm3428
    %v3430 = vsel %vm3429, %v3421, %v3426
    %v3431 = vrsqrt.pop %v3400
    %v3432 = vmul.f32 %v3431, %v3400
    %v3433 = vmul.f32 %v3432, %v3431
    %v3434 = vmul.f32 0.5, %v3433
    %v3435 = vsub.f32 1.5, %v3434
    %v3436 = vmul.f32 %v3431, %v3435
    %vm3437 = vweird.f32 %v3400
    %vm3438 = vweird.f32 %v3431
    %vm3439 = vmor %vm3437, %vm3438
    %v3440 = vsel %vm3439, %v3431, %v3436
    %v3441 = vmul.f32 %v3357, %v3410
    %v3442 = vmul.f32 %v3358, %v3420
    %v3443 = vmul.f32 %v3359, %v3430
    %v3444 = vmul.f32 %v3360, %v3440
    %v3445 = vmul.f32 %v3361, %v3410
    %v3446 = vmul.f32 %v3362, %v3420
    %v3447 = vmul.f32 %v3363, %v3430
    %v3448 = vmul.f32 %v3364, %v3440
    %v3449 = vmul.f32 %v3365, %v3410
    %v3450 = vmul.f32 %v3366, %v3420
    %v3451 = vmul.f32 %v3367, %v3430
    %v3452 = vmul.f32 %v3368, %v3440
    %v3453 = vmul.f32 %v3369, %v3410
    %v3454 = vmul.f32 %v3370, %v3420
    %v3455 = vmul.f32 %v3371, %v3430
    %v3456 = vmul.f32 %v3372, %v3440
    %v3457 = vmul.f32 %v3373, %v3410
    %v3458 = vmul.f32 %v3374, %v3420
    %v3459 = vmul.f32 %v3375, %v3430
    %v3460 = vmul.f32 %v3376, %v3440
    %v3461 = vmul.f32 %v3377, %v3410
    %v3462 = vmul.f32 %v3378, %v3420
    %v3463 = vmul.f32 %v3379, %v3430
    %v3464 = vmul.f32 %v3380, %v3440
    %v3465 = vmul.f32 %v3381, %v3410
    %v3466 = vmul.f32 %v3382, %v3420
    %v3467 = vmul.f32 %v3383, %v3430
    %v3468 = vmul.f32 %v3384, %v3440
    %v3469 = vmul.f32 %v3385, %v3410
    %v3470 = vmul.f32 %v3386, %v3420
    %v3471 = vmul.f32 %v3387, %v3430
    %v3472 = vmul.f32 %v3388, %v3440
    %3473 = vset.pattern.permute.xlu0 10
    %3474 = vperm.xlu0 %3473, %v27
    %v3475 = vpop.permute.xlu0 %3474
    %3477 = vset.pattern.permute.xlu0 10
    %3478 = vperm.xlu0 %3477, %v28
    %v3479 = vpop.permute.xlu0 %3478
    %3481 = vset.pattern.permute.xlu0 10
    %3482 = vperm.xlu0 %3481, %v29
    %v3483 = vpop.permute.xlu0 %3482
    %3485 = vset.pattern.permute.xlu0 10
    %3486 = vperm.xlu0 %3485, %v30
    %v3487 = vpop.permute.xlu0 %3486
    %v3489 = vmul.f32 %v3441, %v3475
    %v3490 = vmul.f32 %v3442, %v3479
    %v3491 = vmul.f32 %v3443, %v3483
    %v3492 = vmul.f32 %v3444, %v3487
    %v3493 = vmul.f32 %v3445, %v3475
    %v3494 = vmul.f32 %v3446, %v3479
    %v3495 = vmul.f32 %v3447, %v3483
    %v3496 = vmul.f32 %v3448, %v3487
    %v3497 = vmul.f32 %v3449, %v3475
    %v3498 = vmul.f32 %v3450, %v3479
    %v3499 = vmul.f32 %v3451, %v3483
    %v3500 = vmul.f32 %v3452, %v3487
    %v3501 = vmul.f32 %v3453, %v3475
    %v3502 = vmul.f32 %v3454, %v3479
    %v3503 = vmul.f32 %v3455, %v3483
    %v3504 = vmul.f32 %v3456, %v3487
    %v3505 = vmul.f32 %v3457, %v3475
    %v3506 = vmul.f32 %v3458, %v3479
    %v3507 = vmul.f32 %v3459, %v3483
    %v3508 = vmul.f32 %v3460, %v3487
    %v3509 = vmul.f32 %v3461, %v3475
    %v3510 = vmul.f32 %v3462, %v3479
    %v3511 = vmul.f32 %v3463, %v3483
    %v3512 = vmul.f32 %v3464, %v3487
    %v3513 = vmul.f32 %v3465, %v3475
    %v3514 = vmul.f32 %v3466, %v3479
    %v3515 = vmul.f32 %v3467, %v3483
    %v3516 = vmul.f32 %v3468, %v3487
    %v3517 = vmul.f32 %v3469, %v3475
    %v3518 = vmul.f32 %v3470, %v3479
    %v3519 = vmul.f32 %v3471, %v3483
    %v3520 = vmul.f32 %v3472, %v3487
    %3521 = vset.pattern.permute.xlu0 11
    %3522 = vperm.xlu0 %3521, %v27
    %v3523 = vpop.permute.xlu0 %3522
    %3525 = vset.pattern.permute.xlu0 11
    %3526 = vperm.xlu0 %3525, %v28
    %v3527 = vpop.permute.xlu0 %3526
    %3529 = vset.pattern.permute.xlu0 11
    %3530 = vperm.xlu0 %3529, %v29
    %v3531 = vpop.permute.xlu0 %3530
    %3533 = vset.pattern.permute.xlu0 11
    %3534 = vperm.xlu0 %3533, %v30
    %v3535 = vpop.permute.xlu0 %3534
    %v3537 = vadd.f32 %v3489, %v3523
    %v3538 = vadd.f32 %v3490, %v3527
    %v3539 = vadd.f32 %v3491, %v3531
    %v3540 = vadd.f32 %v3492, %v3535
    %v3541 = vadd.f32 %v3493, %v3523
    %v3542 = vadd.f32 %v3494, %v3527
    %v3543 = vadd.f32 %v3495, %v3531
    %v3544 = vadd.f32 %v3496, %v3535
    %v3545 = vadd.f32 %v3497, %v3523
    %v3546 = vadd.f32 %v3498, %v3527
    %v3547 = vadd.f32 %v3499, %v3531
    %v3548 = vadd.f32 %v3500, %v3535
    %v3549 = vadd.f32 %v3501, %v3523
    %v3550 = vadd.f32 %v3502, %v3527
    %v3551 = vadd.f32 %v3503, %v3531
    %v3552 = vadd.f32 %v3504, %v3535
    %v3553 = vadd.f32 %v3505, %v3523
    %v3554 = vadd.f32 %v3506, %v3527
    %v3555 = vadd.f32 %v3507, %v3531
    %v3556 = vadd.f32 %v3508, %v3535
    %v3557 = vadd.f32 %v3509, %v3523
    %v3558 = vadd.f32 %v3510, %v3527
    %v3559 = vadd.f32 %v3511, %v3531
    %v3560 = vadd.f32 %v3512, %v3535
    %v3561 = vadd.f32 %v3513, %v3523
    %v3562 = vadd.f32 %v3514, %v3527
    %v3563 = vadd.f32 %v3515, %v3531
    %v3564 = vadd.f32 %v3516, %v3535
    %v3565 = vadd.f32 %v3517, %v3523
    %v3566 = vadd.f32 %v3518, %v3527
    %v3567 = vadd.f32 %v3519, %v3531
    %v3568 = vadd.f32 %v3520, %v3535
    %3601 = vrot.lane.b32.xlu0 %v3537, 127
    %v3602 = vpop.permute.xlu0 %3601
    %3603 = vrot.lane.b32.xlu0 %v3538, 127
    %v3604 = vpop.permute.xlu0 %3603
    %3605 = vrot.lane.b32.xlu0 %v3539, 127
    %v3606 = vpop.permute.xlu0 %3605
    %3607 = vrot.lane.b32.xlu0 %v3540, 127
    %v3608 = vpop.permute.xlu0 %3607
    %3609 = vrot.lane.b32.xlu0 %v3541, 127
    %v3610 = vpop.permute.xlu0 %3609
    %3611 = vrot.lane.b32.xlu0 %v3542, 127
    %v3612 = vpop.permute.xlu0 %3611
    %3613 = vrot.lane.b32.xlu0 %v3543, 127
    %v3614 = vpop.permute.xlu0 %3613
    %3615 = vrot.lane.b32.xlu0 %v3544, 127
    %v3616 = vpop.permute.xlu0 %3615
    %3617 = vrot.lane.b32.xlu0 %v3545, 127
    %v3618 = vpop.permute.xlu0 %3617
    %3619 = vrot.lane.b32.xlu0 %v3546, 127
    %v3620 = vpop.permute.xlu0 %3619
    %3621 = vrot.lane.b32.xlu0 %v3547, 127
    %v3622 = vpop.permute.xlu0 %3621
    %3623 = vrot.lane.b32.xlu0 %v3548, 127
    %v3624 = vpop.permute.xlu0 %3623
    %3625 = vrot.lane.b32.xlu0 %v3549, 127
    %v3626 = vpop.permute.xlu0 %3625
    %3627 = vrot.lane.b32.xlu0 %v3550, 127
    %v3628 = vpop.permute.xlu0 %3627
    %3629 = vrot.lane.b32.xlu0 %v3551, 127
    %v3630 = vpop.permute.xlu0 %3629
    %3631 = vrot.lane.b32.xlu0 %v3552, 127
    %v3632 = vpop.permute.xlu0 %3631
    %3633 = vrot.lane.b32.xlu0 %v3553, 127
    %v3634 = vpop.permute.xlu0 %3633
    %3635 = vrot.lane.b32.xlu0 %v3554, 127
    %v3636 = vpop.permute.xlu0 %3635
    %3637 = vrot.lane.b32.xlu0 %v3555, 127
    %v3638 = vpop.permute.xlu0 %3637
    %3639 = vrot.lane.b32.xlu0 %v3556, 127
    %v3640 = vpop.permute.xlu0 %3639
    %3641 = vrot.lane.b32.xlu0 %v3557, 127
    %v3642 = vpop.permute.xlu0 %3641
    %3643 = vrot.lane.b32.xlu0 %v3558, 127
    %v3644 = vpop.permute.xlu0 %3643
    %3645 = vrot.lane.b32.xlu0 %v3559, 127
    %v3646 = vpop.permute.xlu0 %3645
    %3647 = vrot.lane.b32.xlu0 %v3560, 127
    %v3648 = vpop.permute.xlu0 %3647
    %3649 = vrot.lane.b32.xlu0 %v3561, 127
    %v3650 = vpop.permute.xlu0 %3649
    %3651 = vrot.lane.b32.xlu0 %v3562, 127
    %v3652 = vpop.permute.xlu0 %3651
    %3653 = vrot.lane.b32.xlu0 %v3563, 127
    %v3654 = vpop.permute.xlu0 %3653
    %3655 = vrot.lane.b32.xlu0 %v3564, 127
    %v3656 = vpop.permute.xlu0 %3655
    %3657 = vrot.lane.b32.xlu0 %v3565, 127
    %v3658 = vpop.permute.xlu0 %3657
    %3659 = vrot.lane.b32.xlu0 %v3566, 127
    %v3660 = vpop.permute.xlu0 %3659
    %3661 = vrot.lane.b32.xlu0 %v3567, 127
    %v3662 = vpop.permute.xlu0 %3661
    %3663 = vrot.lane.b32.xlu0 %v3568, 127
    %v3664 = vpop.permute.xlu0 %3663
    %3697 = vrot.lane.b32.xlu0 %v3537, 126
    %v3698 = vpop.permute.xlu0 %3697
    %3699 = vrot.lane.b32.xlu0 %v3538, 126
    %v3700 = vpop.permute.xlu0 %3699
    %3701 = vrot.lane.b32.xlu0 %v3539, 126
    %v3702 = vpop.permute.xlu0 %3701
    %3703 = vrot.lane.b32.xlu0 %v3540, 126
    %v3704 = vpop.permute.xlu0 %3703
    %3705 = vrot.lane.b32.xlu0 %v3541, 126
    %v3706 = vpop.permute.xlu0 %3705
    %3707 = vrot.lane.b32.xlu0 %v3542, 126
    %v3708 = vpop.permute.xlu0 %3707
    %3709 = vrot.lane.b32.xlu0 %v3543, 126
    %v3710 = vpop.permute.xlu0 %3709
    %3711 = vrot.lane.b32.xlu0 %v3544, 126
    %v3712 = vpop.permute.xlu0 %3711
    %3713 = vrot.lane.b32.xlu0 %v3545, 126
    %v3714 = vpop.permute.xlu0 %3713
    %3715 = vrot.lane.b32.xlu0 %v3546, 126
    %v3716 = vpop.permute.xlu0 %3715
    %3717 = vrot.lane.b32.xlu0 %v3547, 126
    %v3718 = vpop.permute.xlu0 %3717
    %3719 = vrot.lane.b32.xlu0 %v3548, 126
    %v3720 = vpop.permute.xlu0 %3719
    %3721 = vrot.lane.b32.xlu0 %v3549, 126
    %v3722 = vpop.permute.xlu0 %3721
    %3723 = vrot.lane.b32.xlu0 %v3550, 126
    %v3724 = vpop.permute.xlu0 %3723
    %3725 = vrot.lane.b32.xlu0 %v3551, 126
    %v3726 = vpop.permute.xlu0 %3725
    %3727 = vrot.lane.b32.xlu0 %v3552, 126
    %v3728 = vpop.permute.xlu0 %3727
    %3729 = vrot.lane.b32.xlu0 %v3553, 126
    %v3730 = vpop.permute.xlu0 %3729
    %3731 = vrot.lane.b32.xlu0 %v3554, 126
    %v3732 = vpop.permute.xlu0 %3731
    %3733 = vrot.lane.b32.xlu0 %v3555, 126
    %v3734 = vpop.permute.xlu0 %3733
    %3735 = vrot.lane.b32.xlu0 %v3556, 126
    %v3736 = vpop.permute.xlu0 %3735
    %3737 = vrot.lane.b32.xlu0 %v3557, 126
    %v3738 = vpop.permute.xlu0 %3737
    %3739 = vrot.lane.b32.xlu0 %v3558, 126
    %v3740 = vpop.permute.xlu0 %3739
    %3741 = vrot.lane.b32.xlu0 %v3559, 126
    %v3742 = vpop.permute.xlu0 %3741
    %3743 = vrot.lane.b32.xlu0 %v3560, 126
    %v3744 = vpop.permute.xlu0 %3743
    %3745 = vrot.lane.b32.xlu0 %v3561, 126
    %v3746 = vpop.permute.xlu0 %3745
    %3747 = vrot.lane.b32.xlu0 %v3562, 126
    %v3748 = vpop.permute.xlu0 %3747
    %3749 = vrot.lane.b32.xlu0 %v3563, 126
    %v3750 = vpop.permute.xlu0 %3749
    %3751 = vrot.lane.b32.xlu0 %v3564, 126
    %v3752 = vpop.permute.xlu0 %3751
    %3753 = vrot.lane.b32.xlu0 %v3565, 126
    %v3754 = vpop.permute.xlu0 %3753
    %3755 = vrot.lane.b32.xlu0 %v3566, 126
    %v3756 = vpop.permute.xlu0 %3755
    %3757 = vrot.lane.b32.xlu0 %v3567, 126
    %v3758 = vpop.permute.xlu0 %3757
    %3759 = vrot.lane.b32.xlu0 %v3568, 126
    %v3760 = vpop.permute.xlu0 %3759
    %3793 = vrot.lane.b32.xlu0 %v3537, 125
    %v3794 = vpop.permute.xlu0 %3793
    %3795 = vrot.lane.b32.xlu0 %v3538, 125
    %v3796 = vpop.permute.xlu0 %3795
    %3797 = vrot.lane.b32.xlu0 %v3539, 125
    %v3798 = vpop.permute.xlu0 %3797
    %3799 = vrot.lane.b32.xlu0 %v3540, 125
    %v3800 = vpop.permute.xlu0 %3799
    %3801 = vrot.lane.b32.xlu0 %v3541, 125
    %v3802 = vpop.permute.xlu0 %3801
    %3803 = vrot.lane.b32.xlu0 %v3542, 125
    %v3804 = vpop.permute.xlu0 %3803
    %3805 = vrot.lane.b32.xlu0 %v3543, 125
    %v3806 = vpop.permute.xlu0 %3805
    %3807 = vrot.lane.b32.xlu0 %v3544, 125
    %v3808 = vpop.permute.xlu0 %3807
    %3809 = vrot.lane.b32.xlu0 %v3545, 125
    %v3810 = vpop.permute.xlu0 %3809
    %3811 = vrot.lane.b32.xlu0 %v3546, 125
    %v3812 = vpop.permute.xlu0 %3811
    %3813 = vrot.lane.b32.xlu0 %v3547, 125
    %v3814 = vpop.permute.xlu0 %3813
    %3815 = vrot.lane.b32.xlu0 %v3548, 125
    %v3816 = vpop.permute.xlu0 %3815
    %3817 = vrot.lane.b32.xlu0 %v3549, 125
    %v3818 = vpop.permute.xlu0 %3817
    %3819 = vrot.lane.b32.xlu0 %v3550, 125
    %v3820 = vpop.permute.xlu0 %3819
    %3821 = vrot.lane.b32.xlu0 %v3551, 125
    %v3822 = vpop.permute.xlu0 %3821
    %3823 = vrot.lane.b32.xlu0 %v3552, 125
    %v3824 = vpop.permute.xlu0 %3823
    %3825 = vrot.lane.b32.xlu0 %v3553, 125
    %v3826 = vpop.permute.xlu0 %3825
    %3827 = vrot.lane.b32.xlu0 %v3554, 125
    %v3828 = vpop.permute.xlu0 %3827
    %3829 = vrot.lane.b32.xlu0 %v3555, 125
    %v3830 = vpop.permute.xlu0 %3829
    %3831 = vrot.lane.b32.xlu0 %v3556, 125
    %v3832 = vpop.permute.xlu0 %3831
    %3833 = vrot.lane.b32.xlu0 %v3557, 125
    %v3834 = vpop.permute.xlu0 %3833
    %3835 = vrot.lane.b32.xlu0 %v3558, 125
    %v3836 = vpop.permute.xlu0 %3835
    %3837 = vrot.lane.b32.xlu0 %v3559, 125
    %v3838 = vpop.permute.xlu0 %3837
    %3839 = vrot.lane.b32.xlu0 %v3560, 125
    %v3840 = vpop.permute.xlu0 %3839
    %3841 = vrot.lane.b32.xlu0 %v3561, 125
    %v3842 = vpop.permute.xlu0 %3841
    %3843 = vrot.lane.b32.xlu0 %v3562, 125
    %v3844 = vpop.permute.xlu0 %3843
    %3845 = vrot.lane.b32.xlu0 %v3563, 125
    %v3846 = vpop.permute.xlu0 %3845
    %3847 = vrot.lane.b32.xlu0 %v3564, 125
    %v3848 = vpop.permute.xlu0 %3847
    %3849 = vrot.lane.b32.xlu0 %v3565, 125
    %v3850 = vpop.permute.xlu0 %3849
    %3851 = vrot.lane.b32.xlu0 %v3566, 125
    %v3852 = vpop.permute.xlu0 %3851
    %3853 = vrot.lane.b32.xlu0 %v3567, 125
    %v3854 = vpop.permute.xlu0 %3853
    %3855 = vrot.lane.b32.xlu0 %v3568, 125
    %v3856 = vpop.permute.xlu0 %3855
    %3889 = vrot.lane.b32.xlu0 %v3537, 124
    %v3890 = vpop.permute.xlu0 %3889
    %3891 = vrot.lane.b32.xlu0 %v3538, 124
    %v3892 = vpop.permute.xlu0 %3891
    %3893 = vrot.lane.b32.xlu0 %v3539, 124
    %v3894 = vpop.permute.xlu0 %3893
    %3895 = vrot.lane.b32.xlu0 %v3540, 124
    %v3896 = vpop.permute.xlu0 %3895
    %3897 = vrot.lane.b32.xlu0 %v3541, 124
    %v3898 = vpop.permute.xlu0 %3897
    %3899 = vrot.lane.b32.xlu0 %v3542, 124
    %v3900 = vpop.permute.xlu0 %3899
    %3901 = vrot.lane.b32.xlu0 %v3543, 124
    %v3902 = vpop.permute.xlu0 %3901
    %3903 = vrot.lane.b32.xlu0 %v3544, 124
    %v3904 = vpop.permute.xlu0 %3903
    %3905 = vrot.lane.b32.xlu0 %v3545, 124
    %v3906 = vpop.permute.xlu0 %3905
    %3907 = vrot.lane.b32.xlu0 %v3546, 124
    %v3908 = vpop.permute.xlu0 %3907
    %3909 = vrot.lane.b32.xlu0 %v3547, 124
    %v3910 = vpop.permute.xlu0 %3909
    %3911 = vrot.lane.b32.xlu0 %v3548, 124
    %v3912 = vpop.permute.xlu0 %3911
    %3913 = vrot.lane.b32.xlu0 %v3549, 124
    %v3914 = vpop.permute.xlu0 %3913
    %3915 = vrot.lane.b32.xlu0 %v3550, 124
    %v3916 = vpop.permute.xlu0 %3915
    %3917 = vrot.lane.b32.xlu0 %v3551, 124
    %v3918 = vpop.permute.xlu0 %3917
    %3919 = vrot.lane.b32.xlu0 %v3552, 124
    %v3920 = vpop.permute.xlu0 %3919
    %3921 = vrot.lane.b32.xlu0 %v3553, 124
    %v3922 = vpop.permute.xlu0 %3921
    %3923 = vrot.lane.b32.xlu0 %v3554, 124
    %v3924 = vpop.permute.xlu0 %3923
    %3925 = vrot.lane.b32.xlu0 %v3555, 124
    %v3926 = vpop.permute.xlu0 %3925
    %3927 = vrot.lane.b32.xlu0 %v3556, 124
    %v3928 = vpop.permute.xlu0 %3927
    %3929 = vrot.lane.b32.xlu0 %v3557, 124
    %v3930 = vpop.permute.xlu0 %3929
    %3931 = vrot.lane.b32.xlu0 %v3558, 124
    %v3932 = vpop.permute.xlu0 %3931
    %3933 = vrot.lane.b32.xlu0 %v3559, 124
    %v3934 = vpop.permute.xlu0 %3933
    %3935 = vrot.lane.b32.xlu0 %v3560, 124
    %v3936 = vpop.permute.xlu0 %3935
    %3937 = vrot.lane.b32.xlu0 %v3561, 124
    %v3938 = vpop.permute.xlu0 %3937
    %3939 = vrot.lane.b32.xlu0 %v3562, 124
    %v3940 = vpop.permute.xlu0 %3939
    %3941 = vrot.lane.b32.xlu0 %v3563, 124
    %v3942 = vpop.permute.xlu0 %3941
    %3943 = vrot.lane.b32.xlu0 %v3564, 124
    %v3944 = vpop.permute.xlu0 %3943
    %3945 = vrot.lane.b32.xlu0 %v3565, 124
    %v3946 = vpop.permute.xlu0 %3945
    %3947 = vrot.lane.b32.xlu0 %v3566, 124
    %v3948 = vpop.permute.xlu0 %3947
    %3949 = vrot.lane.b32.xlu0 %v3567, 124
    %v3950 = vpop.permute.xlu0 %3949
    %3951 = vrot.lane.b32.xlu0 %v3568, 124
    %v3952 = vpop.permute.xlu0 %3951
    %3985 = vrot.lane.b32.xlu0 %v3537, 123
    %v3986 = vpop.permute.xlu0 %3985
    %3987 = vrot.lane.b32.xlu0 %v3538, 123
    %v3988 = vpop.permute.xlu0 %3987
    %3989 = vrot.lane.b32.xlu0 %v3539, 123
    %v3990 = vpop.permute.xlu0 %3989
    %3991 = vrot.lane.b32.xlu0 %v3540, 123
    %v3992 = vpop.permute.xlu0 %3991
    %3993 = vrot.lane.b32.xlu0 %v3541, 123
    %v3994 = vpop.permute.xlu0 %3993
    %3995 = vrot.lane.b32.xlu0 %v3542, 123
    %v3996 = vpop.permute.xlu0 %3995
    %3997 = vrot.lane.b32.xlu0 %v3543, 123
    %v3998 = vpop.permute.xlu0 %3997
    %3999 = vrot.lane.b32.xlu0 %v3544, 123
    %v4000 = vpop.permute.xlu0 %3999
    %4001 = vrot.lane.b32.xlu0 %v3545, 123
    %v4002 = vpop.permute.xlu0 %4001
    %4003 = vrot.lane.b32.xlu0 %v3546, 123
    %v4004 = vpop.permute.xlu0 %4003
    %4005 = vrot.lane.b32.xlu0 %v3547, 123
    %v4006 = vpop.permute.xlu0 %4005
    %4007 = vrot.lane.b32.xlu0 %v3548, 123
    %v4008 = vpop.permute.xlu0 %4007
    %4009 = vrot.lane.b32.xlu0 %v3549, 123
    %v4010 = vpop.permute.xlu0 %4009
    %4011 = vrot.lane.b32.xlu0 %v3550, 123
    %v4012 = vpop.permute.xlu0 %4011
    %4013 = vrot.lane.b32.xlu0 %v3551, 123
    %v4014 = vpop.permute.xlu0 %4013
    %4015 = vrot.lane.b32.xlu0 %v3552, 123
    %v4016 = vpop.permute.xlu0 %4015
    %4017 = vrot.lane.b32.xlu0 %v3553, 123
    %v4018 = vpop.permute.xlu0 %4017
    %4019 = vrot.lane.b32.xlu0 %v3554, 123
    %v4020 = vpop.permute.xlu0 %4019
    %4021 = vrot.lane.b32.xlu0 %v3555, 123
    %v4022 = vpop.permute.xlu0 %4021
    %4023 = vrot.lane.b32.xlu0 %v3556, 123
    %v4024 = vpop.permute.xlu0 %4023
    %4025 = vrot.lane.b32.xlu0 %v3557, 123
    %v4026 = vpop.permute.xlu0 %4025
    %4027 = vrot.lane.b32.xlu0 %v3558, 123
    %v4028 = vpop.permute.xlu0 %4027
    %4029 = vrot.lane.b32.xlu0 %v3559, 123
    %v4030 = vpop.permute.xlu0 %4029
    %4031 = vrot.lane.b32.xlu0 %v3560, 123
    %v4032 = vpop.permute.xlu0 %4031
    %4033 = vrot.lane.b32.xlu0 %v3561, 123
    %v4034 = vpop.permute.xlu0 %4033
    %4035 = vrot.lane.b32.xlu0 %v3562, 123
    %v4036 = vpop.permute.xlu0 %4035
    %4037 = vrot.lane.b32.xlu0 %v3563, 123
    %v4038 = vpop.permute.xlu0 %4037
    %4039 = vrot.lane.b32.xlu0 %v3564, 123
    %v4040 = vpop.permute.xlu0 %4039
    %4041 = vrot.lane.b32.xlu0 %v3565, 123
    %v4042 = vpop.permute.xlu0 %4041
    %4043 = vrot.lane.b32.xlu0 %v3566, 123
    %v4044 = vpop.permute.xlu0 %4043
    %4045 = vrot.lane.b32.xlu0 %v3567, 123
    %v4046 = vpop.permute.xlu0 %4045
    %4047 = vrot.lane.b32.xlu0 %v3568, 123
    %v4048 = vpop.permute.xlu0 %4047
    %4081 = vrot.lane.b32.xlu0 %v3537, 122
    %v4082 = vpop.permute.xlu0 %4081
    %4083 = vrot.lane.b32.xlu0 %v3538, 122
    %v4084 = vpop.permute.xlu0 %4083
    %4085 = vrot.lane.b32.xlu0 %v3539, 122
    %v4086 = vpop.permute.xlu0 %4085
    %4087 = vrot.lane.b32.xlu0 %v3540, 122
    %v4088 = vpop.permute.xlu0 %4087
    %4089 = vrot.lane.b32.xlu0 %v3541, 122
    %v4090 = vpop.permute.xlu0 %4089
    %4091 = vrot.lane.b32.xlu0 %v3542, 122
    %v4092 = vpop.permute.xlu0 %4091
    %4093 = vrot.lane.b32.xlu0 %v3543, 122
    %v4094 = vpop.permute.xlu0 %4093
    %4095 = vrot.lane.b32.xlu0 %v3544, 122
    %v4096 = vpop.permute.xlu0 %4095
    %4097 = vrot.lane.b32.xlu0 %v3545, 122
    %v4098 = vpop.permute.xlu0 %4097
    %4099 = vrot.lane.b32.xlu0 %v3546, 122
    %v4100 = vpop.permute.xlu0 %4099
    %4101 = vrot.lane.b32.xlu0 %v3547, 122
    %v4102 = vpop.permute.xlu0 %4101
    %4103 = vrot.lane.b32.xlu0 %v3548, 122
    %v4104 = vpop.permute.xlu0 %4103
    %4105 = vrot.lane.b32.xlu0 %v3549, 122
    %v4106 = vpop.permute.xlu0 %4105
    %4107 = vrot.lane.b32.xlu0 %v3550, 122
    %v4108 = vpop.permute.xlu0 %4107
    %4109 = vrot.lane.b32.xlu0 %v3551, 122
    %v4110 = vpop.permute.xlu0 %4109
    %4111 = vrot.lane.b32.xlu0 %v3552, 122
    %v4112 = vpop.permute.xlu0 %4111
    %4113 = vrot.lane.b32.xlu0 %v3553, 122
    %v4114 = vpop.permute.xlu0 %4113
    %4115 = vrot.lane.b32.xlu0 %v3554, 122
    %v4116 = vpop.permute.xlu0 %4115
    %4117 = vrot.lane.b32.xlu0 %v3555, 122
    %v4118 = vpop.permute.xlu0 %4117
    %4119 = vrot.lane.b32.xlu0 %v3556, 122
    %v4120 = vpop.permute.xlu0 %4119
    %4121 = vrot.lane.b32.xlu0 %v3557, 122
    %v4122 = vpop.permute.xlu0 %4121
    %4123 = vrot.lane.b32.xlu0 %v3558, 122
    %v4124 = vpop.permute.xlu0 %4123
    %4125 = vrot.lane.b32.xlu0 %v3559, 122
    %v4126 = vpop.permute.xlu0 %4125
    %4127 = vrot.lane.b32.xlu0 %v3560, 122
    %v4128 = vpop.permute.xlu0 %4127
    %4129 = vrot.lane.b32.xlu0 %v3561, 122
    %v4130 = vpop.permute.xlu0 %4129
    %4131 = vrot.lane.b32.xlu0 %v3562, 122
    %v4132 = vpop.permute.xlu0 %4131
    %4133 = vrot.lane.b32.xlu0 %v3563, 122
    %v4134 = vpop.permute.xlu0 %4133
    %4135 = vrot.lane.b32.xlu0 %v3564, 122
    %v4136 = vpop.permute.xlu0 %4135
    %4137 = vrot.lane.b32.xlu0 %v3565, 122
    %v4138 = vpop.permute.xlu0 %4137
    %4139 = vrot.lane.b32.xlu0 %v3566, 122
    %v4140 = vpop.permute.xlu0 %4139
    %4141 = vrot.lane.b32.xlu0 %v3567, 122
    %v4142 = vpop.permute.xlu0 %4141
    %4143 = vrot.lane.b32.xlu0 %v3568, 122
    %v4144 = vpop.permute.xlu0 %4143
    %4177 = vrot.lane.b32.xlu0 %v3537, 121
    %v4178 = vpop.permute.xlu0 %4177
    %4179 = vrot.lane.b32.xlu0 %v3538, 121
    %v4180 = vpop.permute.xlu0 %4179
    %4181 = vrot.lane.b32.xlu0 %v3539, 121
    %v4182 = vpop.permute.xlu0 %4181
    %4183 = vrot.lane.b32.xlu0 %v3540, 121
    %v4184 = vpop.permute.xlu0 %4183
    %4185 = vrot.lane.b32.xlu0 %v3541, 121
    %v4186 = vpop.permute.xlu0 %4185
    %4187 = vrot.lane.b32.xlu0 %v3542, 121
    %v4188 = vpop.permute.xlu0 %4187
    %4189 = vrot.lane.b32.xlu0 %v3543, 121
    %v4190 = vpop.permute.xlu0 %4189
    %4191 = vrot.lane.b32.xlu0 %v3544, 121
    %v4192 = vpop.permute.xlu0 %4191
    %4193 = vrot.lane.b32.xlu0 %v3545, 121
    %v4194 = vpop.permute.xlu0 %4193
    %4195 = vrot.lane.b32.xlu0 %v3546, 121
    %v4196 = vpop.permute.xlu0 %4195
    %4197 = vrot.lane.b32.xlu0 %v3547, 121
    %v4198 = vpop.permute.xlu0 %4197
    %4199 = vrot.lane.b32.xlu0 %v3548, 121
    %v4200 = vpop.permute.xlu0 %4199
    %4201 = vrot.lane.b32.xlu0 %v3549, 121
    %v4202 = vpop.permute.xlu0 %4201
    %4203 = vrot.lane.b32.xlu0 %v3550, 121
    %v4204 = vpop.permute.xlu0 %4203
    %4205 = vrot.lane.b32.xlu0 %v3551, 121
    %v4206 = vpop.permute.xlu0 %4205
    %4207 = vrot.lane.b32.xlu0 %v3552, 121
    %v4208 = vpop.permute.xlu0 %4207
    %4209 = vrot.lane.b32.xlu0 %v3553, 121
    %v4210 = vpop.permute.xlu0 %4209
    %4211 = vrot.lane.b32.xlu0 %v3554, 121
    %v4212 = vpop.permute.xlu0 %4211
    %4213 = vrot.lane.b32.xlu0 %v3555, 121
    %v4214 = vpop.permute.xlu0 %4213
    %4215 = vrot.lane.b32.xlu0 %v3556, 121
    %v4216 = vpop.permute.xlu0 %4215
    %4217 = vrot.lane.b32.xlu0 %v3557, 121
    %v4218 = vpop.permute.xlu0 %4217
    %4219 = vrot.lane.b32.xlu0 %v3558, 121
    %v4220 = vpop.permute.xlu0 %4219
    %4221 = vrot.lane.b32.xlu0 %v3559, 121
    %v4222 = vpop.permute.xlu0 %4221
    %4223 = vrot.lane.b32.xlu0 %v3560, 121
    %v4224 = vpop.permute.xlu0 %4223
    %4225 = vrot.lane.b32.xlu0 %v3561, 121
    %v4226 = vpop.permute.xlu0 %4225
    %4227 = vrot.lane.b32.xlu0 %v3562, 121
    %v4228 = vpop.permute.xlu0 %4227
    %4229 = vrot.lane.b32.xlu0 %v3563, 121
    %v4230 = vpop.permute.xlu0 %4229
    %4231 = vrot.lane.b32.xlu0 %v3564, 121
    %v4232 = vpop.permute.xlu0 %4231
    %4233 = vrot.lane.b32.xlu0 %v3565, 121
    %v4234 = vpop.permute.xlu0 %4233
    %4235 = vrot.lane.b32.xlu0 %v3566, 121
    %v4236 = vpop.permute.xlu0 %4235
    %4237 = vrot.lane.b32.xlu0 %v3567, 121
    %v4238 = vpop.permute.xlu0 %4237
    %4239 = vrot.lane.b32.xlu0 %v3568, 121
    %v4240 = vpop.permute.xlu0 %4239
    %v4273 = vld [vmem:[%s3] sm:$0xff]
    %v4274 = vld [vmem:[%s3 + $0x8] sm:$0xff]
    %v4275 = vld [vmem:[%s3 + $0x10] sm:$0xff]
    %v4276 = vld [vmem:[%s3 + $0x18] sm:$0xff]
    %4277 = vmatpush.msra.mxu0 %v3800
    %4278 = vmatpush.msra.mxu0 %v3798
    %4279 = vmatpush.msra.mxu0 %v3796
    %4280 = vmatpush.msra.mxu0 %v3794
    %4281 = vmatpush.msra.mxu0 %v3704
    %4282 = vmatpush.msra.mxu0 %v3702
    %4283 = vmatpush.msra.mxu0 %v3700
    %4284 = vmatpush.msra.mxu0 %v3698
    %4285 = vmatpush.msra.mxu0 %v3608
    %4286 = vmatpush.msra.mxu0 %v3606
    %4287 = vmatpush.msra.mxu0 %v3604
    %4288 = vmatpush.msra.mxu0 %v3602
    %4289 = vmatpush.msra.mxu0 %v3540
    %4290 = vmatpush.msra.mxu0 %v3539
    %4291 = vmatpush.msra.mxu0 %v3538
    %4292 = vmatpush.msra.mxu0 %v3537
    %4293 = vmatmul.f32.gmra.mxu0 %v4273
    %v4294 = vpop.f32.mrf.mxu0
    %v4295 = vadd.f32 0.0, %v4294
    %4296 = vmatmul.f32.gmra.mxu0 %v4275
    %v4297 = vpop.f32.mrf.mxu0
    %v4298 = vadd.f32 0.0, %v4297
    %4299 = vdwg.mxu0
    %4300 = vmatpush.msra.mxu0 %v4184
    %4301 = vmatpush.msra.mxu0 %v4182
    %4302 = vmatpush.msra.mxu0 %v4180
    %4303 = vmatpush.msra.mxu0 %v4178
    %4304 = vmatpush.msra.mxu0 %v4088
    %4305 = vmatpush.msra.mxu0 %v4086
    %4306 = vmatpush.msra.mxu0 %v4084
    %4307 = vmatpush.msra.mxu0 %v4082
    %4308 = vmatpush.msra.mxu0 %v3992
    %4309 = vmatpush.msra.mxu0 %v3990
    %4310 = vmatpush.msra.mxu0 %v3988
    %4311 = vmatpush.msra.mxu0 %v3986
    %4312 = vmatpush.msra.mxu0 %v3896
    %4313 = vmatpush.msra.mxu0 %v3894
    %4314 = vmatpush.msra.mxu0 %v3892
    %4315 = vmatpush.msra.mxu0 %v3890
    %4316 = vmatmul.f32.gmra.mxu0 %v4274
    %v4317 = vpop.f32.mrf.mxu0
    %v4318 = vadd.f32 %v4295, %v4317
    %4319 = vmatmul.f32.gmra.mxu0 %v4276
    %v4320 = vpop.f32.mrf.mxu0
    %v4321 = vadd.f32 %v4298, %v4320
    %4322 = vdwg.mxu0
    %4323 = vmatpush.msra.mxu0 %v3808
    %4324 = vmatpush.msra.mxu0 %v3806
    %4325 = vmatpush.msra.mxu0 %v3804
    %4326 = vmatpush.msra.mxu0 %v3802
    %4327 = vmatpush.msra.mxu0 %v3712
    %4328 = vmatpush.msra.mxu0 %v3710
    %4329 = vmatpush.msra.mxu0 %v3708
    %4330 = vmatpush.msra.mxu0 %v3706
    %4331 = vmatpush.msra.mxu0 %v3616
    %4332 = vmatpush.msra.mxu0 %v3614
    %4333 = vmatpush.msra.mxu0 %v3612
    %4334 = vmatpush.msra.mxu0 %v3610
    %4335 = vmatpush.msra.mxu0 %v3544
    %4336 = vmatpush.msra.mxu0 %v3543
    %4337 = vmatpush.msra.mxu0 %v3542
    %4338 = vmatpush.msra.mxu0 %v3541
    %4339 = vmatmul.f32.gmra.mxu0 %v4273
    %v4340 = vpop.f32.mrf.mxu0
    %v4341 = vadd.f32 0.0, %v4340
    %4342 = vmatmul.f32.gmra.mxu0 %v4275
    %v4343 = vpop.f32.mrf.mxu0
    %v4344 = vadd.f32 0.0, %v4343
    %4345 = vdwg.mxu0
    %4346 = vmatpush.msra.mxu0 %v4192
    %4347 = vmatpush.msra.mxu0 %v4190
    %4348 = vmatpush.msra.mxu0 %v4188
    %4349 = vmatpush.msra.mxu0 %v4186
    %4350 = vmatpush.msra.mxu0 %v4096
    %4351 = vmatpush.msra.mxu0 %v4094
    %4352 = vmatpush.msra.mxu0 %v4092
    %4353 = vmatpush.msra.mxu0 %v4090
    %4354 = vmatpush.msra.mxu0 %v4000
    %4355 = vmatpush.msra.mxu0 %v3998
    %4356 = vmatpush.msra.mxu0 %v3996
    %4357 = vmatpush.msra.mxu0 %v3994
    %4358 = vmatpush.msra.mxu0 %v3904
    %4359 = vmatpush.msra.mxu0 %v3902
    %4360 = vmatpush.msra.mxu0 %v3900
    %4361 = vmatpush.msra.mxu0 %v3898
    %4362 = vmatmul.f32.gmra.mxu0 %v4274
    %v4363 = vpop.f32.mrf.mxu0
    %v4364 = vadd.f32 %v4341, %v4363
    %4365 = vmatmul.f32.gmra.mxu0 %v4276
    %v4366 = vpop.f32.mrf.mxu0
    %v4367 = vadd.f32 %v4344, %v4366
    %4368 = vdwg.mxu0
    %4369 = vmatpush.msra.mxu0 %v3816
    %4370 = vmatpush.msra.mxu0 %v3814
    %4371 = vmatpush.msra.mxu0 %v3812
    %4372 = vmatpush.msra.mxu0 %v3810
    %4373 = vmatpush.msra.mxu0 %v3720
    %4374 = vmatpush.msra.mxu0 %v3718
    %4375 = vmatpush.msra.mxu0 %v3716
    %4376 = vmatpush.msra.mxu0 %v3714
    %4377 = vmatpush.msra.mxu0 %v3624
    %4378 = vmatpush.msra.mxu0 %v3622
    %4379 = vmatpush.msra.mxu0 %v3620
    %4380 = vmatpush.msra.mxu0 %v3618
    %4381 = vmatpush.msra.mxu0 %v3548
    %4382 = vmatpush.msra.mxu0 %v3547
    %4383 = vmatpush.msra.mxu0 %v3546
    %4384 = vmatpush.msra.mxu0 %v3545
    %4385 = vmatmul.f32.gmra.mxu0 %v4273
    %v4386 = vpop.f32.mrf.mxu0
    %v4387 = vadd.f32 0.0, %v4386
    %4388 = vmatmul.f32.gmra.mxu0 %v4275
    %v4389 = vpop.f32.mrf.mxu0
    %v4390 = vadd.f32 0.0, %v4389
    %4391 = vdwg.mxu0
    %4392 = vmatpush.msra.mxu0 %v4200
    %4393 = vmatpush.msra.mxu0 %v4198
    %4394 = vmatpush.msra.mxu0 %v4196
    %4395 = vmatpush.msra.mxu0 %v4194
    %4396 = vmatpush.msra.mxu0 %v4104
    %4397 = vmatpush.msra.mxu0 %v4102
    %4398 = vmatpush.msra.mxu0 %v4100
    %4399 = vmatpush.msra.mxu0 %v4098
    %4400 = vmatpush.msra.mxu0 %v4008
    %4401 = vmatpush.msra.mxu0 %v4006
    %4402 = vmatpush.msra.mxu0 %v4004
    %4403 = vmatpush.msra.mxu0 %v4002
    %4404 = vmatpush.msra.mxu0 %v3912
    %4405 = vmatpush.msra.mxu0 %v3910
    %4406 = vmatpush.msra.mxu0 %v3908
    %4407 = vmatpush.msra.mxu0 %v3906
    %4408 = vmatmul.f32.gmra.mxu0 %v4274
    %v4409 = vpop.f32.mrf.mxu0
    %v4410 = vadd.f32 %v4387, %v4409
    %4411 = vmatmul.f32.gmra.mxu0 %v4276
    %v4412 = vpop.f32.mrf.mxu0
    %v4413 = vadd.f32 %v4390, %v4412
    %4414 = vdwg.mxu0
    %4415 = vmatpush.msra.mxu0 %v3824
    %4416 = vmatpush.msra.mxu0 %v3822
    %4417 = vmatpush.msra.mxu0 %v3820
    %4418 = vmatpush.msra.mxu0 %v3818
    %4419 = vmatpush.msra.mxu0 %v3728
    %4420 = vmatpush.msra.mxu0 %v3726
    %4421 = vmatpush.msra.mxu0 %v3724
    %4422 = vmatpush.msra.mxu0 %v3722
    %4423 = vmatpush.msra.mxu0 %v3632
    %4424 = vmatpush.msra.mxu0 %v3630
    %4425 = vmatpush.msra.mxu0 %v3628
    %4426 = vmatpush.msra.mxu0 %v3626
    %4427 = vmatpush.msra.mxu0 %v3552
    %4428 = vmatpush.msra.mxu0 %v3551
    %4429 = vmatpush.msra.mxu0 %v3550
    %4430 = vmatpush.msra.mxu0 %v3549
    %4431 = vmatmul.f32.gmra.mxu0 %v4273
    %v4432 = vpop.f32.mrf.mxu0
    %v4433 = vadd.f32 0.0, %v4432
    %4434 = vmatmul.f32.gmra.mxu0 %v4275
    %v4435 = vpop.f32.mrf.mxu0
    %v4436 = vadd.f32 0.0, %v4435
    %4437 = vdwg.mxu0
    %4438 = vmatpush.msra.mxu0 %v4208
    %4439 = vmatpush.msra.mxu0 %v4206
    %4440 = vmatpush.msra.mxu0 %v4204
    %4441 = vmatpush.msra.mxu0 %v4202
    %4442 = vmatpush.msra.mxu0 %v4112
    %4443 = vmatpush.msra.mxu0 %v4110
    %4444 = vmatpush.msra.mxu0 %v4108
    %4445 = vmatpush.msra.mxu0 %v4106
    %4446 = vmatpush.msra.mxu0 %v4016
    %4447 = vmatpush.msra.mxu0 %v4014
    %4448 = vmatpush.msra.mxu0 %v4012
    %4449 = vmatpush.msra.mxu0 %v4010
    %4450 = vmatpush.msra.mxu0 %v3920
    %4451 = vmatpush.msra.mxu0 %v3918
    %4452 = vmatpush.msra.mxu0 %v3916
    %4453 = vmatpush.msra.mxu0 %v3914
    %4454 = vmatmul.f32.gmra.mxu0 %v4274
    %v4455 = vpop.f32.mrf.mxu0
    %v4456 = vadd.f32 %v4433, %v4455
    %4457 = vmatmul.f32.gmra.mxu0 %v4276
    %v4458 = vpop.f32.mrf.mxu0
    %v4459 = vadd.f32 %v4436, %v4458
    %4460 = vdwg.mxu0
    %4461 = vmatpush.msra.mxu0 %v3832
    %4462 = vmatpush.msra.mxu0 %v3830
    %4463 = vmatpush.msra.mxu0 %v3828
    %4464 = vmatpush.msra.mxu0 %v3826
    %4465 = vmatpush.msra.mxu0 %v3736
    %4466 = vmatpush.msra.mxu0 %v3734
    %4467 = vmatpush.msra.mxu0 %v3732
    %4468 = vmatpush.msra.mxu0 %v3730
    %4469 = vmatpush.msra.mxu0 %v3640
    %4470 = vmatpush.msra.mxu0 %v3638
    %4471 = vmatpush.msra.mxu0 %v3636
    %4472 = vmatpush.msra.mxu0 %v3634
    %4473 = vmatpush.msra.mxu0 %v3556
    %4474 = vmatpush.msra.mxu0 %v3555
    %4475 = vmatpush.msra.mxu0 %v3554
    %4476 = vmatpush.msra.mxu0 %v3553
    %4477 = vmatmul.f32.gmra.mxu0 %v4273
    %v4478 = vpop.f32.mrf.mxu0
    %v4479 = vadd.f32 0.0, %v4478
    %4480 = vmatmul.f32.gmra.mxu0 %v4275
    %v4481 = vpop.f32.mrf.mxu0
    %v4482 = vadd.f32 0.0, %v4481
    %4483 = vdwg.mxu0
    %4484 = vmatpush.msra.mxu0 %v4216
    %4485 = vmatpush.msra.mxu0 %v4214
    %4486 = vmatpush.msra.mxu0 %v4212
    %4487 = vmatpush.msra.mxu0 %v4210
    %4488 = vmatpush.msra.mxu0 %v4120
    %4489 = vmatpush.msra.mxu0 %v4118
    %4490 = vmatpush.msra.mxu0 %v4116
    %4491 = vmatpush.msra.mxu0 %v4114
    %4492 = vmatpush.msra.mxu0 %v4024
    %4493 = vmatpush.msra.mxu0 %v4022
    %4494 = vmatpush.msra.mxu0 %v4020
    %4495 = vmatpush.msra.mxu0 %v4018
    %4496 = vmatpush.msra.mxu0 %v3928
    %4497 = vmatpush.msra.mxu0 %v3926
    %4498 = vmatpush.msra.mxu0 %v3924
    %4499 = vmatpush.msra.mxu0 %v3922
    %4500 = vmatmul.f32.gmra.mxu0 %v4274
    %v4501 = vpop.f32.mrf.mxu0
    %v4502 = vadd.f32 %v4479, %v4501
    %4503 = vmatmul.f32.gmra.mxu0 %v4276
    %v4504 = vpop.f32.mrf.mxu0
    %v4505 = vadd.f32 %v4482, %v4504
    %4506 = vdwg.mxu0
    %4507 = vmatpush.msra.mxu0 %v3840
    %4508 = vmatpush.msra.mxu0 %v3838
    %4509 = vmatpush.msra.mxu0 %v3836
    %4510 = vmatpush.msra.mxu0 %v3834
    %4511 = vmatpush.msra.mxu0 %v3744
    %4512 = vmatpush.msra.mxu0 %v3742
    %4513 = vmatpush.msra.mxu0 %v3740
    %4514 = vmatpush.msra.mxu0 %v3738
    %4515 = vmatpush.msra.mxu0 %v3648
    %4516 = vmatpush.msra.mxu0 %v3646
    %4517 = vmatpush.msra.mxu0 %v3644
    %4518 = vmatpush.msra.mxu0 %v3642
    %4519 = vmatpush.msra.mxu0 %v3560
    %4520 = vmatpush.msra.mxu0 %v3559
    %4521 = vmatpush.msra.mxu0 %v3558
    %4522 = vmatpush.msra.mxu0 %v3557
    %4523 = vmatmul.f32.gmra.mxu0 %v4273
    %v4524 = vpop.f32.mrf.mxu0
    %v4525 = vadd.f32 0.0, %v4524
    %4526 = vmatmul.f32.gmra.mxu0 %v4275
    %v4527 = vpop.f32.mrf.mxu0
    %v4528 = vadd.f32 0.0, %v4527
    %4529 = vdwg.mxu0
    %4530 = vmatpush.msra.mxu0 %v4224
    %4531 = vmatpush.msra.mxu0 %v4222
    %4532 = vmatpush.msra.mxu0 %v4220
    %4533 = vmatpush.msra.mxu0 %v4218
    %4534 = vmatpush.msra.mxu0 %v4128
    %4535 = vmatpush.msra.mxu0 %v4126
    %4536 = vmatpush.msra.mxu0 %v4124
    %4537 = vmatpush.msra.mxu0 %v4122
    %4538 = vmatpush.msra.mxu0 %v4032
    %4539 = vmatpush.msra.mxu0 %v4030
    %4540 = vmatpush.msra.mxu0 %v4028
    %4541 = vmatpush.msra.mxu0 %v4026
    %4542 = vmatpush.msra.mxu0 %v3936
    %4543 = vmatpush.msra.mxu0 %v3934
    %4544 = vmatpush.msra.mxu0 %v3932
    %4545 = vmatpush.msra.mxu0 %v3930
    %4546 = vmatmul.f32.gmra.mxu0 %v4274
    %v4547 = vpop.f32.mrf.mxu0
    %v4548 = vadd.f32 %v4525, %v4547
    %4549 = vmatmul.f32.gmra.mxu0 %v4276
    %v4550 = vpop.f32.mrf.mxu0
    %v4551 = vadd.f32 %v4528, %v4550
    %4552 = vdwg.mxu0
    %4553 = vmatpush.msra.mxu0 %v3848
    %4554 = vmatpush.msra.mxu0 %v3846
    %4555 = vmatpush.msra.mxu0 %v3844
    %4556 = vmatpush.msra.mxu0 %v3842
    %4557 = vmatpush.msra.mxu0 %v3752
    %4558 = vmatpush.msra.mxu0 %v3750
    %4559 = vmatpush.msra.mxu0 %v3748
    %4560 = vmatpush.msra.mxu0 %v3746
    %4561 = vmatpush.msra.mxu0 %v3656
    %4562 = vmatpush.msra.mxu0 %v3654
    %4563 = vmatpush.msra.mxu0 %v3652
    %4564 = vmatpush.msra.mxu0 %v3650
    %4565 = vmatpush.msra.mxu0 %v3564
    %4566 = vmatpush.msra.mxu0 %v3563
    %4567 = vmatpush.msra.mxu0 %v3562
    %4568 = vmatpush.msra.mxu0 %v3561
    %4569 = vmatmul.f32.gmra.mxu0 %v4273
    %v4570 = vpop.f32.mrf.mxu0
    %v4571 = vadd.f32 0.0, %v4570
    %4572 = vmatmul.f32.gmra.mxu0 %v4275
    %v4573 = vpop.f32.mrf.mxu0
    %v4574 = vadd.f32 0.0, %v4573
    %4575 = vdwg.mxu0
    %4576 = vmatpush.msra.mxu0 %v4232
    %4577 = vmatpush.msra.mxu0 %v4230
    %4578 = vmatpush.msra.mxu0 %v4228
    %4579 = vmatpush.msra.mxu0 %v4226
    %4580 = vmatpush.msra.mxu0 %v4136
    %4581 = vmatpush.msra.mxu0 %v4134
    %4582 = vmatpush.msra.mxu0 %v4132
    %4583 = vmatpush.msra.mxu0 %v4130
    %4584 = vmatpush.msra.mxu0 %v4040
    %4585 = vmatpush.msra.mxu0 %v4038
    %4586 = vmatpush.msra.mxu0 %v4036
    %4587 = vmatpush.msra.mxu0 %v4034
    %4588 = vmatpush.msra.mxu0 %v3944
    %4589 = vmatpush.msra.mxu0 %v3942
    %4590 = vmatpush.msra.mxu0 %v3940
    %4591 = vmatpush.msra.mxu0 %v3938
    %4592 = vmatmul.f32.gmra.mxu0 %v4274
    %v4593 = vpop.f32.mrf.mxu0
    %v4594 = vadd.f32 %v4571, %v4593
    %4595 = vmatmul.f32.gmra.mxu0 %v4276
    %v4596 = vpop.f32.mrf.mxu0
    %v4597 = vadd.f32 %v4574, %v4596
    %4598 = vdwg.mxu0
    %4599 = vmatpush.msra.mxu0 %v3856
    %4600 = vmatpush.msra.mxu0 %v3854
    %4601 = vmatpush.msra.mxu0 %v3852
    %4602 = vmatpush.msra.mxu0 %v3850
    %4603 = vmatpush.msra.mxu0 %v3760
    %4604 = vmatpush.msra.mxu0 %v3758
    %4605 = vmatpush.msra.mxu0 %v3756
    %4606 = vmatpush.msra.mxu0 %v3754
    %4607 = vmatpush.msra.mxu0 %v3664
    %4608 = vmatpush.msra.mxu0 %v3662
    %4609 = vmatpush.msra.mxu0 %v3660
    %4610 = vmatpush.msra.mxu0 %v3658
    %4611 = vmatpush.msra.mxu0 %v3568
    %4612 = vmatpush.msra.mxu0 %v3567
    %4613 = vmatpush.msra.mxu0 %v3566
    %4614 = vmatpush.msra.mxu0 %v3565
    %4615 = vmatmul.f32.gmra.mxu0 %v4273
    %v4616 = vpop.f32.mrf.mxu0
    %v4617 = vadd.f32 0.0, %v4616
    %4618 = vmatmul.f32.gmra.mxu0 %v4275
    %v4619 = vpop.f32.mrf.mxu0
    %v4620 = vadd.f32 0.0, %v4619
    %4621 = vdwg.mxu0
    %4622 = vmatpush.msra.mxu0 %v4240
    %4623 = vmatpush.msra.mxu0 %v4238
    %4624 = vmatpush.msra.mxu0 %v4236
    %4625 = vmatpush.msra.mxu0 %v4234
    %4626 = vmatpush.msra.mxu0 %v4144
    %4627 = vmatpush.msra.mxu0 %v4142
    %4628 = vmatpush.msra.mxu0 %v4140
    %4629 = vmatpush.msra.mxu0 %v4138
    %4630 = vmatpush.msra.mxu0 %v4048
    %4631 = vmatpush.msra.mxu0 %v4046
    %4632 = vmatpush.msra.mxu0 %v4044
    %4633 = vmatpush.msra.mxu0 %v4042
    %4634 = vmatpush.msra.mxu0 %v3952
    %4635 = vmatpush.msra.mxu0 %v3950
    %4636 = vmatpush.msra.mxu0 %v3948
    %4637 = vmatpush.msra.mxu0 %v3946
    %4638 = vmatmul.f32.gmra.mxu0 %v4274
    %v4639 = vpop.f32.mrf.mxu0
    %v4640 = vadd.f32 %v4617, %v4639
    %4641 = vmatmul.f32.gmra.mxu0 %v4276
    %v4642 = vpop.f32.mrf.mxu0
    %v4643 = vadd.f32 %v4620, %v4642
    %4644 = vdwg.mxu0
    %vm4645 = vcmask 121856
    %v4646 = vsel %vm4645, %v4318, 0.0
    %4647 = vadd.xlane.f32.xlu0 %v4646
    %v4648 = vpop.xlane.xlu0 %4647
    %v4649 = vsel %vm4645, %v4321, 0.0
    %4650 = vadd.xlane.f32.xlu0 %v4649
    %v4651 = vpop.xlane.xlu0 %4650
    %v4652 = vsel %vm4645, %v4364, 0.0
    %4653 = vadd.xlane.f32.xlu0 %v4652
    %v4654 = vpop.xlane.xlu0 %4653
    %v4655 = vsel %vm4645, %v4367, 0.0
    %4656 = vadd.xlane.f32.xlu0 %v4655
    %v4657 = vpop.xlane.xlu0 %4656
    %v4658 = vsel %vm4645, %v4410, 0.0
    %4659 = vadd.xlane.f32.xlu0 %v4658
    %v4660 = vpop.xlane.xlu0 %4659
    %v4661 = vsel %vm4645, %v4413, 0.0
    %4662 = vadd.xlane.f32.xlu0 %v4661
    %v4663 = vpop.xlane.xlu0 %4662
    %v4664 = vsel %vm4645, %v4456, 0.0
    %4665 = vadd.xlane.f32.xlu0 %v4664
    %v4666 = vpop.xlane.xlu0 %4665
    %v4667 = vsel %vm4645, %v4459, 0.0
    %4668 = vadd.xlane.f32.xlu0 %v4667
    %v4669 = vpop.xlane.xlu0 %4668
    %v4670 = vsel %vm4645, %v4502, 0.0
    %4671 = vadd.xlane.f32.xlu0 %v4670
    %v4672 = vpop.xlane.xlu0 %4671
    %v4673 = vsel %vm4645, %v4505, 0.0
    %4674 = vadd.xlane.f32.xlu0 %v4673
    %v4675 = vpop.xlane.xlu0 %4674
    %v4676 = vsel %vm4645, %v4548, 0.0
    %4677 = vadd.xlane.f32.xlu0 %v4676
    %v4678 = vpop.xlane.xlu0 %4677
    %v4679 = vsel %vm4645, %v4551, 0.0
    %4680 = vadd.xlane.f32.xlu0 %v4679
    %v4681 = vpop.xlane.xlu0 %4680
    %v4682 = vsel %vm4645, %v4594, 0.0
    %4683 = vadd.xlane.f32.xlu0 %v4682
    %v4684 = vpop.xlane.xlu0 %4683
    %v4685 = vsel %vm4645, %v4597, 0.0
    %4686 = vadd.xlane.f32.xlu0 %v4685
    %v4687 = vpop.xlane.xlu0 %4686
    %v4688 = vsel %vm4645, %v4640, 0.0
    %4689 = vadd.xlane.f32.xlu0 %v4688
    %v4690 = vpop.xlane.xlu0 %4689
    %v4691 = vsel %vm4645, %v4643, 0.0
    %4692 = vadd.xlane.f32.xlu0 %v4691
    %v4693 = vpop.xlane.xlu0 %4692
    %v4694 = vrcp.pop 15.0
    %v4695 = vmul.f32 15.0, %v4694
    %v4696 = vsub.f32 1.0, %v4695
    %v4697 = vmul.f32 %v4694, %v4696
    %v4698 = vadd.f32 %v4694, %v4697
    %vm4699 = vweird.f32 %v4694
    %v4700 = vsel %vm4699, %v4694, %v4698
    %v4701 = vmul.f32 %v4648, %v4700
    %v4702 = vmul.f32 %v4651, %v4700
    %v4703 = vmul.f32 %v4654, %v4700
    %v4704 = vmul.f32 %v4657, %v4700
    %v4705 = vmul.f32 %v4660, %v4700
    %v4706 = vmul.f32 %v4663, %v4700
    %v4707 = vmul.f32 %v4666, %v4700
    %v4708 = vmul.f32 %v4669, %v4700
    %v4709 = vmul.f32 %v4672, %v4700
    %v4710 = vmul.f32 %v4675, %v4700
    %v4711 = vmul.f32 %v4678, %v4700
    %v4712 = vmul.f32 %v4681, %v4700
    %v4713 = vmul.f32 %v4684, %v4700
    %v4714 = vmul.f32 %v4687, %v4700
    %v4715 = vmul.f32 %v4690, %v4700
    %v4716 = vmul.f32 %v4693, %v4700
    %v4717 = vadd.f32 %v4701, %v4703
    %v4718 = vadd.f32 %v4717, %v4705
    %v4719 = vadd.f32 %v4718, %v4707
    %v4720 = vadd.f32 %v4719, %v4709
    %v4721 = vadd.f32 %v4720, %v4711
    %v4722 = vadd.f32 %v4721, %v4713
    %v4723 = vadd.f32 %v4722, %v4715
    %v4724 = vadd.f32 %v4702, %v4704
    %v4725 = vadd.f32 %v4724, %v4706
    %v4726 = vadd.f32 %v4725, %v4708
    %v4727 = vadd.f32 %v4726, %v4710
    %v4728 = vadd.f32 %v4727, %v4712
    %v4729 = vadd.f32 %v4728, %v4714
    %v4730 = vadd.f32 %v4729, %v4716
    %v4731 = vmul.f32 %v4723, %v1796
    %v4732 = vmul.f32 %v4730, %v1796
    %v4733 = vmul.f32 %v4318, %v4318
    %v4734 = vmul.f32 %v4321, %v4321
    %v4735 = vmul.f32 %v4364, %v4364
    %v4736 = vmul.f32 %v4367, %v4367
    %v4737 = vmul.f32 %v4410, %v4410
    %v4738 = vmul.f32 %v4413, %v4413
    %v4739 = vmul.f32 %v4456, %v4456
    %v4740 = vmul.f32 %v4459, %v4459
    %v4741 = vmul.f32 %v4502, %v4502
    %v4742 = vmul.f32 %v4505, %v4505
    %v4743 = vmul.f32 %v4548, %v4548
    %v4744 = vmul.f32 %v4551, %v4551
    %v4745 = vmul.f32 %v4594, %v4594
    %v4746 = vmul.f32 %v4597, %v4597
    %v4747 = vmul.f32 %v4640, %v4640
    %v4748 = vmul.f32 %v4643, %v4643
    %v4749 = vsel %vm4645, %v4733, 0.0
    %4750 = vadd.xlane.f32.xlu0 %v4749
    %v4751 = vpop.xlane.xlu0 %4750
    %v4752 = vsel %vm4645, %v4734, 0.0
    %4753 = vadd.xlane.f32.xlu0 %v4752
    %v4754 = vpop.xlane.xlu0 %4753
    %v4755 = vsel %vm4645, %v4735, 0.0
    %4756 = vadd.xlane.f32.xlu0 %v4755
    %v4757 = vpop.xlane.xlu0 %4756
    %v4758 = vsel %vm4645, %v4736, 0.0
    %4759 = vadd.xlane.f32.xlu0 %v4758
    %v4760 = vpop.xlane.xlu0 %4759
    %v4761 = vsel %vm4645, %v4737, 0.0
    %4762 = vadd.xlane.f32.xlu0 %v4761
    %v4763 = vpop.xlane.xlu0 %4762
    %v4764 = vsel %vm4645, %v4738, 0.0
    %4765 = vadd.xlane.f32.xlu0 %v4764
    %v4766 = vpop.xlane.xlu0 %4765
    %v4767 = vsel %vm4645, %v4739, 0.0
    %4768 = vadd.xlane.f32.xlu0 %v4767
    %v4769 = vpop.xlane.xlu0 %4768
    %v4770 = vsel %vm4645, %v4740, 0.0
    %4771 = vadd.xlane.f32.xlu0 %v4770
    %v4772 = vpop.xlane.xlu0 %4771
    %v4773 = vsel %vm4645, %v4741, 0.0
    %4774 = vadd.xlane.f32.xlu0 %v4773
    %v4775 = vpop.xlane.xlu0 %4774
    %v4776 = vsel %vm4645, %v4742, 0.0
    %4777 = vadd.xlane.f32.xlu0 %v4776
    %v4778 = vpop.xlane.xlu0 %4777
    %v4779 = vsel %vm4645, %v4743, 0.0
    %4780 = vadd.xlane.f32.xlu0 %v4779
    %v4781 = vpop.xlane.xlu0 %4780
    %v4782 = vsel %vm4645, %v4744, 0.0
    %4783 = vadd.xlane.f32.xlu0 %v4782
    %v4784 = vpop.xlane.xlu0 %4783
    %v4785 = vsel %vm4645, %v4745, 0.0
    %4786 = vadd.xlane.f32.xlu0 %v4785
    %v4787 = vpop.xlane.xlu0 %4786
    %v4788 = vsel %vm4645, %v4746, 0.0
    %4789 = vadd.xlane.f32.xlu0 %v4788
    %v4790 = vpop.xlane.xlu0 %4789
    %v4791 = vsel %vm4645, %v4747, 0.0
    %4792 = vadd.xlane.f32.xlu0 %v4791
    %v4793 = vpop.xlane.xlu0 %4792
    %v4794 = vsel %vm4645, %v4748, 0.0
    %4795 = vadd.xlane.f32.xlu0 %v4794
    %v4796 = vpop.xlane.xlu0 %4795
    %v4797 = vmul.f32 %v4751, %v4700
    %v4798 = vmul.f32 %v4754, %v4700
    %v4799 = vmul.f32 %v4757, %v4700
    %v4800 = vmul.f32 %v4760, %v4700
    %v4801 = vmul.f32 %v4763, %v4700
    %v4802 = vmul.f32 %v4766, %v4700
    %v4803 = vmul.f32 %v4769, %v4700
    %v4804 = vmul.f32 %v4772, %v4700
    %v4805 = vmul.f32 %v4775, %v4700
    %v4806 = vmul.f32 %v4778, %v4700
    %v4807 = vmul.f32 %v4781, %v4700
    %v4808 = vmul.f32 %v4784, %v4700
    %v4809 = vmul.f32 %v4787, %v4700
    %v4810 = vmul.f32 %v4790, %v4700
    %v4811 = vmul.f32 %v4793, %v4700
    %v4812 = vmul.f32 %v4796, %v4700
    %v4813 = vadd.f32 %v4797, %v4799
    %v4814 = vadd.f32 %v4813, %v4801
    %v4815 = vadd.f32 %v4814, %v4803
    %v4816 = vadd.f32 %v4815, %v4805
    %v4817 = vadd.f32 %v4816, %v4807
    %v4818 = vadd.f32 %v4817, %v4809
    %v4819 = vadd.f32 %v4818, %v4811
    %v4820 = vadd.f32 %v4798, %v4800
    %v4821 = vadd.f32 %v4820, %v4802
    %v4822 = vadd.f32 %v4821, %v4804
    %v4823 = vadd.f32 %v4822, %v4806
    %v4824 = vadd.f32 %v4823, %v4808
    %v4825 = vadd.f32 %v4824, %v4810
    %v4826 = vadd.f32 %v4825, %v4812
    %v4827 = vmul.f32 %v4819, %v1796
    %v4828 = vmul.f32 %v4826, %v1796
    %v4829 = vsub.f32 %v4318, %v4731
    %v4830 = vsub.f32 %v4321, %v4732
    %v4831 = vsub.f32 %v4364, %v4731
    %v4832 = vsub.f32 %v4367, %v4732
    %v4833 = vsub.f32 %v4410, %v4731
    %v4834 = vsub.f32 %v4413, %v4732
    %v4835 = vsub.f32 %v4456, %v4731
    %v4836 = vsub.f32 %v4459, %v4732
    %v4837 = vsub.f32 %v4502, %v4731
    %v4838 = vsub.f32 %v4505, %v4732
    %v4839 = vsub.f32 %v4548, %v4731
    %v4840 = vsub.f32 %v4551, %v4732
    %v4841 = vsub.f32 %v4594, %v4731
    %v4842 = vsub.f32 %v4597, %v4732
    %v4843 = vsub.f32 %v4640, %v4731
    %v4844 = vsub.f32 %v4643, %v4732
    %v4845 = vmul.f32 %v4731, %v4731
    %v4846 = vmul.f32 %v4732, %v4732
    %v4847 = vsub.f32 %v4827, %v4845
    %v4848 = vsub.f32 %v4828, %v4846
    %v4849 = vadd.f32 %v4847, 1e-05
    %v4850 = vadd.f32 %v4848, 1e-05
    %v4851 = vrsqrt.pop %v4849
    %v4852 = vmul.f32 %v4851, %v4849
    %v4853 = vmul.f32 %v4852, %v4851
    %v4854 = vmul.f32 0.5, %v4853
    %v4855 = vsub.f32 1.5, %v4854
    %v4856 = vmul.f32 %v4851, %v4855
    %vm4857 = vweird.f32 %v4849
    %vm4858 = vweird.f32 %v4851
    %vm4859 = vmor %vm4857, %vm4858
    %v4860 = vsel %vm4859, %v4851, %v4856
    %v4861 = vrsqrt.pop %v4850
    %v4862 = vmul.f32 %v4861, %v4850
    %v4863 = vmul.f32 %v4862, %v4861
    %v4864 = vmul.f32 0.5, %v4863
    %v4865 = vsub.f32 1.5, %v4864
    %v4866 = vmul.f32 %v4861, %v4865
    %vm4867 = vweird.f32 %v4850
    %vm4868 = vweird.f32 %v4861
    %vm4869 = vmor %vm4867, %vm4868
    %v4870 = vsel %vm4869, %v4861, %v4866
    %v4871 = vmul.f32 %v4829, %v4860
    %v4872 = vmul.f32 %v4830, %v4870
    %v4873 = vmul.f32 %v4831, %v4860
    %v4874 = vmul.f32 %v4832, %v4870
    %v4875 = vmul.f32 %v4833, %v4860
    %v4876 = vmul.f32 %v4834, %v4870
    %v4877 = vmul.f32 %v4835, %v4860
    %v4878 = vmul.f32 %v4836, %v4870
    %v4879 = vmul.f32 %v4837, %v4860
    %v4880 = vmul.f32 %v4838, %v4870
    %v4881 = vmul.f32 %v4839, %v4860
    %v4882 = vmul.f32 %v4840, %v4870
    %v4883 = vmul.f32 %v4841, %v4860
    %v4884 = vmul.f32 %v4842, %v4870
    %v4885 = vmul.f32 %v4843, %v4860
    %v4886 = vmul.f32 %v4844, %v4870
    %4887 = vset.pattern.permute.xlu0 12
    %4888 = vperm.xlu0 %4887, %v27
    %v4889 = vpop.permute.xlu0 %4888
    %4891 = vset.pattern.permute.xlu0 12
    %4892 = vperm.xlu0 %4891, %v28
    %v4893 = vpop.permute.xlu0 %4892
    %v4895 = vmul.f32 %v4871, %v4889
    %v4896 = vmul.f32 %v4872, %v4893
    %v4897 = vmul.f32 %v4873, %v4889
    %v4898 = vmul.f32 %v4874, %v4893
    %v4899 = vmul.f32 %v4875, %v4889
    %v4900 = vmul.f32 %v4876, %v4893
    %v4901 = vmul.f32 %v4877, %v4889
    %v4902 = vmul.f32 %v4878, %v4893
    %v4903 = vmul.f32 %v4879, %v4889
    %v4904 = vmul.f32 %v4880, %v4893
    %v4905 = vmul.f32 %v4881, %v4889
    %v4906 = vmul.f32 %v4882, %v4893
    %v4907 = vmul.f32 %v4883, %v4889
    %v4908 = vmul.f32 %v4884, %v4893
    %v4909 = vmul.f32 %v4885, %v4889
    %v4910 = vmul.f32 %v4886, %v4893
    %4911 = vset.pattern.permute.xlu0 13
    %4912 = vperm.xlu0 %4911, %v27
    %v4913 = vpop.permute.xlu0 %4912
    %4915 = vset.pattern.permute.xlu0 13
    %4916 = vperm.xlu0 %4915, %v28
    %v4917 = vpop.permute.xlu0 %4916
    %v4919 = vadd.f32 %v4895, %v4913
    %v4920 = vadd.f32 %v4896, %v4917
    %v4921 = vadd.f32 %v4897, %v4913
    %v4922 = vadd.f32 %v4898, %v4917
    %v4923 = vadd.f32 %v4899, %v4913
    %v4924 = vadd.f32 %v4900, %v4917
    %v4925 = vadd.f32 %v4901, %v4913
    %v4926 = vadd.f32 %v4902, %v4917
    %v4927 = vadd.f32 %v4903, %v4913
    %v4928 = vadd.f32 %v4904, %v4917
    %v4929 = vadd.f32 %v4905, %v4913
    %v4930 = vadd.f32 %v4906, %v4917
    %v4931 = vadd.f32 %v4907, %v4913
    %v4932 = vadd.f32 %v4908, %v4917
    %v4933 = vadd.f32 %v4909, %v4913
    %v4934 = vadd.f32 %v4910, %v4917
    %vm4935 = vcmask 31744
    %v4936 = vsel %vm4935, %v4919, -inf
    %4937 = vmax.xlane.f32.xlu0 %v4936
    %v4938 = vpop.xlane.xlu0 %4937
    %v4939 = vsel %vm4935, %v4920, -inf
    %4940 = vmax.xlane.f32.xlu0 %v4939
    %v4941 = vpop.xlane.xlu0 %4940
    %v4942 = vsel %vm4935, %v4921, -inf
    %4943 = vmax.xlane.f32.xlu0 %v4942
    %v4944 = vpop.xlane.xlu0 %4943
    %v4945 = vsel %vm4935, %v4922, -inf
    %4946 = vmax.xlane.f32.xlu0 %v4945
    %v4947 = vpop.xlane.xlu0 %4946
    %v4948 = vsel %vm4935, %v4923, -inf
    %4949 = vmax.xlane.f32.xlu0 %v4948
    %v4950 = vpop.xlane.xlu0 %4949
    %v4951 = vsel %vm4935, %v4924, -inf
    %4952 = vmax.xlane.f32.xlu0 %v4951
    %v4953 = vpop.xlane.xlu0 %4952
    %v4954 = vsel %vm4935, %v4925, -inf
    %4955 = vmax.xlane.f32.xlu0 %v4954
    %v4956 = vpop.xlane.xlu0 %4955
    %v4957 = vsel %vm4935, %v4926, -inf
    %4958 = vmax.xlane.f32.xlu0 %v4957
    %v4959 = vpop.xlane.xlu0 %4958
    %v4960 = vsel %vm4935, %v4927, -inf
    %4961 = vmax.xlane.f32.xlu0 %v4960
    %v4962 = vpop.xlane.xlu0 %4961
    %v4963 = vsel %vm4935, %v4928, -inf
    %4964 = vmax.xlane.f32.xlu0 %v4963
    %v4965 = vpop.xlane.xlu0 %4964
    %v4966 = vsel %vm4935, %v4929, -inf
    %4967 = vmax.xlane.f32.xlu0 %v4966
    %v4968 = vpop.xlane.xlu0 %4967
    %v4969 = vsel %vm4935, %v4930, -inf
    %4970 = vmax.xlane.f32.xlu0 %v4969
    %v4971 = vpop.xlane.xlu0 %4970
    %v4972 = vsel %vm4935, %v4931, -inf
    %4973 = vmax.xlane.f32.xlu0 %v4972
    %v4974 = vpop.xlane.xlu0 %4973
    %v4975 = vsel %vm4935, %v4932, -inf
    %4976 = vmax.xlane.f32.xlu0 %v4975
    %v4977 = vpop.xlane.xlu0 %4976
    %v4978 = vsel %vm4935, %v4933, -inf
    %4979 = vmax.xlane.f32.xlu0 %v4978
    %v4980 = vpop.xlane.xlu0 %4979
    %v4981 = vsel %vm4935, %v4934, -inf
    %4982 = vmax.xlane.f32.xlu0 %v4981
    %v4983 = vpop.xlane.xlu0 %4982
    %v4984 = vld [vmem:[%s4] sm:$0xff]
    %v4985 = vld [vmem:[%s4 + $0x8] sm:$0xff]
    %vm4986 = vcmask 64544
    %v4987 = vsel %vm4986, %v4919, -inf
    %4988 = vmax.xlane.f32.xlu0 %v4987
    %v4989 = vpop.xlane.xlu0 %4988
    %v4990 = vsel %vm4986, %v4920, -inf
    %4991 = vmax.xlane.f32.xlu0 %v4990
    %v4992 = vpop.xlane.xlu0 %4991
    %v4993 = vsel %vm4986, %v4921, -inf
    %4994 = vmax.xlane.f32.xlu0 %v4993
    %v4995 = vpop.xlane.xlu0 %4994
    %v4996 = vsel %vm4986, %v4922, -inf
    %4997 = vmax.xlane.f32.xlu0 %v4996
    %v4998 = vpop.xlane.xlu0 %4997
    %v4999 = vsel %vm4986, %v4923, -inf
    %5000 = vmax.xlane.f32.xlu0 %v4999
    %v5001 = vpop.xlane.xlu0 %5000
    %v5002 = vsel %vm4986, %v4924, -inf
    %5003 = vmax.xlane.f32.xlu0 %v5002
    %v5004 = vpop.xlane.xlu0 %5003
    %v5005 = vsel %vm4986, %v4925, -inf
    %5006 = vmax.xlane.f32.xlu0 %v5005
    %v5007 = vpop.xlane.xlu0 %5006
    %v5008 = vsel %vm4986, %v4926, -inf
    %5009 = vmax.xlane.f32.xlu0 %v5008
    %v5010 = vpop.xlane.xlu0 %5009
    %v5011 = vsel %vm4986, %v4927, -inf
    %5012 = vmax.xlane.f32.xlu0 %v5011
    %v5013 = vpop.xlane.xlu0 %5012
    %v5014 = vsel %vm4986, %v4928, -inf
    %5015 = vmax.xlane.f32.xlu0 %v5014
    %v5016 = vpop.xlane.xlu0 %5015
    %v5017 = vsel %vm4986, %v4929, -inf
    %5018 = vmax.xlane.f32.xlu0 %v5017
    %v5019 = vpop.xlane.xlu0 %5018
    %v5020 = vsel %vm4986, %v4930, -inf
    %5021 = vmax.xlane.f32.xlu0 %v5020
    %v5022 = vpop.xlane.xlu0 %5021
    %v5023 = vsel %vm4986, %v4931, -inf
    %5024 = vmax.xlane.f32.xlu0 %v5023
    %v5025 = vpop.xlane.xlu0 %5024
    %v5026 = vsel %vm4986, %v4932, -inf
    %5027 = vmax.xlane.f32.xlu0 %v5026
    %v5028 = vpop.xlane.xlu0 %5027
    %v5029 = vsel %vm4986, %v4933, -inf
    %5030 = vmax.xlane.f32.xlu0 %v5029
    %v5031 = vpop.xlane.xlu0 %5030
    %v5032 = vsel %vm4986, %v4934, -inf
    %5033 = vmax.xlane.f32.xlu0 %v5032
    %v5034 = vpop.xlane.xlu0 %5033
    %s5035 = scalar_lea.vmem %s4, 16
    %v5036 = vld [vmem:[%s5035] sm:$0xff]
    %v5037 = vld [vmem:[%s5035 + $0x8] sm:$0xff]
    %v5054 = vlaneseq
    %v5055 = vand.u32 %v5054, 127
    %v5056 = vperm.slane %v4989, %v5055
    %v5057 = vadd.s32 %v5055, 4294967288
    %v5058 = vperm.slane %v4992, %v5057
    %vm5059 = vcmask 130112
    %v5060 = vsel %vm5059, %v5058, %v5056
    %v5061 = vperm.slane %v4995, %v5055
    %v5062 = vperm.slane %v4998, %v5057
    %v5063 = vsel %vm5059, %v5062, %v5061
    %v5064 = vperm.slane %v5001, %v5055
    %v5065 = vperm.slane %v5004, %v5057
    %v5066 = vsel %vm5059, %v5065, %v5064
    %v5067 = vperm.slane %v5007, %v5055
    %v5068 = vperm.slane %v5010, %v5057
    %v5069 = vsel %vm5059, %v5068, %v5067
    %v5070 = vperm.slane %v5013, %v5055
    %v5071 = vperm.slane %v5016, %v5057
    %v5072 = vsel %vm5059, %v5071, %v5070
    %v5073 = vperm.slane %v5019, %v5055
    %v5074 = vperm.slane %v5022, %v5057
    %v5075 = vsel %vm5059, %v5074, %v5073
    %v5076 = vperm.slane %v5025, %v5055
    %v5077 = vperm.slane %v5028, %v5057
    %v5078 = vsel %vm5059, %v5077, %v5076
    %v5079 = vperm.slane %v5031, %v5055
    %v5080 = vperm.slane %v5034, %v5057
    %v5081 = vsel %vm5059, %v5080, %v5079
    %vm5082 = vcmask 1041409
    %v5083 = vsel %vm5082, %v5063, %v5060
    %vm5084 = vcmask 1042434
    %v5085 = vsel %vm5084, %v5066, %v5083
    %vm5086 = vcmask 1043459
    %v5087 = vsel %vm5086, %v5069, %v5085
    %vm5088 = vcmask 1044484
    %v5089 = vsel %vm5088, %v5072, %v5087
    %vm5090 = vcmask 1045509
    %v5091 = vsel %vm5090, %v5075, %v5089
    %vm5092 = vcmask 1046534
    %v5093 = vsel %vm5092, %v5078, %v5091
    %vm5094 = vcmask 1047559
    %v5095 = vsel %vm5094, %v5081, %v5093
    %vm5096 = vcmask 130048
    %v5097 = vsel %vm5096, %v5095, 0
    %5099 = vmatpush.msra.mxu0 0.0
    %5100 = vmatpush.msra.mxu0 0.0
    %5101 = vmatpush.msra.mxu0 0.0
    %5102 = vmatpush.msra.mxu0 0.0
    %5103 = vmatpush.msra.mxu0 0.0
    %5104 = vmatpush.msra.mxu0 0.0
    %5105 = vmatpush.msra.mxu0 0.0
    %5106 = vmatpush.msra.mxu0 0.0
    %5107 = vmatpush.msra.mxu0 0.0
    %5108 = vmatpush.msra.mxu0 0.0
    %5109 = vmatpush.msra.mxu0 0.0
    %5110 = vmatpush.msra.mxu0 0.0
    %5111 = vmatpush.msra.mxu0 0.0
    %5112 = vmatpush.msra.mxu0 0.0
    %5113 = vmatpush.msra.mxu0 %v5037
    %5114 = vmatpush.msra.mxu0 %v5036
    %5115 = vmatmul.f32.gmra.mxu0 %v5097
    %v5116 = vpop.f32.mrf.mxu0
    %v5117 = vadd.f32 0.0, %v5116
    %5118 = vdwg.mxu0
    %v5135 = vperm.slane %v4938, %v5055
    %v5136 = vperm.slane %v4941, %v5057
    %v5137 = vsel %vm5059, %v5136, %v5135
    %v5138 = vperm.slane %v4944, %v5055
    %v5139 = vperm.slane %v4947, %v5057
    %v5140 = vsel %vm5059, %v5139, %v5138
    %v5141 = vperm.slane %v4950, %v5055
    %v5142 = vperm.slane %v4953, %v5057
    %v5143 = vsel %vm5059, %v5142, %v5141
    %v5144 = vperm.slane %v4956, %v5055
    %v5145 = vperm.slane %v4959, %v5057
    %v5146 = vsel %vm5059, %v5145, %v5144
    %v5147 = vperm.slane %v4962, %v5055
    %v5148 = vperm.slane %v4965, %v5057
    %v5149 = vsel %vm5059, %v5148, %v5147
    %v5150 = vperm.slane %v4968, %v5055
    %v5151 = vperm.slane %v4971, %v5057
    %v5152 = vsel %vm5059, %v5151, %v5150
    %v5153 = vperm.slane %v4974, %v5055
    %v5154 = vperm.slane %v4977, %v5057
    %v5155 = vsel %vm5059, %v5154, %v5153
    %v5156 = vperm.slane %v4980, %v5055
    %v5157 = vperm.slane %v4983, %v5057
    %v5158 = vsel %vm5059, %v5157, %v5156
    %v5159 = vsel %vm5082, %v5140, %v5137
    %v5160 = vsel %vm5084, %v5143, %v5159
    %v5161 = vsel %vm5086, %v5146, %v5160
    %v5162 = vsel %vm5088, %v5149, %v5161
    %v5163 = vsel %vm5090, %v5152, %v5162
    %v5164 = vsel %vm5092, %v5155, %v5163
    %v5165 = vsel %vm5094, %v5158, %v5164
    %v5166 = vsel %vm5096, %v5165, 0
    %5168 = vmatpush.msra.mxu0 0.0
    %5169 = vmatpush.msra.mxu0 0.0
    %5170 = vmatpush.msra.mxu0 0.0
    %5171 = vmatpush.msra.mxu0 0.0
    %5172 = vmatpush.msra.mxu0 0.0
    %5173 = vmatpush.msra.mxu0 0.0
    %5174 = vmatpush.msra.mxu0 0.0
    %5175 = vmatpush.msra.mxu0 0.0
    %5176 = vmatpush.msra.mxu0 0.0
    %5177 = vmatpush.msra.mxu0 0.0
    %5178 = vmatpush.msra.mxu0 0.0
    %5179 = vmatpush.msra.mxu0 0.0
    %5180 = vmatpush.msra.mxu0 0.0
    %5181 = vmatpush.msra.mxu0 0.0
    %5182 = vmatpush.msra.mxu0 %v4985
    %5183 = vmatpush.msra.mxu0 %v4984
    %5184 = vmatmul.f32.gmra.mxu0 %v5166
    %v5185 = vpop.f32.mrf.mxu0
    %v5186 = vadd.f32 %v5117, %v5185
    %5187 = vdwg.mxu0
    %vm5188 = vcmask 97344
    %v5189 = vsel %vm5188, %v4919, -inf
    %5190 = vmax.xlane.f32.xlu0 %v5189
    %v5191 = vpop.xlane.xlu0 %5190
    %v5192 = vsel %vm5188, %v4920, -inf
    %5193 = vmax.xlane.f32.xlu0 %v5192
    %v5194 = vpop.xlane.xlu0 %5193
    %v5195 = vsel %vm5188, %v4921, -inf
    %5196 = vmax.xlane.f32.xlu0 %v5195
    %v5197 = vpop.xlane.xlu0 %5196
    %v5198 = vsel %vm5188, %v4922, -inf
    %5199 = vmax.xlane.f32.xlu0 %v5198
    %v5200 = vpop.xlane.xlu0 %5199
    %v5201 = vsel %vm5188, %v4923, -inf
    %5202 = vmax.xlane.f32.xlu0 %v5201
    %v5203 = vpop.xlane.xlu0 %5202
    %v5204 = vsel %vm5188, %v4924, -inf
    %5205 = vmax.xlane.f32.xlu0 %v5204
    %v5206 = vpop.xlane.xlu0 %5205
    %v5207 = vsel %vm5188, %v4925, -inf
    %5208 = vmax.xlane.f32.xlu0 %v5207
    %v5209 = vpop.xlane.xlu0 %5208
    %v5210 = vsel %vm5188, %v4926, -inf
    %5211 = vmax.xlane.f32.xlu0 %v5210
    %v5212 = vpop.xlane.xlu0 %5211
    %v5213 = vsel %vm5188, %v4927, -inf
    %5214 = vmax.xlane.f32.xlu0 %v5213
    %v5215 = vpop.xlane.xlu0 %5214
    %v5216 = vsel %vm5188, %v4928, -inf
    %5217 = vmax.xlane.f32.xlu0 %v5216
    %v5218 = vpop.xlane.xlu0 %5217
    %v5219 = vsel %vm5188, %v4929, -inf
    %5220 = vmax.xlane.f32.xlu0 %v5219
    %v5221 = vpop.xlane.xlu0 %5220
    %v5222 = vsel %vm5188, %v4930, -inf
    %5223 = vmax.xlane.f32.xlu0 %v5222
    %v5224 = vpop.xlane.xlu0 %5223
    %v5225 = vsel %vm5188, %v4931, -inf
    %5226 = vmax.xlane.f32.xlu0 %v5225
    %v5227 = vpop.xlane.xlu0 %5226
    %v5228 = vsel %vm5188, %v4932, -inf
    %5229 = vmax.xlane.f32.xlu0 %v5228
    %v5230 = vpop.xlane.xlu0 %5229
    %v5231 = vsel %vm5188, %v4933, -inf
    %5232 = vmax.xlane.f32.xlu0 %v5231
    %v5233 = vpop.xlane.xlu0 %5232
    %v5234 = vsel %vm5188, %v4934, -inf
    %5235 = vmax.xlane.f32.xlu0 %v5234
    %v5236 = vpop.xlane.xlu0 %5235
    %s5237 = scalar_lea.vmem %s4, 32
    %v5238 = vld [vmem:[%s5237] sm:$0xff]
    %v5239 = vld [vmem:[%s5237 + $0x8] sm:$0xff]
    %v5256 = vperm.slane %v5191, %v5055
    %v5257 = vperm.slane %v5194, %v5057
    %v5258 = vsel %vm5059, %v5257, %v5256
    %v5259 = vperm.slane %v5197, %v5055
    %v5260 = vperm.slane %v5200, %v5057
    %v5261 = vsel %vm5059, %v5260, %v5259
    %v5262 = vperm.slane %v5203, %v5055
    %v5263 = vperm.slane %v5206, %v5057
    %v5264 = vsel %vm5059, %v5263, %v5262
    %v5265 = vperm.slane %v5209, %v5055
    %v5266 = vperm.slane %v5212, %v5057
    %v5267 = vsel %vm5059, %v5266, %v5265
    %v5268 = vperm.slane %v5215, %v5055
    %v5269 = vperm.slane %v5218, %v5057
    %v5270 = vsel %vm5059, %v5269, %v5268
    %v5271 = vperm.slane %v5221, %v5055
    %v5272 = vperm.slane %v5224, %v5057
    %v5273 = vsel %vm5059, %v5272, %v5271
    %v5274 = vperm.slane %v5227, %v5055
    %v5275 = vperm.slane %v5230, %v5057
    %v5276 = vsel %vm5059, %v5275, %v5274
    %v5277 = vperm.slane %v5233, %v5055
    %v5278 = vperm.slane %v5236, %v5057
    %v5279 = vsel %vm5059, %v5278, %v5277
    %v5280 = vsel %vm5082, %v5261, %v5258
    %v5281 = vsel %vm5084, %v5264, %v5280
    %v5282 = vsel %vm5086, %v5267, %v5281
    %v5283 = vsel %vm5088, %v5270, %v5282
    %v5284 = vsel %vm5090, %v5273, %v5283
    %v5285 = vsel %vm5092, %v5276, %v5284
    %v5286 = vsel %vm5094, %v5279, %v5285
    %v5287 = vsel %vm5096, %v5286, 0
    %5289 = vmatpush.msra.mxu0 0.0
    %5290 = vmatpush.msra.mxu0 0.0
    %5291 = vmatpush.msra.mxu0 0.0
    %5292 = vmatpush.msra.mxu0 0.0
    %5293 = vmatpush.msra.mxu0 0.0
    %5294 = vmatpush.msra.mxu0 0.0
    %5295 = vmatpush.msra.mxu0 0.0
    %5296 = vmatpush.msra.mxu0 0.0
    %5297 = vmatpush.msra.mxu0 0.0
    %5298 = vmatpush.msra.mxu0 0.0
    %5299 = vmatpush.msra.mxu0 0.0
    %5300 = vmatpush.msra.mxu0 0.0
    %5301 = vmatpush.msra.mxu0 0.0
    %5302 = vmatpush.msra.mxu0 0.0
    %5303 = vmatpush.msra.mxu0 %v5239
    %5304 = vmatpush.msra.mxu0 %v5238
    %5305 = vmatmul.f32.gmra.mxu0 %v5287
    %v5306 = vpop.f32.mrf.mxu0
    %v5307 = vadd.f32 0.0, %v5306
    %5308 = vdwg.mxu0
    %v5309 = vadd.f32 %v5186, %v5307
    %v5310 = vld [vmem:[%s6] sm:$0x1]
    %v5311 = vperm.slane %v5310, 0
    %v5312 = vadd.f32 %v5309, %v5311
    %vm5313 = vcmp.ge.f32.partialorder %v5312, 0.0
    %v5314 = vmul.f32 %v5312, 0.2
    %v5315 = vsel %vm5313, %v5312, %v5314
    %v5316 = vld [vmem:[%s6 + $0x1] sm:$0x1]
    %v5317 = vperm.slane %v5316, 0
    %5318 = vrot.lane.b32.xlu0 %v27, 114
    %v5319 = vpop.permute.xlu0 %5318
    %5320 = vrot.lane.b32.xlu0 %v28, 114
    %v5321 = vpop.permute.xlu0 %5320
    %5322 = vrot.lane.b32.xlu0 %v29, 114
    %v5323 = vpop.permute.xlu0 %5322
    %5324 = vrot.lane.b32.xlu0 %v30, 114
    %v5325 = vpop.permute.xlu0 %5324
    %v5331 = vsel %vm41, %v5315, 0
    %5333 = vmatpush.msra.mxu0 0.0
    %5334 = vmatpush.msra.mxu0 0.0
    %5335 = vmatpush.msra.mxu0 0.0
    %5336 = vmatpush.msra.mxu0 0.0
    %5337 = vmatpush.msra.mxu0 0.0
    %5338 = vmatpush.msra.mxu0 0.0
    %5339 = vmatpush.msra.mxu0 0.0
    %5340 = vmatpush.msra.mxu0 0.0
    %5341 = vmatpush.msra.mxu0 0.0
    %5342 = vmatpush.msra.mxu0 0.0
    %5343 = vmatpush.msra.mxu0 0.0
    %5344 = vmatpush.msra.mxu0 0.0
    %5345 = vmatpush.msra.mxu0 %v5325
    %5346 = vmatpush.msra.mxu0 %v5323
    %5347 = vmatpush.msra.mxu0 %v5321
    %5348 = vmatpush.msra.mxu0 %v5319
    %5349 = vmatmul.f32.gmra.mxu0 %v5331
    %v5350 = vpop.f32.mrf.mxu0
    %v5351 = vadd.f32 %v5317, %v5350
    %5352 = vdwg.mxu0
    %vm5353 = vcmask 64512
    %5354 = vst.msk [vmem:[#allocation2] sm:$0xff] %vm5353, %v5351
    // Predicated region
    $region30: #{convkregion_forward.1} parent=1 // pred_check
      _
    $region31: #{convkregion_forward.1} parent=1 // pred_check_branch
      %5356 = sbr.rel (0) target = $region33
    $region32: #{convkregion_forward.1} parent=1 // pred_region
      %5358 = vsyncadd [#allocation3], 0
      %s5360 = sshll.u32 [#allocation2], 4
      %s5361 = int_to_ptr.vmem [resolvable:$true] %s5360
      %s5362 = sshll.u32 %s7, 4
      %s5363 = int_to_ptr.hbm [resolvable:$true] %s5362
      %5365 = dma.vmem_to_hbm [thread:$0]  %s5361, 128, %s5363, [#allocation3]
    $region33: #{convkregion_forward.1} parent=1 // pred_fallthru
      _
    // Predicated region
    $region34: #{convkregion_forward.1} parent=1 // pred_check
      _
    $region35: #{convkregion_forward.1} parent=1 // pred_check_branch
      %5367 = sbr.rel (0) target = $region37
    $region36: #{convkregion_forward.1} parent=1 // pred_region
      %5369 = dma.done [#allocation3], 128
    $region37: #{convkregion_forward.1} parent=1 // pred_fallthru
      _
    %5370 = vsyncpa [#allocation3], 1

</llo_original>
